<compile_context>
chip_gen: v5e
topology: v5e:2x2
jax: 0.10.0
libtpu: 0.0.40
codegen_flags: <defaults>
</compile_context>

<pallas_src>
import jax
import jax.numpy as jnp
from jax import lax
from jax.experimental import pallas as pl
from jax.experimental.pallas import tpu as pltpu


# -----------------------------------------------------------------------------
# Kernel
# -----------------------------------------------------------------------------
def make_symp_rnn_kernel(num_hidden, dt, final, compute_dtype=jnp.float32,
                         unroll_threshold=32):
    """Kernel body for a given architecture depth / dt / #steps."""
    nper = 3 * num_hidden + 3  # per net: (W, b, W^T) per hidden layer + (We, be, We^T)

    def kernel(q0_ref, p0_ref, params_ref, vwp_ref, *rest):
        k_refs = rest[:nper]
        v_refs = rest[nper:2 * nper]
        H_ref, q_out_ref, p_out_ref = rest[2 * nper:]

        batch = q0_ref.shape[0]

        def read_net(refs):
            Ws = [refs[3 * i][...] for i in range(num_hidden)]
            bs = [refs[3 * i + 1][...] for i in range(num_hidden)]
            WTs = [refs[3 * i + 2][...] for i in range(num_hidden)]
            We = refs[3 * num_hidden][...]
            be = refs[3 * num_hidden + 1][...]
            WeRow = refs[3 * num_hidden + 2][...]
            return Ws, bs, WTs, We, be, WeRow

        KWs, Kbs, KWTs, KWe, Kbe, KWeRow = read_net(k_refs)
        VWs, Vbs, VWTs, VWe, Vbe, VWeRow = read_net(v_refs)

        # params is constant over time; fold its contribution to the first
        # V-net layer pre-activation once (== cat((q, params), dim=1) @ W1).
        params = params_ref[...]
        v_bias0 = (jnp.dot(params.astype(compute_dtype), vwp_ref[...],
                           preferred_element_type=jnp.float32)
                   + Vbs[0].astype(jnp.float32))
        Vbs_eff = [v_bias0] + [b.astype(jnp.float32) for b in Vbs[1:]]
        Kbs_eff = [b.astype(jnp.float32) for b in Kbs]

        # Hoisted broadcast of the energy-head rows (start of backprop).
        k_g0 = jnp.broadcast_to(KWeRow.astype(jnp.float32),
                                (batch, KWeRow.shape[1]))
        v_g0 = jnp.broadcast_to(VWeRow.astype(jnp.float32),
                                (batch, VWeRow.shape[1]))

        def mlp_forward(x, Ws, bs):
            h = x
            hs = []
            for W, b in zip(Ws, bs):
                z = jnp.dot(h.astype(compute_dtype), W,
                            preferred_element_type=jnp.float32) + b
                h = jnp.tanh(z)
                hs.append(h)
            return hs

        def mlp_grad(hs, WTs, g0):
            # d(sum E)/dx via manual backprop through the tanh layers.
            g = g0
            for h, WT in zip(reversed(hs), reversed(WTs)):
                g = jnp.dot(((1.0 - h * h) * g).astype(compute_dtype), WT,
                            preferred_element_type=jnp.float32)
            return g

        def energy(h_last, We, be):
            return jnp.dot(h_last.astype(compute_dtype), We,
                           preferred_element_type=jnp.float32) \
                + be.astype(jnp.float32)

        half_dt = jnp.float32(dt * 0.5)
        full_dt = jnp.float32(dt)

        # Seed the carried qdot with one K-net grad pass on p0 (no energy head).
        q = q0_ref[...]
        p = p0_ref[...]
        hs_seed = mlp_forward(p, KWs, Kbs_eff)
        qdot = mlp_grad(hs_seed, KWTs, k_g0)

        def step(t, q, p, qdot):
            q_half = q + half_dt * qdot
            # V-net on q_half: grad only (its energy is discarded).
            hs_v = mlp_forward(q_half, VWs, Vbs_eff)
            pdot_t = -mlp_grad(hs_v, VWTs, v_g0)
            p_next = p + full_dt * pdot_t
            # K-net on p_next: energy + grad (grad is reused as next step's qdot).
            hs_k = mlp_forward(p_next, KWs, Kbs_eff)
            K2 = energy(hs_k[-1], KWe, Kbe)
            qdot_t = mlp_grad(hs_k, KWTs, k_g0)
            q_next = q_half + half_dt * qdot_t
            # V-net on q_next: energy only (its grad is discarded).
            hs_v2 = mlp_forward(q_next, VWs, Vbs_eff)
            V2 = energy(hs_v2[-1], VWe, Vbe)
            H_ref[t] = K2 + V2
            q_out_ref[t] = q_next
            p_out_ref[t] = p_next
            return q_next, p_next, qdot_t

        if final <= unroll_threshold:
            # Fully unrolled: static output indices, cross-step scheduling.
            for t in range(final):
                q, p, qdot = step(t, q, p, qdot)
        else:
            def body(t, carry):
                return step(t, *carry)
            lax.fori_loop(0, final, body, (q, p, qdot))

    return kernel


# -----------------------------------------------------------------------------
# Wrapper (parameter packing / pallas_call setup)
# -----------------------------------------------------------------------------
def pack_net(Ws, bs, We, be, wdtype):
    flat = []
    for W, b in zip(Ws, bs):
        flat += [W.astype(wdtype), b.astype(jnp.float32), W.T.astype(wdtype)]
    flat += [We.astype(wdtype), be.astype(jnp.float32), We.T.astype(wdtype)]
    return flat


def _cost_estimate(batch, d, n_params, num_neurons, final, inputs, out_shape):
    dims = [d] + list(num_neurons)
    fwd = 2 * batch * sum(a * b for a, b in zip(dims[:-1], dims[1:]))
    bwd = fwd
    ehead = 2 * batch * num_neurons[-1]
    per_step = (fwd + bwd) + (fwd + ehead + bwd) + (fwd + ehead)
    flops = final * per_step + (fwd + bwd) + 2 * batch * n_params * num_neurons[0]
    transcendentals = (3 * final + 1) * batch * sum(num_neurons)
    bytes_in = sum(int(x.size) * x.dtype.itemsize for x in inputs)
    bytes_out = sum(int(jnp.prod(jnp.array(s.shape))) * 4 for s in out_shape)
    return pl.CostEstimate(flops=int(flops),
                           transcendentals=int(transcendentals),
                           bytes_accessed=int(bytes_in + bytes_out))


def symp_rnn_forward(q0, p0, params, k_net, v_net, *, dt, final, num_hidden,
                     weight_dtype=jnp.float32):
    """Forward of adaptable_sympRNN (separable=True).

    k_net = (Ws, bs, We, be) with Ws[0]: (d, n0)
    v_net = (Ws, bs, We, be) with Ws[0]: (d + n_params, n0)
    Returns (H, q[1:], p[1:]) with shapes (final, batch, 1), (final, batch, d) x2.

    weight_dtype=jnp.bfloat16 uses the native bf16 MXU path on v6e/v7x (f32
    accumulation, f32 state math); default f32 is bit-faithful to the reference.
    """
    batch, d = q0.shape
    n_params = params.shape[1]

    KWs, Kbs, KWe, Kbe = k_net
    VWs_full, Vbs, VWe, Vbe = v_net

    # Split the first V-layer weight into q-part and params-part
    # (equivalent to cat((q, params), dim=1) @ W1).
    vwq = VWs_full[0][:d]
    vwp = VWs_full[0][d:]
    v_kernel_Ws = [vwq] + list(VWs_full[1:])

    k_flat = pack_net(KWs, Kbs, KWe, Kbe, weight_dtype)
    v_flat = pack_net(v_kernel_Ws, Vbs, VWe, Vbe, weight_dtype)

    inputs = [q0, p0, params, vwp.astype(weight_dtype)] + k_flat + v_flat

    num_neurons = [W.shape[1] for W in KWs]
    kernel = make_symp_rnn_kernel(num_hidden, dt, final,
                                  compute_dtype=weight_dtype)

    out_shape = (
        jax.ShapeDtypeStruct((final, batch, 1), jnp.float32),
        jax.ShapeDtypeStruct((final, batch, d), jnp.float32),
        jax.ShapeDtypeStruct((final, batch, d), jnp.float32),
    )

    vmem_spec = pl.BlockSpec(memory_space=pltpu.MemorySpace.VMEM)
    return pl.pallas_call(
        kernel,
        out_shape=out_shape,
        in_specs=[vmem_spec] * len(inputs),
        out_specs=(vmem_spec, vmem_spec, vmem_spec),
        cost_estimate=_cost_estimate(batch, d, n_params, num_neurons, final,
                                     inputs, out_shape),
    )(*inputs)


# -----------------------------------------------------------------------------
# Pure-JAX reference (mirrors the PyTorch module with autograd)
# -----------------------------------------------------------------------------
def _ref_energy(net, x):
    Ws, bs, We, be = net
    h = x
    for W, b in zip(Ws, bs):
        h = jnp.tanh(h @ W + b)
    return h @ We + be


def reference_forward(q0, p0, params, k_net, v_net, *, dt, final):
    d = q0.shape[1]

    def k_call(p):
        E = _ref_energy(k_net, p)
        g = jax.grad(lambda pp: jnp.sum(_ref_energy(k_net, pp)))(p)
        return E, g

    def v_call(q):
        x = jnp.concatenate([q, params], axis=1)
        E = _ref_energy(v_net, x)
        g = jax.grad(lambda xx: jnp.sum(_ref_energy(v_net, xx)))(x)
        return E, -g[:, :d]

    Hs, qs, ps = [], [], []
    q, p = q0, p0
    for _ in range(final):
        _, qdot = k_call(p)
        q_half = q + dt / 2 * qdot
        _, pdot_t = v_call(q_half)
        p_next = p + dt * pdot_t
        K2, qdot_t = k_call(p_next)
        q_next = q_half + dt / 2 * qdot_t
        V2, _ = v_call(q_next)
        Hs.append(K2 + V2)
        qs.append(q_next)
        ps.append(p_next)
        q, p = q_next, p_next
    return jnp.stack(Hs), jnp.stack(qs), jnp.stack(ps)


# -----------------------------------------------------------------------------
# Deterministic parameter init (PyTorch nn.Linear default: U(-1/sqrt(fan_in), .))
# -----------------------------------------------------------------------------
def init_linear(key, fan_in, fan_out):
    k1, k2 = jax.random.split(key)
    bound = 1.0 / (fan_in ** 0.5)
    W = jax.random.uniform(k1, (fan_in, fan_out), jnp.float32, -bound, bound)
    b = jax.random.uniform(k2, (1, fan_out), jnp.float32, -bound, bound)
    return W, b


def init_partial_hnn(key, in_dim, num_hidden, num_neurons):
    keys = jax.random.split(key, num_hidden + 1)
    Ws, bs = [], []
    prev = in_dim
    for i in range(num_hidden):
        W, b = init_linear(keys[i], prev, num_neurons[i])
        Ws.append(W)
        bs.append(b)
        prev = num_neurons[i]
    We, be = init_linear(keys[-1], prev, 1)
    return Ws, bs, We, be


# -----------------------------------------------------------------------------
if __name__ == "__main__":
    # Module hyperparameters (small, consistent with the PyTorch module).
    input_size = 16          # q and p each have d = input_size // 2 = 8 features
    d = input_size // 2
    n_params = 4
    num_hidden = 2
    num_neurons = [32, 32]
    dt = 0.1
    batch = 4
    final = 6                # number of integration steps

    key = jax.random.PRNGKey(0)
    k_knet, k_vnet, k_q, k_p, k_par = jax.random.split(key, 5)

    # K_net: adaptable_partial_HNN(d, ..., potential=False)  -> input dim d
    k_net = init_partial_hnn(k_knet, d, num_hidden, num_neurons)
    # V_net: adaptable_partial_HNN(d, ..., potential=True)   -> input dim d + n_params
    v_net = init_partial_hnn(k_vnet, d + n_params, num_hidden, num_neurons)

    q_initial = 0.5 * jax.random.normal(k_q, (batch, d), jnp.float32)
    p_initial = 0.5 * jax.random.normal(k_p, (batch, d), jnp.float32)
    params = 0.5 * jax.random.normal(k_par, (batch, n_params), jnp.float32)

    H, q_traj, p_traj = symp_rnn_forward(
        q_initial, p_initial, params, k_net, v_net,
        dt=dt, final=final, num_hidden=num_hidden,
    )
    jax.block_until_ready((H, q_traj, p_traj))

    assert H.shape == (final, batch, 1)
    assert q_traj.shape == (final, batch, d)
    assert p_traj.shape == (final, batch, d)

    H_ref, q_ref, p_ref = reference_forward(
        q_initial, p_initial, params, k_net, v_net, dt=dt, final=final
    )

    ok = (
        bool(jnp.all(jnp.isfinite(H)))
        and bool(jnp.allclose(H, H_ref, rtol=2e-2, atol=2e-2))
        and bool(jnp.allclose(q_traj, q_ref, rtol=2e-2, atol=2e-2))
        and bool(jnp.allclose(p_traj, p_ref, rtol=2e-2, atol=2e-2))
    )
    if not ok:
        raise AssertionError("Pallas kernel output does not match reference")
    print("KERNEL_OK")
</pallas_src>

<mosaic_0001>
module attributes {stable_mosaic.version = 11 : i64} {
  func.func @kernel(%arg0: memref<4x8xf32, #tpu.memory_space<vmem>>, %arg1: memref<4x8xf32, #tpu.memory_space<vmem>>, %arg2: memref<4x4xf32, #tpu.memory_space<vmem>>, %arg3: memref<4x32xf32, #tpu.memory_space<vmem>>, %arg4: memref<8x32xf32, #tpu.memory_space<vmem>>, %arg5: memref<1x32xf32, #tpu.memory_space<vmem>>, %arg6: memref<32x8xf32, #tpu.memory_space<vmem>>, %arg7: memref<32x32xf32, #tpu.memory_space<vmem>>, %arg8: memref<1x32xf32, #tpu.memory_space<vmem>>, %arg9: memref<32x32xf32, #tpu.memory_space<vmem>>, %arg10: memref<32x1xf32, #tpu.memory_space<vmem>>, %arg11: memref<1x1xf32, #tpu.memory_space<vmem>>, %arg12: memref<1x32xf32, #tpu.memory_space<vmem>>, %arg13: memref<8x32xf32, #tpu.memory_space<vmem>>, %arg14: memref<1x32xf32, #tpu.memory_space<vmem>>, %arg15: memref<32x8xf32, #tpu.memory_space<vmem>>, %arg16: memref<32x32xf32, #tpu.memory_space<vmem>>, %arg17: memref<1x32xf32, #tpu.memory_space<vmem>>, %arg18: memref<32x32xf32, #tpu.memory_space<vmem>>, %arg19: memref<32x1xf32, #tpu.memory_space<vmem>>, %arg20: memref<1x1xf32, #tpu.memory_space<vmem>>, %arg21: memref<1x32xf32, #tpu.memory_space<vmem>>, %arg22: memref<6x4x1xf32, #tpu.memory_space<vmem>>, %arg23: memref<6x4x8xf32, #tpu.memory_space<vmem>>, %arg24: memref<6x4x8xf32, #tpu.memory_space<vmem>>) attributes {dimension_semantics = [], scalar_prefetch = 0 : i64, scratch_operands = 0 : i64, tpu.core_type = #tpu.core_type<tc>} {
    %c0 = arith.constant 0 : index
    %c0_0 = arith.constant 0 : index
    %0 = vector.load %arg4[%c0, %c0_0] : memref<8x32xf32, #tpu.memory_space<vmem>>, vector<8x32xf32>
    %c0_1 = arith.constant 0 : index
    %c0_2 = arith.constant 0 : index
    %1 = vector.load %arg7[%c0_1, %c0_2] : memref<32x32xf32, #tpu.memory_space<vmem>>, vector<32x32xf32>
    %c0_3 = arith.constant 0 : index
    %c0_4 = arith.constant 0 : index
    %2 = vector.load %arg5[%c0_3, %c0_4] : memref<1x32xf32, #tpu.memory_space<vmem>>, vector<1x32xf32>
    %c0_5 = arith.constant 0 : index
    %c0_6 = arith.constant 0 : index
    %3 = vector.load %arg8[%c0_5, %c0_6] : memref<1x32xf32, #tpu.memory_space<vmem>>, vector<1x32xf32>
    %c0_7 = arith.constant 0 : index
    %c0_8 = arith.constant 0 : index
    %4 = vector.load %arg6[%c0_7, %c0_8] : memref<32x8xf32, #tpu.memory_space<vmem>>, vector<32x8xf32>
    %c0_9 = arith.constant 0 : index
    %c0_10 = arith.constant 0 : index
    %5 = vector.load %arg9[%c0_9, %c0_10] : memref<32x32xf32, #tpu.memory_space<vmem>>, vector<32x32xf32>
    %c0_11 = arith.constant 0 : index
    %c0_12 = arith.constant 0 : index
    %6 = vector.load %arg10[%c0_11, %c0_12] : memref<32x1xf32, #tpu.memory_space<vmem>>, vector<32x1xf32>
    %c0_13 = arith.constant 0 : index
    %c0_14 = arith.constant 0 : index
    %7 = vector.load %arg11[%c0_13, %c0_14] : memref<1x1xf32, #tpu.memory_space<vmem>>, vector<1x1xf32>
    %c0_15 = arith.constant 0 : index
    %c0_16 = arith.constant 0 : index
    %8 = vector.load %arg12[%c0_15, %c0_16] : memref<1x32xf32, #tpu.memory_space<vmem>>, vector<1x32xf32>
    %c0_17 = arith.constant 0 : index
    %c0_18 = arith.constant 0 : index
    %9 = vector.load %arg13[%c0_17, %c0_18] : memref<8x32xf32, #tpu.memory_space<vmem>>, vector<8x32xf32>
    %c0_19 = arith.constant 0 : index
    %c0_20 = arith.constant 0 : index
    %10 = vector.load %arg16[%c0_19, %c0_20] : memref<32x32xf32, #tpu.memory_space<vmem>>, vector<32x32xf32>
    %c0_21 = arith.constant 0 : index
    %c0_22 = arith.constant 0 : index
    %11 = vector.load %arg14[%c0_21, %c0_22] : memref<1x32xf32, #tpu.memory_space<vmem>>, vector<1x32xf32>
    %c0_23 = arith.constant 0 : index
    %c0_24 = arith.constant 0 : index
    %12 = vector.load %arg17[%c0_23, %c0_24] : memref<1x32xf32, #tpu.memory_space<vmem>>, vector<1x32xf32>
    %c0_25 = arith.constant 0 : index
    %c0_26 = arith.constant 0 : index
    %13 = vector.load %arg15[%c0_25, %c0_26] : memref<32x8xf32, #tpu.memory_space<vmem>>, vector<32x8xf32>
    %c0_27 = arith.constant 0 : index
    %c0_28 = arith.constant 0 : index
    %14 = vector.load %arg18[%c0_27, %c0_28] : memref<32x32xf32, #tpu.memory_space<vmem>>, vector<32x32xf32>
    %c0_29 = arith.constant 0 : index
    %c0_30 = arith.constant 0 : index
    %15 = vector.load %arg19[%c0_29, %c0_30] : memref<32x1xf32, #tpu.memory_space<vmem>>, vector<32x1xf32>
    %c0_31 = arith.constant 0 : index
    %c0_32 = arith.constant 0 : index
    %16 = vector.load %arg20[%c0_31, %c0_32] : memref<1x1xf32, #tpu.memory_space<vmem>>, vector<1x1xf32>
    %c0_33 = arith.constant 0 : index
    %c0_34 = arith.constant 0 : index
    %17 = vector.load %arg21[%c0_33, %c0_34] : memref<1x32xf32, #tpu.memory_space<vmem>>, vector<1x32xf32>
    %c0_35 = arith.constant 0 : index
    %c0_36 = arith.constant 0 : index
    %18 = vector.load %arg2[%c0_35, %c0_36] : memref<4x4xf32, #tpu.memory_space<vmem>>, vector<4x4xf32>
    %c0_37 = arith.constant 0 : index
    %c0_38 = arith.constant 0 : index
    %19 = vector.load %arg3[%c0_37, %c0_38] : memref<4x32xf32, #tpu.memory_space<vmem>>, vector<4x32xf32>
    %cst = arith.constant dense<0.000000e+00> : vector<4x32xf32>
    %20 = tpu.matmul %18, %19, %cst {dimension_numbers = #tpu.dot_dimension_numbers<[1], [0], [0], [1], [0, 0, 1, 1], [], []>} : vector<4x4xf32>, vector<4x32xf32>, vector<4x32xf32> -> vector<4x32xf32>
    %21 = vector.broadcast %11 : vector<1x32xf32> to vector<4x32xf32>
    %22 = arith.addf %20, %21 : vector<4x32xf32>
    %23 = vector.shape_cast %8 : vector<1x32xf32> to vector<1x32xf32>
    %24 = vector.broadcast %23 : vector<1x32xf32> to vector<4x32xf32>
    %25 = vector.shape_cast %17 : vector<1x32xf32> to vector<1x32xf32>
    %26 = vector.broadcast %25 : vector<1x32xf32> to vector<4x32xf32>
    %c0_39 = arith.constant 0 : index
    %c0_40 = arith.constant 0 : index
    %27 = vector.load %arg0[%c0_39, %c0_40] : memref<4x8xf32, #tpu.memory_space<vmem>>, vector<4x8xf32>
    %c0_41 = arith.constant 0 : index
    %c0_42 = arith.constant 0 : index
    %28 = vector.load %arg1[%c0_41, %c0_42] : memref<4x8xf32, #tpu.memory_space<vmem>>, vector<4x8xf32>
    %cst_43 = arith.constant dense<0.000000e+00> : vector<4x32xf32>
    %29 = tpu.matmul %28, %0, %cst_43 {dimension_numbers = #tpu.dot_dimension_numbers<[1], [0], [0], [1], [0, 0, 1, 1], [], []>} : vector<4x8xf32>, vector<8x32xf32>, vector<4x32xf32> -> vector<4x32xf32>
    %30 = vector.broadcast %2 : vector<1x32xf32> to vector<4x32xf32>
    %31 = arith.addf %29, %30 : vector<4x32xf32>
    %32 = math.tanh %31 : vector<4x32xf32>
    %cst_44 = arith.constant dense<0.000000e+00> : vector<4x32xf32>
    %33 = tpu.matmul %32, %1, %cst_44 {dimension_numbers = #tpu.dot_dimension_numbers<[1], [0], [0], [1], [0, 0, 1, 1], [], []>} : vector<4x32xf32>, vector<32x32xf32>, vector<4x32xf32> -> vector<4x32xf32>
    %34 = vector.broadcast %3 : vector<1x32xf32> to vector<4x32xf32>
    %35 = arith.addf %33, %34 : vector<4x32xf32>
    %36 = math.tanh %35 : vector<4x32xf32>
    %37 = arith.mulf %36, %36 : vector<4x32xf32>
    %cst_45 = arith.constant 1.000000e+00 : f32
    %38 = vector.broadcast %cst_45 : f32 to vector<4x32xf32>
    %39 = arith.subf %38, %37 : vector<4x32xf32>
    %40 = arith.mulf %39, %24 : vector<4x32xf32>
    %cst_46 = arith.constant dense<0.000000e+00> : vector<4x32xf32>
    %41 = tpu.matmul %40, %5, %cst_46 {dimension_numbers = #tpu.dot_dimension_numbers<[1], [0], [0], [1], [0, 0, 1, 1], [], []>} : vector<4x32xf32>, vector<32x32xf32>, vector<4x32xf32> -> vector<4x32xf32>
    %42 = arith.mulf %32, %32 : vector<4x32xf32>
    %cst_47 = arith.constant 1.000000e+00 : f32
    %43 = vector.broadcast %cst_47 : f32 to vector<4x32xf32>
    %44 = arith.subf %43, %42 : vector<4x32xf32>
    %45 = arith.mulf %44, %41 : vector<4x32xf32>
    %cst_48 = arith.constant dense<0.000000e+00> : vector<4x8xf32>
    %46 = tpu.matmul %45, %4, %cst_48 {dimension_numbers = #tpu.dot_dimension_numbers<[1], [0], [0], [1], [0, 0, 1, 1], [], []>} : vector<4x32xf32>, vector<32x8xf32>, vector<4x8xf32> -> vector<4x8xf32>
    %cst_49 = arith.constant 5.000000e-02 : f32
    %47 = vector.broadcast %cst_49 : f32 to vector<4x8xf32>
    %48 = arith.mulf %47, %46 : vector<4x8xf32>
    %49 = arith.addf %27, %48 : vector<4x8xf32>
    %cst_50 = arith.constant dense<0.000000e+00> : vector<4x32xf32>
    %50 = tpu.matmul %49, %9, %cst_50 {dimension_numbers = #tpu.dot_dimension_numbers<[1], [0], [0], [1], [0, 0, 1, 1], [], []>} : vector<4x8xf32>, vector<8x32xf32>, vector<4x32xf32> -> vector<4x32xf32>
    %51 = arith.addf %50, %22 : vector<4x32xf32>
    %52 = math.tanh %51 : vector<4x32xf32>
    %cst_51 = arith.constant dense<0.000000e+00> : vector<4x32xf32>
    %53 = tpu.matmul %52, %10, %cst_51 {dimension_numbers = #tpu.dot_dimension_numbers<[1], [0], [0], [1], [0, 0, 1, 1], [], []>} : vector<4x32xf32>, vector<32x32xf32>, vector<4x32xf32> -> vector<4x32xf32>
    %54 = vector.broadcast %12 : vector<1x32xf32> to vector<4x32xf32>
    %55 = arith.addf %53, %54 : vector<4x32xf32>
    %56 = math.tanh %55 : vector<4x32xf32>
    %57 = arith.mulf %56, %56 : vector<4x32xf32>
    %cst_52 = arith.constant 1.000000e+00 : f32
    %58 = vector.broadcast %cst_52 : f32 to vector<4x32xf32>
    %59 = arith.subf %58, %57 : vector<4x32xf32>
    %60 = arith.mulf %59, %26 : vector<4x32xf32>
    %cst_53 = arith.constant dense<0.000000e+00> : vector<4x32xf32>
    %61 = tpu.matmul %60, %14, %cst_53 {dimension_numbers = #tpu.dot_dimension_numbers<[1], [0], [0], [1], [0, 0, 1, 1], [], []>} : vector<4x32xf32>, vector<32x32xf32>, vector<4x32xf32> -> vector<4x32xf32>
    %62 = arith.mulf %52, %52 : vector<4x32xf32>
    %cst_54 = arith.constant 1.000000e+00 : f32
    %63 = vector.broadcast %cst_54 : f32 to vector<4x32xf32>
    %64 = arith.subf %63, %62 : vector<4x32xf32>
    %65 = arith.mulf %64, %61 : vector<4x32xf32>
    %cst_55 = arith.constant dense<0.000000e+00> : vector<4x8xf32>
    %66 = tpu.matmul %65, %13, %cst_55 {dimension_numbers = #tpu.dot_dimension_numbers<[1], [0], [0], [1], [0, 0, 1, 1], [], []>} : vector<4x32xf32>, vector<32x8xf32>, vector<4x8xf32> -> vector<4x8xf32>
    %cst_56 = arith.constant 0.000000e+00 : f32
    %67 = vector.broadcast %cst_56 : f32 to vector<4x8xf32>
    %68 = arith.subf %67, %66 : vector<4x8xf32>
    %cst_57 = arith.constant 1.000000e-01 : f32
    %69 = vector.broadcast %cst_57 : f32 to vector<4x8xf32>
    %70 = arith.mulf %69, %68 : vector<4x8xf32>
    %71 = arith.addf %28, %70 : vector<4x8xf32>
    %cst_58 = arith.constant dense<0.000000e+00> : vector<4x32xf32>
    %72 = tpu.matmul %71, %0, %cst_58 {dimension_numbers = #tpu.dot_dimension_numbers<[1], [0], [0], [1], [0, 0, 1, 1], [], []>} : vector<4x8xf32>, vector<8x32xf32>, vector<4x32xf32> -> vector<4x32xf32>
    %73 = vector.broadcast %2 : vector<1x32xf32> to vector<4x32xf32>
    %74 = arith.addf %72, %73 : vector<4x32xf32>
    %75 = math.tanh %74 : vector<4x32xf32>
    %cst_59 = arith.constant dense<0.000000e+00> : vector<4x32xf32>
    %76 = tpu.matmul %75, %1, %cst_59 {dimension_numbers = #tpu.dot_dimension_numbers<[1], [0], [0], [1], [0, 0, 1, 1], [], []>} : vector<4x32xf32>, vector<32x32xf32>, vector<4x32xf32> -> vector<4x32xf32>
    %77 = vector.broadcast %3 : vector<1x32xf32> to vector<4x32xf32>
    %78 = arith.addf %76, %77 : vector<4x32xf32>
    %79 = math.tanh %78 : vector<4x32xf32>
    %cst_60 = arith.constant dense<0.000000e+00> : vector<4x1xf32>
    %80 = tpu.matmul %79, %6, %cst_60 {dimension_numbers = #tpu.dot_dimension_numbers<[1], [0], [0], [1], [0, 0, 1, 1], [], []>} : vector<4x32xf32>, vector<32x1xf32>, vector<4x1xf32> -> vector<4x1xf32>
    %81 = vector.broadcast %7 : vector<1x1xf32> to vector<4x1xf32>
    %82 = arith.addf %80, %81 : vector<4x1xf32>
    %83 = arith.mulf %79, %79 : vector<4x32xf32>
    %cst_61 = arith.constant 1.000000e+00 : f32
    %84 = vector.broadcast %cst_61 : f32 to vector<4x32xf32>
    %85 = arith.subf %84, %83 : vector<4x32xf32>
    %86 = arith.mulf %85, %24 : vector<4x32xf32>
    %cst_62 = arith.constant dense<0.000000e+00> : vector<4x32xf32>
    %87 = tpu.matmul %86, %5, %cst_62 {dimension_numbers = #tpu.dot_dimension_numbers<[1], [0], [0], [1], [0, 0, 1, 1], [], []>} : vector<4x32xf32>, vector<32x32xf32>, vector<4x32xf32> -> vector<4x32xf32>
    %88 = arith.mulf %75, %75 : vector<4x32xf32>
    %cst_63 = arith.constant 1.000000e+00 : f32
    %89 = vector.broadcast %cst_63 : f32 to vector<4x32xf32>
    %90 = arith.subf %89, %88 : vector<4x32xf32>
    %91 = arith.mulf %90, %87 : vector<4x32xf32>
    %cst_64 = arith.constant dense<0.000000e+00> : vector<4x8xf32>
    %92 = tpu.matmul %91, %4, %cst_64 {dimension_numbers = #tpu.dot_dimension_numbers<[1], [0], [0], [1], [0, 0, 1, 1], [], []>} : vector<4x32xf32>, vector<32x8xf32>, vector<4x8xf32> -> vector<4x8xf32>
    %cst_65 = arith.constant 5.000000e-02 : f32
    %93 = vector.broadcast %cst_65 : f32 to vector<4x8xf32>
    %94 = arith.mulf %93, %92 : vector<4x8xf32>
    %95 = arith.addf %49, %94 : vector<4x8xf32>
    %cst_66 = arith.constant dense<0.000000e+00> : vector<4x32xf32>
    %96 = tpu.matmul %95, %9, %cst_66 {dimension_numbers = #tpu.dot_dimension_numbers<[1], [0], [0], [1], [0, 0, 1, 1], [], []>} : vector<4x8xf32>, vector<8x32xf32>, vector<4x32xf32> -> vector<4x32xf32>
    %97 = arith.addf %96, %22 : vector<4x32xf32>
    %98 = math.tanh %97 : vector<4x32xf32>
    %cst_67 = arith.constant dense<0.000000e+00> : vector<4x32xf32>
    %99 = tpu.matmul %98, %10, %cst_67 {dimension_numbers = #tpu.dot_dimension_numbers<[1], [0], [0], [1], [0, 0, 1, 1], [], []>} : vector<4x32xf32>, vector<32x32xf32>, vector<4x32xf32> -> vector<4x32xf32>
    %100 = vector.broadcast %12 : vector<1x32xf32> to vector<4x32xf32>
    %101 = arith.addf %99, %100 : vector<4x32xf32>
    %102 = math.tanh %101 : vector<4x32xf32>
    %cst_68 = arith.constant dense<0.000000e+00> : vector<4x1xf32>
    %103 = tpu.matmul %102, %15, %cst_68 {dimension_numbers = #tpu.dot_dimension_numbers<[1], [0], [0], [1], [0, 0, 1, 1], [], []>} : vector<4x32xf32>, vector<32x1xf32>, vector<4x1xf32> -> vector<4x1xf32>
    %104 = vector.broadcast %16 : vector<1x1xf32> to vector<4x1xf32>
    %105 = arith.addf %103, %104 : vector<4x1xf32>
    %106 = arith.addf %82, %105 : vector<4x1xf32>
    %c0_69 = arith.constant 0 : index
    %c0_70 = arith.constant 0 : index
    %c0_71 = arith.constant 0 : index
    %107 = vector.load %arg22[%c0_69, %c0_70, %c0_71] : memref<6x4x1xf32, #tpu.memory_space<vmem>>, vector<1x4x1xf32>
    %108 = vector.shape_cast %107 : vector<1x4x1xf32> to vector<4x1xf32>
    %109 = vector.shape_cast %106 : vector<4x1xf32> to vector<1x4x1xf32>
    tpu.vector_store %arg22[%c0_69, %c0_70, %c0_71], %109 {strides = array<i32>} : memref<6x4x1xf32, #tpu.memory_space<vmem>>, vector<1x4x1xf32>,
    %c0_72 = arith.constant 0 : index
    %c0_73 = arith.constant 0 : index
    %c0_74 = arith.constant 0 : index
    %110 = vector.load %arg23[%c0_72, %c0_73, %c0_74] : memref<6x4x8xf32, #tpu.memory_space<vmem>>, vector<1x4x8xf32>
    %111 = vector.shape_cast %110 : vector<1x4x8xf32> to vector<4x8xf32>
    %112 = vector.shape_cast %95 : vector<4x8xf32> to vector<1x4x8xf32>
    tpu.vector_store %arg23[%c0_72, %c0_73, %c0_74], %112 {strides = array<i32>} : memref<6x4x8xf32, #tpu.memory_space<vmem>>, vector<1x4x8xf32>,
    %c0_75 = arith.constant 0 : index
    %c0_76 = arith.constant 0 : index
    %c0_77 = arith.constant 0 : index
    %113 = vector.load %arg24[%c0_75, %c0_76, %c0_77] : memref<6x4x8xf32, #tpu.memory_space<vmem>>, vector<1x4x8xf32>
    %114 = vector.shape_cast %113 : vector<1x4x8xf32> to vector<4x8xf32>
    %115 = vector.shape_cast %71 : vector<4x8xf32> to vector<1x4x8xf32>
    tpu.vector_store %arg24[%c0_75, %c0_76, %c0_77], %115 {strides = array<i32>} : memref<6x4x8xf32, #tpu.memory_space<vmem>>, vector<1x4x8xf32>,
    %cst_78 = arith.constant 5.000000e-02 : f32
    %116 = vector.broadcast %cst_78 : f32 to vector<4x8xf32>
    %117 = arith.mulf %116, %92 : vector<4x8xf32>
    %118 = arith.addf %95, %117 : vector<4x8xf32>
    %cst_79 = arith.constant dense<0.000000e+00> : vector<4x32xf32>
    %119 = tpu.matmul %118, %9, %cst_79 {dimension_numbers = #tpu.dot_dimension_numbers<[1], [0], [0], [1], [0, 0, 1, 1], [], []>} : vector<4x8xf32>, vector<8x32xf32>, vector<4x32xf32> -> vector<4x32xf32>
    %120 = arith.addf %119, %22 : vector<4x32xf32>
    %121 = math.tanh %120 : vector<4x32xf32>
    %cst_80 = arith.constant dense<0.000000e+00> : vector<4x32xf32>
    %122 = tpu.matmul %121, %10, %cst_80 {dimension_numbers = #tpu.dot_dimension_numbers<[1], [0], [0], [1], [0, 0, 1, 1], [], []>} : vector<4x32xf32>, vector<32x32xf32>, vector<4x32xf32> -> vector<4x32xf32>
    %123 = vector.broadcast %12 : vector<1x32xf32> to vector<4x32xf32>
    %124 = arith.addf %122, %123 : vector<4x32xf32>
    %125 = math.tanh %124 : vector<4x32xf32>
    %126 = arith.mulf %125, %125 : vector<4x32xf32>
    %cst_81 = arith.constant 1.000000e+00 : f32
    %127 = vector.broadcast %cst_81 : f32 to vector<4x32xf32>
    %128 = arith.subf %127, %126 : vector<4x32xf32>
    %129 = arith.mulf %128, %26 : vector<4x32xf32>
    %cst_82 = arith.constant dense<0.000000e+00> : vector<4x32xf32>
    %130 = tpu.matmul %129, %14, %cst_82 {dimension_numbers = #tpu.dot_dimension_numbers<[1], [0], [0], [1], [0, 0, 1, 1], [], []>} : vector<4x32xf32>, vector<32x32xf32>, vector<4x32xf32> -> vector<4x32xf32>
    %131 = arith.mulf %121, %121 : vector<4x32xf32>
    %cst_83 = arith.constant 1.000000e+00 : f32
    %132 = vector.broadcast %cst_83 : f32 to vector<4x32xf32>
    %133 = arith.subf %132, %131 : vector<4x32xf32>
    %134 = arith.mulf %133, %130 : vector<4x32xf32>
    %cst_84 = arith.constant dense<0.000000e+00> : vector<4x8xf32>
    %135 = tpu.matmul %134, %13, %cst_84 {dimension_numbers = #tpu.dot_dimension_numbers<[1], [0], [0], [1], [0, 0, 1, 1], [], []>} : vector<4x32xf32>, vector<32x8xf32>, vector<4x8xf32> -> vector<4x8xf32>
    %cst_85 = arith.constant 0.000000e+00 : f32
    %136 = vector.broadcast %cst_85 : f32 to vector<4x8xf32>
    %137 = arith.subf %136, %135 : vector<4x8xf32>
    %cst_86 = arith.constant 1.000000e-01 : f32
    %138 = vector.broadcast %cst_86 : f32 to vector<4x8xf32>
    %139 = arith.mulf %138, %137 : vector<4x8xf32>
    %140 = arith.addf %71, %139 : vector<4x8xf32>
    %cst_87 = arith.constant dense<0.000000e+00> : vector<4x32xf32>
    %141 = tpu.matmul %140, %0, %cst_87 {dimension_numbers = #tpu.dot_dimension_numbers<[1], [0], [0], [1], [0, 0, 1, 1], [], []>} : vector<4x8xf32>, vector<8x32xf32>, vector<4x32xf32> -> vector<4x32xf32>
    %142 = vector.broadcast %2 : vector<1x32xf32> to vector<4x32xf32>
    %143 = arith.addf %141, %142 : vector<4x32xf32>
    %144 = math.tanh %143 : vector<4x32xf32>
    %cst_88 = arith.constant dense<0.000000e+00> : vector<4x32xf32>
    %145 = tpu.matmul %144, %1, %cst_88 {dimension_numbers = #tpu.dot_dimension_numbers<[1], [0], [0], [1], [0, 0, 1, 1], [], []>} : vector<4x32xf32>, vector<32x32xf32>, vector<4x32xf32> -> vector<4x32xf32>
    %146 = vector.broadcast %3 : vector<1x32xf32> to vector<4x32xf32>
    %147 = arith.addf %145, %146 : vector<4x32xf32>
    %148 = math.tanh %147 : vector<4x32xf32>
    %cst_89 = arith.constant dense<0.000000e+00> : vector<4x1xf32>
    %149 = tpu.matmul %148, %6, %cst_89 {dimension_numbers = #tpu.dot_dimension_numbers<[1], [0], [0], [1], [0, 0, 1, 1], [], []>} : vector<4x32xf32>, vector<32x1xf32>, vector<4x1xf32> -> vector<4x1xf32>
    %150 = vector.broadcast %7 : vector<1x1xf32> to vector<4x1xf32>
    %151 = arith.addf %149, %150 : vector<4x1xf32>
    %152 = arith.mulf %148, %148 : vector<4x32xf32>
    %cst_90 = arith.constant 1.000000e+00 : f32
    %153 = vector.broadcast %cst_90 : f32 to vector<4x32xf32>
    %154 = arith.subf %153, %152 : vector<4x32xf32>
    %155 = arith.mulf %154, %24 : vector<4x32xf32>
    %cst_91 = arith.constant dense<0.000000e+00> : vector<4x32xf32>
    %156 = tpu.matmul %155, %5, %cst_91 {dimension_numbers = #tpu.dot_dimension_numbers<[1], [0], [0], [1], [0, 0, 1, 1], [], []>} : vector<4x32xf32>, vector<32x32xf32>, vector<4x32xf32> -> vector<4x32xf32>
    %157 = arith.mulf %144, %144 : vector<4x32xf32>
    %cst_92 = arith.constant 1.000000e+00 : f32
    %158 = vector.broadcast %cst_92 : f32 to vector<4x32xf32>
    %159 = arith.subf %158, %157 : vector<4x32xf32>
    %160 = arith.mulf %159, %156 : vector<4x32xf32>
    %cst_93 = arith.constant dense<0.000000e+00> : vector<4x8xf32>
    %161 = tpu.matmul %160, %4, %cst_93 {dimension_numbers = #tpu.dot_dimension_numbers<[1], [0], [0], [1], [0, 0, 1, 1], [], []>} : vector<4x32xf32>, vector<32x8xf32>, vector<4x8xf32> -> vector<4x8xf32>
    %cst_94 = arith.constant 5.000000e-02 : f32
    %162 = vector.broadcast %cst_94 : f32 to vector<4x8xf32>
    %163 = arith.mulf %162, %161 : vector<4x8xf32>
    %164 = arith.addf %118, %163 : vector<4x8xf32>
    %cst_95 = arith.constant dense<0.000000e+00> : vector<4x32xf32>
    %165 = tpu.matmul %164, %9, %cst_95 {dimension_numbers = #tpu.dot_dimension_numbers<[1], [0], [0], [1], [0, 0, 1, 1], [], []>} : vector<4x8xf32>, vector<8x32xf32>, vector<4x32xf32> -> vector<4x32xf32>
    %166 = arith.addf %165, %22 : vector<4x32xf32>
    %167 = math.tanh %166 : vector<4x32xf32>
    %cst_96 = arith.constant dense<0.000000e+00> : vector<4x32xf32>
    %168 = tpu.matmul %167, %10, %cst_96 {dimension_numbers = #tpu.dot_dimension_numbers<[1], [0], [0], [1], [0, 0, 1, 1], [], []>} : vector<4x32xf32>, vector<32x32xf32>, vector<4x32xf32> -> vector<4x32xf32>
    %169 = vector.broadcast %12 : vector<1x32xf32> to vector<4x32xf32>
    %170 = arith.addf %168, %169 : vector<4x32xf32>
    %171 = math.tanh %170 : vector<4x32xf32>
    %cst_97 = arith.constant dense<0.000000e+00> : vector<4x1xf32>
    %172 = tpu.matmul %171, %15, %cst_97 {dimension_numbers = #tpu.dot_dimension_numbers<[1], [0], [0], [1], [0, 0, 1, 1], [], []>} : vector<4x32xf32>, vector<32x1xf32>, vector<4x1xf32> -> vector<4x1xf32>
    %173 = vector.broadcast %16 : vector<1x1xf32> to vector<4x1xf32>
    %174 = arith.addf %172, %173 : vector<4x1xf32>
    %175 = arith.addf %151, %174 : vector<4x1xf32>
    %c1 = arith.constant 1 : index
    %c0_98 = arith.constant 0 : index
    %c0_99 = arith.constant 0 : index
    %176 = vector.load %arg22[%c1, %c0_98, %c0_99] : memref<6x4x1xf32, #tpu.memory_space<vmem>>, vector<1x4x1xf32>
    %177 = vector.shape_cast %176 : vector<1x4x1xf32> to vector<4x1xf32>
    %178 = vector.shape_cast %175 : vector<4x1xf32> to vector<1x4x1xf32>
    tpu.vector_store %arg22[%c1, %c0_98, %c0_99], %178 {strides = array<i32>} : memref<6x4x1xf32, #tpu.memory_space<vmem>>, vector<1x4x1xf32>,
    %c1_100 = arith.constant 1 : index
    %c0_101 = arith.constant 0 : index
    %c0_102 = arith.constant 0 : index
    %179 = vector.load %arg23[%c1_100, %c0_101, %c0_102] : memref<6x4x8xf32, #tpu.memory_space<vmem>>, vector<1x4x8xf32>
    %180 = vector.shape_cast %179 : vector<1x4x8xf32> to vector<4x8xf32>
    %181 = vector.shape_cast %164 : vector<4x8xf32> to vector<1x4x8xf32>
    tpu.vector_store %arg23[%c1_100, %c0_101, %c0_102], %181 {strides = array<i32>} : memref<6x4x8xf32, #tpu.memory_space<vmem>>, vector<1x4x8xf32>,
    %c1_103 = arith.constant 1 : index
    %c0_104 = arith.constant 0 : index
    %c0_105 = arith.constant 0 : index
    %182 = vector.load %arg24[%c1_103, %c0_104, %c0_105] : memref<6x4x8xf32, #tpu.memory_space<vmem>>, vector<1x4x8xf32>
    %183 = vector.shape_cast %182 : vector<1x4x8xf32> to vector<4x8xf32>
    %184 = vector.shape_cast %140 : vector<4x8xf32> to vector<1x4x8xf32>
    tpu.vector_store %arg24[%c1_103, %c0_104, %c0_105], %184 {strides = array<i32>} : memref<6x4x8xf32, #tpu.memory_space<vmem>>, vector<1x4x8xf32>,
    %cst_106 = arith.constant 5.000000e-02 : f32
    %185 = vector.broadcast %cst_106 : f32 to vector<4x8xf32>
    %186 = arith.mulf %185, %161 : vector<4x8xf32>
    %187 = arith.addf %164, %186 : vector<4x8xf32>
    %cst_107 = arith.constant dense<0.000000e+00> : vector<4x32xf32>
    %188 = tpu.matmul %187, %9, %cst_107 {dimension_numbers = #tpu.dot_dimension_numbers<[1], [0], [0], [1], [0, 0, 1, 1], [], []>} : vector<4x8xf32>, vector<8x32xf32>, vector<4x32xf32> -> vector<4x32xf32>
    %189 = arith.addf %188, %22 : vector<4x32xf32>
    %190 = math.tanh %189 : vector<4x32xf32>
    %cst_108 = arith.constant dense<0.000000e+00> : vector<4x32xf32>
    %191 = tpu.matmul %190, %10, %cst_108 {dimension_numbers = #tpu.dot_dimension_numbers<[1], [0], [0], [1], [0, 0, 1, 1], [], []>} : vector<4x32xf32>, vector<32x32xf32>, vector<4x32xf32> -> vector<4x32xf32>
    %192 = vector.broadcast %12 : vector<1x32xf32> to vector<4x32xf32>
    %193 = arith.addf %191, %192 : vector<4x32xf32>
    %194 = math.tanh %193 : vector<4x32xf32>
    %195 = arith.mulf %194, %194 : vector<4x32xf32>
    %cst_109 = arith.constant 1.000000e+00 : f32
    %196 = vector.broadcast %cst_109 : f32 to vector<4x32xf32>
    %197 = arith.subf %196, %195 : vector<4x32xf32>
    %198 = arith.mulf %197, %26 : vector<4x32xf32>
    %cst_110 = arith.constant dense<0.000000e+00> : vector<4x32xf32>
    %199 = tpu.matmul %198, %14, %cst_110 {dimension_numbers = #tpu.dot_dimension_numbers<[1], [0], [0], [1], [0, 0, 1, 1], [], []>} : vector<4x32xf32>, vector<32x32xf32>, vector<4x32xf32> -> vector<4x32xf32>
    %200 = arith.mulf %190, %190 : vector<4x32xf32>
    %cst_111 = arith.constant 1.000000e+00 : f32
    %201 = vector.broadcast %cst_111 : f32 to vector<4x32xf32>
    %202 = arith.subf %201, %200 : vector<4x32xf32>
    %203 = arith.mulf %202, %199 : vector<4x32xf32>
    %cst_112 = arith.constant dense<0.000000e+00> : vector<4x8xf32>
    %204 = tpu.matmul %203, %13, %cst_112 {dimension_numbers = #tpu.dot_dimension_numbers<[1], [0], [0], [1], [0, 0, 1, 1], [], []>} : vector<4x32xf32>, vector<32x8xf32>, vector<4x8xf32> -> vector<4x8xf32>
    %cst_113 = arith.constant 0.000000e+00 : f32
    %205 = vector.broadcast %cst_113 : f32 to vector<4x8xf32>
    %206 = arith.subf %205, %204 : vector<4x8xf32>
    %cst_114 = arith.constant 1.000000e-01 : f32
    %207 = vector.broadcast %cst_114 : f32 to vector<4x8xf32>
    %208 = arith.mulf %207, %206 : vector<4x8xf32>
    %209 = arith.addf %140, %208 : vector<4x8xf32>
    %cst_115 = arith.constant dense<0.000000e+00> : vector<4x32xf32>
    %210 = tpu.matmul %209, %0, %cst_115 {dimension_numbers = #tpu.dot_dimension_numbers<[1], [0], [0], [1], [0, 0, 1, 1], [], []>} : vector<4x8xf32>, vector<8x32xf32>, vector<4x32xf32> -> vector<4x32xf32>
    %211 = vector.broadcast %2 : vector<1x32xf32> to vector<4x32xf32>
    %212 = arith.addf %210, %211 : vector<4x32xf32>
    %213 = math.tanh %212 : vector<4x32xf32>
    %cst_116 = arith.constant dense<0.000000e+00> : vector<4x32xf32>
    %214 = tpu.matmul %213, %1, %cst_116 {dimension_numbers = #tpu.dot_dimension_numbers<[1], [0], [0], [1], [0, 0, 1, 1], [], []>} : vector<4x32xf32>, vector<32x32xf32>, vector<4x32xf32> -> vector<4x32xf32>
    %215 = vector.broadcast %3 : vector<1x32xf32> to vector<4x32xf32>
    %216 = arith.addf %214, %215 : vector<4x32xf32>
    %217 = math.tanh %216 : vector<4x32xf32>
    %cst_117 = arith.constant dense<0.000000e+00> : vector<4x1xf32>
    %218 = tpu.matmul %217, %6, %cst_117 {dimension_numbers = #tpu.dot_dimension_numbers<[1], [0], [0], [1], [0, 0, 1, 1], [], []>} : vector<4x32xf32>, vector<32x1xf32>, vector<4x1xf32> -> vector<4x1xf32>
    %219 = vector.broadcast %7 : vector<1x1xf32> to vector<4x1xf32>
    %220 = arith.addf %218, %219 : vector<4x1xf32>
    %221 = arith.mulf %217, %217 : vector<4x32xf32>
    %cst_118 = arith.constant 1.000000e+00 : f32
    %222 = vector.broadcast %cst_118 : f32 to vector<4x32xf32>
    %223 = arith.subf %222, %221 : vector<4x32xf32>
    %224 = arith.mulf %223, %24 : vector<4x32xf32>
    %cst_119 = arith.constant dense<0.000000e+00> : vector<4x32xf32>
    %225 = tpu.matmul %224, %5, %cst_119 {dimension_numbers = #tpu.dot_dimension_numbers<[1], [0], [0], [1], [0, 0, 1, 1], [], []>} : vector<4x32xf32>, vector<32x32xf32>, vector<4x32xf32> -> vector<4x32xf32>
    %226 = arith.mulf %213, %213 : vector<4x32xf32>
    %cst_120 = arith.constant 1.000000e+00 : f32
    %227 = vector.broadcast %cst_120 : f32 to vector<4x32xf32>
    %228 = arith.subf %227, %226 : vector<4x32xf32>
    %229 = arith.mulf %228, %225 : vector<4x32xf32>
    %cst_121 = arith.constant dense<0.000000e+00> : vector<4x8xf32>
    %230 = tpu.matmul %229, %4, %cst_121 {dimension_numbers = #tpu.dot_dimension_numbers<[1], [0], [0], [1], [0, 0, 1, 1], [], []>} : vector<4x32xf32>, vector<32x8xf32>, vector<4x8xf32> -> vector<4x8xf32>
    %cst_122 = arith.constant 5.000000e-02 : f32
    %231 = vector.broadcast %cst_122 : f32 to vector<4x8xf32>
    %232 = arith.mulf %231, %230 : vector<4x8xf32>
    %233 = arith.addf %187, %232 : vector<4x8xf32>
    %cst_123 = arith.constant dense<0.000000e+00> : vector<4x32xf32>
    %234 = tpu.matmul %233, %9, %cst_123 {dimension_numbers = #tpu.dot_dimension_numbers<[1], [0], [0], [1], [0, 0, 1, 1], [], []>} : vector<4x8xf32>, vector<8x32xf32>, vector<4x32xf32> -> vector<4x32xf32>
    %235 = arith.addf %234, %22 : vector<4x32xf32>
    %236 = math.tanh %235 : vector<4x32xf32>
    %cst_124 = arith.constant dense<0.000000e+00> : vector<4x32xf32>
    %237 = tpu.matmul %236, %10, %cst_124 {dimension_numbers = #tpu.dot_dimension_numbers<[1], [0], [0], [1], [0, 0, 1, 1], [], []>} : vector<4x32xf32>, vector<32x32xf32>, vector<4x32xf32> -> vector<4x32xf32>
    %238 = vector.broadcast %12 : vector<1x32xf32> to vector<4x32xf32>
    %239 = arith.addf %237, %238 : vector<4x32xf32>
    %240 = math.tanh %239 : vector<4x32xf32>
    %cst_125 = arith.constant dense<0.000000e+00> : vector<4x1xf32>
    %241 = tpu.matmul %240, %15, %cst_125 {dimension_numbers = #tpu.dot_dimension_numbers<[1], [0], [0], [1], [0, 0, 1, 1], [], []>} : vector<4x32xf32>, vector<32x1xf32>, vector<4x1xf32> -> vector<4x1xf32>
    %242 = vector.broadcast %16 : vector<1x1xf32> to vector<4x1xf32>
    %243 = arith.addf %241, %242 : vector<4x1xf32>
    %244 = arith.addf %220, %243 : vector<4x1xf32>
    %c2 = arith.constant 2 : index
    %c0_126 = arith.constant 0 : index
    %c0_127 = arith.constant 0 : index
    %245 = vector.load %arg22[%c2, %c0_126, %c0_127] : memref<6x4x1xf32, #tpu.memory_space<vmem>>, vector<1x4x1xf32>
    %246 = vector.shape_cast %245 : vector<1x4x1xf32> to vector<4x1xf32>
    %247 = vector.shape_cast %244 : vector<4x1xf32> to vector<1x4x1xf32>
    tpu.vector_store %arg22[%c2, %c0_126, %c0_127], %247 {strides = array<i32>} : memref<6x4x1xf32, #tpu.memory_space<vmem>>, vector<1x4x1xf32>,
    %c2_128 = arith.constant 2 : index
    %c0_129 = arith.constant 0 : index
    %c0_130 = arith.constant 0 : index
    %248 = vector.load %arg23[%c2_128, %c0_129, %c0_130] : memref<6x4x8xf32, #tpu.memory_space<vmem>>, vector<1x4x8xf32>
    %249 = vector.shape_cast %248 : vector<1x4x8xf32> to vector<4x8xf32>
    %250 = vector.shape_cast %233 : vector<4x8xf32> to vector<1x4x8xf32>
    tpu.vector_store %arg23[%c2_128, %c0_129, %c0_130], %250 {strides = array<i32>} : memref<6x4x8xf32, #tpu.memory_space<vmem>>, vector<1x4x8xf32>,
    %c2_131 = arith.constant 2 : index
    %c0_132 = arith.constant 0 : index
    %c0_133 = arith.constant 0 : index
    %251 = vector.load %arg24[%c2_131, %c0_132, %c0_133] : memref<6x4x8xf32, #tpu.memory_space<vmem>>, vector<1x4x8xf32>
    %252 = vector.shape_cast %251 : vector<1x4x8xf32> to vector<4x8xf32>
    %253 = vector.shape_cast %209 : vector<4x8xf32> to vector<1x4x8xf32>
    tpu.vector_store %arg24[%c2_131, %c0_132, %c0_133], %253 {strides = array<i32>} : memref<6x4x8xf32, #tpu.memory_space<vmem>>, vector<1x4x8xf32>,
    %cst_134 = arith.constant 5.000000e-02 : f32
    %254 = vector.broadcast %cst_134 : f32 to vector<4x8xf32>
    %255 = arith.mulf %254, %230 : vector<4x8xf32>
    %256 = arith.addf %233, %255 : vector<4x8xf32>
    %cst_135 = arith.constant dense<0.000000e+00> : vector<4x32xf32>
    %257 = tpu.matmul %256, %9, %cst_135 {dimension_numbers = #tpu.dot_dimension_numbers<[1], [0], [0], [1], [0, 0, 1, 1], [], []>} : vector<4x8xf32>, vector<8x32xf32>, vector<4x32xf32> -> vector<4x32xf32>
    %258 = arith.addf %257, %22 : vector<4x32xf32>
    %259 = math.tanh %258 : vector<4x32xf32>
    %cst_136 = arith.constant dense<0.000000e+00> : vector<4x32xf32>
    %260 = tpu.matmul %259, %10, %cst_136 {dimension_numbers = #tpu.dot_dimension_numbers<[1], [0], [0], [1], [0, 0, 1, 1], [], []>} : vector<4x32xf32>, vector<32x32xf32>, vector<4x32xf32> -> vector<4x32xf32>
    %261 = vector.broadcast %12 : vector<1x32xf32> to vector<4x32xf32>
    %262 = arith.addf %260, %261 : vector<4x32xf32>
    %263 = math.tanh %262 : vector<4x32xf32>
    %264 = arith.mulf %263, %263 : vector<4x32xf32>
    %cst_137 = arith.constant 1.000000e+00 : f32
    %265 = vector.broadcast %cst_137 : f32 to vector<4x32xf32>
    %266 = arith.subf %265, %264 : vector<4x32xf32>
    %267 = arith.mulf %266, %26 : vector<4x32xf32>
    %cst_138 = arith.constant dense<0.000000e+00> : vector<4x32xf32>
    %268 = tpu.matmul %267, %14, %cst_138 {dimension_numbers = #tpu.dot_dimension_numbers<[1], [0], [0], [1], [0, 0, 1, 1], [], []>} : vector<4x32xf32>, vector<32x32xf32>, vector<4x32xf32> -> vector<4x32xf32>
    %269 = arith.mulf %259, %259 : vector<4x32xf32>
    %cst_139 = arith.constant 1.000000e+00 : f32
    %270 = vector.broadcast %cst_139 : f32 to vector<4x32xf32>
    %271 = arith.subf %270, %269 : vector<4x32xf32>
    %272 = arith.mulf %271, %268 : vector<4x32xf32>
    %cst_140 = arith.constant dense<0.000000e+00> : vector<4x8xf32>
    %273 = tpu.matmul %272, %13, %cst_140 {dimension_numbers = #tpu.dot_dimension_numbers<[1], [0], [0], [1], [0, 0, 1, 1], [], []>} : vector<4x32xf32>, vector<32x8xf32>, vector<4x8xf32> -> vector<4x8xf32>
    %cst_141 = arith.constant 0.000000e+00 : f32
    %274 = vector.broadcast %cst_141 : f32 to vector<4x8xf32>
    %275 = arith.subf %274, %273 : vector<4x8xf32>
    %cst_142 = arith.constant 1.000000e-01 : f32
    %276 = vector.broadcast %cst_142 : f32 to vector<4x8xf32>
    %277 = arith.mulf %276, %275 : vector<4x8xf32>
    %278 = arith.addf %209, %277 : vector<4x8xf32>
    %cst_143 = arith.constant dense<0.000000e+00> : vector<4x32xf32>
    %279 = tpu.matmul %278, %0, %cst_143 {dimension_numbers = #tpu.dot_dimension_numbers<[1], [0], [0], [1], [0, 0, 1, 1], [], []>} : vector<4x8xf32>, vector<8x32xf32>, vector<4x32xf32> -> vector<4x32xf32>
    %280 = vector.broadcast %2 : vector<1x32xf32> to vector<4x32xf32>
    %281 = arith.addf %279, %280 : vector<4x32xf32>
    %282 = math.tanh %281 : vector<4x32xf32>
    %cst_144 = arith.constant dense<0.000000e+00> : vector<4x32xf32>
    %283 = tpu.matmul %282, %1, %cst_144 {dimension_numbers = #tpu.dot_dimension_numbers<[1], [0], [0], [1], [0, 0, 1, 1], [], []>} : vector<4x32xf32>, vector<32x32xf32>, vector<4x32xf32> -> vector<4x32xf32>
    %284 = vector.broadcast %3 : vector<1x32xf32> to vector<4x32xf32>
    %285 = arith.addf %283, %284 : vector<4x32xf32>
    %286 = math.tanh %285 : vector<4x32xf32>
    %cst_145 = arith.constant dense<0.000000e+00> : vector<4x1xf32>
    %287 = tpu.matmul %286, %6, %cst_145 {dimension_numbers = #tpu.dot_dimension_numbers<[1], [0], [0], [1], [0, 0, 1, 1], [], []>} : vector<4x32xf32>, vector<32x1xf32>, vector<4x1xf32> -> vector<4x1xf32>
    %288 = vector.broadcast %7 : vector<1x1xf32> to vector<4x1xf32>
    %289 = arith.addf %287, %288 : vector<4x1xf32>
    %290 = arith.mulf %286, %286 : vector<4x32xf32>
    %cst_146 = arith.constant 1.000000e+00 : f32
    %291 = vector.broadcast %cst_146 : f32 to vector<4x32xf32>
    %292 = arith.subf %291, %290 : vector<4x32xf32>
    %293 = arith.mulf %292, %24 : vector<4x32xf32>
    %cst_147 = arith.constant dense<0.000000e+00> : vector<4x32xf32>
    %294 = tpu.matmul %293, %5, %cst_147 {dimension_numbers = #tpu.dot_dimension_numbers<[1], [0], [0], [1], [0, 0, 1, 1], [], []>} : vector<4x32xf32>, vector<32x32xf32>, vector<4x32xf32> -> vector<4x32xf32>
    %295 = arith.mulf %282, %282 : vector<4x32xf32>
    %cst_148 = arith.constant 1.000000e+00 : f32
    %296 = vector.broadcast %cst_148 : f32 to vector<4x32xf32>
    %297 = arith.subf %296, %295 : vector<4x32xf32>
    %298 = arith.mulf %297, %294 : vector<4x32xf32>
    %cst_149 = arith.constant dense<0.000000e+00> : vector<4x8xf32>
    %299 = tpu.matmul %298, %4, %cst_149 {dimension_numbers = #tpu.dot_dimension_numbers<[1], [0], [0], [1], [0, 0, 1, 1], [], []>} : vector<4x32xf32>, vector<32x8xf32>, vector<4x8xf32> -> vector<4x8xf32>
    %cst_150 = arith.constant 5.000000e-02 : f32
    %300 = vector.broadcast %cst_150 : f32 to vector<4x8xf32>
    %301 = arith.mulf %300, %299 : vector<4x8xf32>
    %302 = arith.addf %256, %301 : vector<4x8xf32>
    %cst_151 = arith.constant dense<0.000000e+00> : vector<4x32xf32>
    %303 = tpu.matmul %302, %9, %cst_151 {dimension_numbers = #tpu.dot_dimension_numbers<[1], [0], [0], [1], [0, 0, 1, 1], [], []>} : vector<4x8xf32>, vector<8x32xf32>, vector<4x32xf32> -> vector<4x32xf32>
    %304 = arith.addf %303, %22 : vector<4x32xf32>
    %305 = math.tanh %304 : vector<4x32xf32>
    %cst_152 = arith.constant dense<0.000000e+00> : vector<4x32xf32>
    %306 = tpu.matmul %305, %10, %cst_152 {dimension_numbers = #tpu.dot_dimension_numbers<[1], [0], [0], [1], [0, 0, 1, 1], [], []>} : vector<4x32xf32>, vector<32x32xf32>, vector<4x32xf32> -> vector<4x32xf32>
    %307 = vector.broadcast %12 : vector<1x32xf32> to vector<4x32xf32>
    %308 = arith.addf %306, %307 : vector<4x32xf32>
    %309 = math.tanh %308 : vector<4x32xf32>
    %cst_153 = arith.constant dense<0.000000e+00> : vector<4x1xf32>
    %310 = tpu.matmul %309, %15, %cst_153 {dimension_numbers = #tpu.dot_dimension_numbers<[1], [0], [0], [1], [0, 0, 1, 1], [], []>} : vector<4x32xf32>, vector<32x1xf32>, vector<4x1xf32> -> vector<4x1xf32>
    %311 = vector.broadcast %16 : vector<1x1xf32> to vector<4x1xf32>
    %312 = arith.addf %310, %311 : vector<4x1xf32>
    %313 = arith.addf %289, %312 : vector<4x1xf32>
    %c3 = arith.constant 3 : index
    %c0_154 = arith.constant 0 : index
    %c0_155 = arith.constant 0 : index
    %314 = vector.load %arg22[%c3, %c0_154, %c0_155] : memref<6x4x1xf32, #tpu.memory_space<vmem>>, vector<1x4x1xf32>
    %315 = vector.shape_cast %314 : vector<1x4x1xf32> to vector<4x1xf32>
    %316 = vector.shape_cast %313 : vector<4x1xf32> to vector<1x4x1xf32>
    tpu.vector_store %arg22[%c3, %c0_154, %c0_155], %316 {strides = array<i32>} : memref<6x4x1xf32, #tpu.memory_space<vmem>>, vector<1x4x1xf32>,
    %c3_156 = arith.constant 3 : index
    %c0_157 = arith.constant 0 : index
    %c0_158 = arith.constant 0 : index
    %317 = vector.load %arg23[%c3_156, %c0_157, %c0_158] : memref<6x4x8xf32, #tpu.memory_space<vmem>>, vector<1x4x8xf32>
    %318 = vector.shape_cast %317 : vector<1x4x8xf32> to vector<4x8xf32>
    %319 = vector.shape_cast %302 : vector<4x8xf32> to vector<1x4x8xf32>
    tpu.vector_store %arg23[%c3_156, %c0_157, %c0_158], %319 {strides = array<i32>} : memref<6x4x8xf32, #tpu.memory_space<vmem>>, vector<1x4x8xf32>,
    %c3_159 = arith.constant 3 : index
    %c0_160 = arith.constant 0 : index
    %c0_161 = arith.constant 0 : index
    %320 = vector.load %arg24[%c3_159, %c0_160, %c0_161] : memref<6x4x8xf32, #tpu.memory_space<vmem>>, vector<1x4x8xf32>
    %321 = vector.shape_cast %320 : vector<1x4x8xf32> to vector<4x8xf32>
    %322 = vector.shape_cast %278 : vector<4x8xf32> to vector<1x4x8xf32>
    tpu.vector_store %arg24[%c3_159, %c0_160, %c0_161], %322 {strides = array<i32>} : memref<6x4x8xf32, #tpu.memory_space<vmem>>, vector<1x4x8xf32>,
    %cst_162 = arith.constant 5.000000e-02 : f32
    %323 = vector.broadcast %cst_162 : f32 to vector<4x8xf32>
    %324 = arith.mulf %323, %299 : vector<4x8xf32>
    %325 = arith.addf %302, %324 : vector<4x8xf32>
    %cst_163 = arith.constant dense<0.000000e+00> : vector<4x32xf32>
    %326 = tpu.matmul %325, %9, %cst_163 {dimension_numbers = #tpu.dot_dimension_numbers<[1], [0], [0], [1], [0, 0, 1, 1], [], []>} : vector<4x8xf32>, vector<8x32xf32>, vector<4x32xf32> -> vector<4x32xf32>
    %327 = arith.addf %326, %22 : vector<4x32xf32>
    %328 = math.tanh %327 : vector<4x32xf32>
    %cst_164 = arith.constant dense<0.000000e+00> : vector<4x32xf32>
    %329 = tpu.matmul %328, %10, %cst_164 {dimension_numbers = #tpu.dot_dimension_numbers<[1], [0], [0], [1], [0, 0, 1, 1], [], []>} : vector<4x32xf32>, vector<32x32xf32>, vector<4x32xf32> -> vector<4x32xf32>
    %330 = vector.broadcast %12 : vector<1x32xf32> to vector<4x32xf32>
    %331 = arith.addf %329, %330 : vector<4x32xf32>
    %332 = math.tanh %331 : vector<4x32xf32>
    %333 = arith.mulf %332, %332 : vector<4x32xf32>
    %cst_165 = arith.constant 1.000000e+00 : f32
    %334 = vector.broadcast %cst_165 : f32 to vector<4x32xf32>
    %335 = arith.subf %334, %333 : vector<4x32xf32>
    %336 = arith.mulf %335, %26 : vector<4x32xf32>
    %cst_166 = arith.constant dense<0.000000e+00> : vector<4x32xf32>
    %337 = tpu.matmul %336, %14, %cst_166 {dimension_numbers = #tpu.dot_dimension_numbers<[1], [0], [0], [1], [0, 0, 1, 1], [], []>} : vector<4x32xf32>, vector<32x32xf32>, vector<4x32xf32> -> vector<4x32xf32>
    %338 = arith.mulf %328, %328 : vector<4x32xf32>
    %cst_167 = arith.constant 1.000000e+00 : f32
    %339 = vector.broadcast %cst_167 : f32 to vector<4x32xf32>
    %340 = arith.subf %339, %338 : vector<4x32xf32>
    %341 = arith.mulf %340, %337 : vector<4x32xf32>
    %cst_168 = arith.constant dense<0.000000e+00> : vector<4x8xf32>
    %342 = tpu.matmul %341, %13, %cst_168 {dimension_numbers = #tpu.dot_dimension_numbers<[1], [0], [0], [1], [0, 0, 1, 1], [], []>} : vector<4x32xf32>, vector<32x8xf32>, vector<4x8xf32> -> vector<4x8xf32>
    %cst_169 = arith.constant 0.000000e+00 : f32
    %343 = vector.broadcast %cst_169 : f32 to vector<4x8xf32>
    %344 = arith.subf %343, %342 : vector<4x8xf32>
    %cst_170 = arith.constant 1.000000e-01 : f32
    %345 = vector.broadcast %cst_170 : f32 to vector<4x8xf32>
    %346 = arith.mulf %345, %344 : vector<4x8xf32>
    %347 = arith.addf %278, %346 : vector<4x8xf32>
    %cst_171 = arith.constant dense<0.000000e+00> : vector<4x32xf32>
    %348 = tpu.matmul %347, %0, %cst_171 {dimension_numbers = #tpu.dot_dimension_numbers<[1], [0], [0], [1], [0, 0, 1, 1], [], []>} : vector<4x8xf32>, vector<8x32xf32>, vector<4x32xf32> -> vector<4x32xf32>
    %349 = vector.broadcast %2 : vector<1x32xf32> to vector<4x32xf32>
    %350 = arith.addf %348, %349 : vector<4x32xf32>
    %351 = math.tanh %350 : vector<4x32xf32>
    %cst_172 = arith.constant dense<0.000000e+00> : vector<4x32xf32>
    %352 = tpu.matmul %351, %1, %cst_172 {dimension_numbers = #tpu.dot_dimension_numbers<[1], [0], [0], [1], [0, 0, 1, 1], [], []>} : vector<4x32xf32>, vector<32x32xf32>, vector<4x32xf32> -> vector<4x32xf32>
    %353 = vector.broadcast %3 : vector<1x32xf32> to vector<4x32xf32>
    %354 = arith.addf %352, %353 : vector<4x32xf32>
    %355 = math.tanh %354 : vector<4x32xf32>
    %cst_173 = arith.constant dense<0.000000e+00> : vector<4x1xf32>
    %356 = tpu.matmul %355, %6, %cst_173 {dimension_numbers = #tpu.dot_dimension_numbers<[1], [0], [0], [1], [0, 0, 1, 1], [], []>} : vector<4x32xf32>, vector<32x1xf32>, vector<4x1xf32> -> vector<4x1xf32>
    %357 = vector.broadcast %7 : vector<1x1xf32> to vector<4x1xf32>
    %358 = arith.addf %356, %357 : vector<4x1xf32>
    %359 = arith.mulf %355, %355 : vector<4x32xf32>
    %cst_174 = arith.constant 1.000000e+00 : f32
    %360 = vector.broadcast %cst_174 : f32 to vector<4x32xf32>
    %361 = arith.subf %360, %359 : vector<4x32xf32>
    %362 = arith.mulf %361, %24 : vector<4x32xf32>
    %cst_175 = arith.constant dense<0.000000e+00> : vector<4x32xf32>
    %363 = tpu.matmul %362, %5, %cst_175 {dimension_numbers = #tpu.dot_dimension_numbers<[1], [0], [0], [1], [0, 0, 1, 1], [], []>} : vector<4x32xf32>, vector<32x32xf32>, vector<4x32xf32> -> vector<4x32xf32>
    %364 = arith.mulf %351, %351 : vector<4x32xf32>
    %cst_176 = arith.constant 1.000000e+00 : f32
    %365 = vector.broadcast %cst_176 : f32 to vector<4x32xf32>
    %366 = arith.subf %365, %364 : vector<4x32xf32>
    %367 = arith.mulf %366, %363 : vector<4x32xf32>
    %cst_177 = arith.constant dense<0.000000e+00> : vector<4x8xf32>
    %368 = tpu.matmul %367, %4, %cst_177 {dimension_numbers = #tpu.dot_dimension_numbers<[1], [0], [0], [1], [0, 0, 1, 1], [], []>} : vector<4x32xf32>, vector<32x8xf32>, vector<4x8xf32> -> vector<4x8xf32>
    %cst_178 = arith.constant 5.000000e-02 : f32
    %369 = vector.broadcast %cst_178 : f32 to vector<4x8xf32>
    %370 = arith.mulf %369, %368 : vector<4x8xf32>
    %371 = arith.addf %325, %370 : vector<4x8xf32>
    %cst_179 = arith.constant dense<0.000000e+00> : vector<4x32xf32>
    %372 = tpu.matmul %371, %9, %cst_179 {dimension_numbers = #tpu.dot_dimension_numbers<[1], [0], [0], [1], [0, 0, 1, 1], [], []>} : vector<4x8xf32>, vector<8x32xf32>, vector<4x32xf32> -> vector<4x32xf32>
    %373 = arith.addf %372, %22 : vector<4x32xf32>
    %374 = math.tanh %373 : vector<4x32xf32>
    %cst_180 = arith.constant dense<0.000000e+00> : vector<4x32xf32>
    %375 = tpu.matmul %374, %10, %cst_180 {dimension_numbers = #tpu.dot_dimension_numbers<[1], [0], [0], [1], [0, 0, 1, 1], [], []>} : vector<4x32xf32>, vector<32x32xf32>, vector<4x32xf32> -> vector<4x32xf32>
    %376 = vector.broadcast %12 : vector<1x32xf32> to vector<4x32xf32>
    %377 = arith.addf %375, %376 : vector<4x32xf32>
    %378 = math.tanh %377 : vector<4x32xf32>
    %cst_181 = arith.constant dense<0.000000e+00> : vector<4x1xf32>
    %379 = tpu.matmul %378, %15, %cst_181 {dimension_numbers = #tpu.dot_dimension_numbers<[1], [0], [0], [1], [0, 0, 1, 1], [], []>} : vector<4x32xf32>, vector<32x1xf32>, vector<4x1xf32> -> vector<4x1xf32>
    %380 = vector.broadcast %16 : vector<1x1xf32> to vector<4x1xf32>
    %381 = arith.addf %379, %380 : vector<4x1xf32>
    %382 = arith.addf %358, %381 : vector<4x1xf32>
    %c4 = arith.constant 4 : index
    %c0_182 = arith.constant 0 : index
    %c0_183 = arith.constant 0 : index
    %383 = vector.load %arg22[%c4, %c0_182, %c0_183] : memref<6x4x1xf32, #tpu.memory_space<vmem>>, vector<1x4x1xf32>
    %384 = vector.shape_cast %383 : vector<1x4x1xf32> to vector<4x1xf32>
    %385 = vector.shape_cast %382 : vector<4x1xf32> to vector<1x4x1xf32>
    tpu.vector_store %arg22[%c4, %c0_182, %c0_183], %385 {strides = array<i32>} : memref<6x4x1xf32, #tpu.memory_space<vmem>>, vector<1x4x1xf32>,
    %c4_184 = arith.constant 4 : index
    %c0_185 = arith.constant 0 : index
    %c0_186 = arith.constant 0 : index
    %386 = vector.load %arg23[%c4_184, %c0_185, %c0_186] : memref<6x4x8xf32, #tpu.memory_space<vmem>>, vector<1x4x8xf32>
    %387 = vector.shape_cast %386 : vector<1x4x8xf32> to vector<4x8xf32>
    %388 = vector.shape_cast %371 : vector<4x8xf32> to vector<1x4x8xf32>
    tpu.vector_store %arg23[%c4_184, %c0_185, %c0_186], %388 {strides = array<i32>} : memref<6x4x8xf32, #tpu.memory_space<vmem>>, vector<1x4x8xf32>,
    %c4_187 = arith.constant 4 : index
    %c0_188 = arith.constant 0 : index
    %c0_189 = arith.constant 0 : index
    %389 = vector.load %arg24[%c4_187, %c0_188, %c0_189] : memref<6x4x8xf32, #tpu.memory_space<vmem>>, vector<1x4x8xf32>
    %390 = vector.shape_cast %389 : vector<1x4x8xf32> to vector<4x8xf32>
    %391 = vector.shape_cast %347 : vector<4x8xf32> to vector<1x4x8xf32>
    tpu.vector_store %arg24[%c4_187, %c0_188, %c0_189], %391 {strides = array<i32>} : memref<6x4x8xf32, #tpu.memory_space<vmem>>, vector<1x4x8xf32>,
    %cst_190 = arith.constant 5.000000e-02 : f32
    %392 = vector.broadcast %cst_190 : f32 to vector<4x8xf32>
    %393 = arith.mulf %392, %368 : vector<4x8xf32>
    %394 = arith.addf %371, %393 : vector<4x8xf32>
    %cst_191 = arith.constant dense<0.000000e+00> : vector<4x32xf32>
    %395 = tpu.matmul %394, %9, %cst_191 {dimension_numbers = #tpu.dot_dimension_numbers<[1], [0], [0], [1], [0, 0, 1, 1], [], []>} : vector<4x8xf32>, vector<8x32xf32>, vector<4x32xf32> -> vector<4x32xf32>
    %396 = arith.addf %395, %22 : vector<4x32xf32>
    %397 = math.tanh %396 : vector<4x32xf32>
    %cst_192 = arith.constant dense<0.000000e+00> : vector<4x32xf32>
    %398 = tpu.matmul %397, %10, %cst_192 {dimension_numbers = #tpu.dot_dimension_numbers<[1], [0], [0], [1], [0, 0, 1, 1], [], []>} : vector<4x32xf32>, vector<32x32xf32>, vector<4x32xf32> -> vector<4x32xf32>
    %399 = vector.broadcast %12 : vector<1x32xf32> to vector<4x32xf32>
    %400 = arith.addf %398, %399 : vector<4x32xf32>
    %401 = math.tanh %400 : vector<4x32xf32>
    %402 = arith.mulf %401, %401 : vector<4x32xf32>
    %cst_193 = arith.constant 1.000000e+00 : f32
    %403 = vector.broadcast %cst_193 : f32 to vector<4x32xf32>
    %404 = arith.subf %403, %402 : vector<4x32xf32>
    %405 = arith.mulf %404, %26 : vector<4x32xf32>
    %cst_194 = arith.constant dense<0.000000e+00> : vector<4x32xf32>
    %406 = tpu.matmul %405, %14, %cst_194 {dimension_numbers = #tpu.dot_dimension_numbers<[1], [0], [0], [1], [0, 0, 1, 1], [], []>} : vector<4x32xf32>, vector<32x32xf32>, vector<4x32xf32> -> vector<4x32xf32>
    %407 = arith.mulf %397, %397 : vector<4x32xf32>
    %cst_195 = arith.constant 1.000000e+00 : f32
    %408 = vector.broadcast %cst_195 : f32 to vector<4x32xf32>
    %409 = arith.subf %408, %407 : vector<4x32xf32>
    %410 = arith.mulf %409, %406 : vector<4x32xf32>
    %cst_196 = arith.constant dense<0.000000e+00> : vector<4x8xf32>
    %411 = tpu.matmul %410, %13, %cst_196 {dimension_numbers = #tpu.dot_dimension_numbers<[1], [0], [0], [1], [0, 0, 1, 1], [], []>} : vector<4x32xf32>, vector<32x8xf32>, vector<4x8xf32> -> vector<4x8xf32>
    %cst_197 = arith.constant 0.000000e+00 : f32
    %412 = vector.broadcast %cst_197 : f32 to vector<4x8xf32>
    %413 = arith.subf %412, %411 : vector<4x8xf32>
    %cst_198 = arith.constant 1.000000e-01 : f32
    %414 = vector.broadcast %cst_198 : f32 to vector<4x8xf32>
    %415 = arith.mulf %414, %413 : vector<4x8xf32>
    %416 = arith.addf %347, %415 : vector<4x8xf32>
    %cst_199 = arith.constant dense<0.000000e+00> : vector<4x32xf32>
    %417 = tpu.matmul %416, %0, %cst_199 {dimension_numbers = #tpu.dot_dimension_numbers<[1], [0], [0], [1], [0, 0, 1, 1], [], []>} : vector<4x8xf32>, vector<8x32xf32>, vector<4x32xf32> -> vector<4x32xf32>
    %418 = vector.broadcast %2 : vector<1x32xf32> to vector<4x32xf32>
    %419 = arith.addf %417, %418 : vector<4x32xf32>
    %420 = math.tanh %419 : vector<4x32xf32>
    %cst_200 = arith.constant dense<0.000000e+00> : vector<4x32xf32>
    %421 = tpu.matmul %420, %1, %cst_200 {dimension_numbers = #tpu.dot_dimension_numbers<[1], [0], [0], [1], [0, 0, 1, 1], [], []>} : vector<4x32xf32>, vector<32x32xf32>, vector<4x32xf32> -> vector<4x32xf32>
    %422 = vector.broadcast %3 : vector<1x32xf32> to vector<4x32xf32>
    %423 = arith.addf %421, %422 : vector<4x32xf32>
    %424 = math.tanh %423 : vector<4x32xf32>
    %cst_201 = arith.constant dense<0.000000e+00> : vector<4x1xf32>
    %425 = tpu.matmul %424, %6, %cst_201 {dimension_numbers = #tpu.dot_dimension_numbers<[1], [0], [0], [1], [0, 0, 1, 1], [], []>} : vector<4x32xf32>, vector<32x1xf32>, vector<4x1xf32> -> vector<4x1xf32>
    %426 = vector.broadcast %7 : vector<1x1xf32> to vector<4x1xf32>
    %427 = arith.addf %425, %426 : vector<4x1xf32>
    %428 = arith.mulf %424, %424 : vector<4x32xf32>
    %cst_202 = arith.constant 1.000000e+00 : f32
    %429 = vector.broadcast %cst_202 : f32 to vector<4x32xf32>
    %430 = arith.subf %429, %428 : vector<4x32xf32>
    %431 = arith.mulf %430, %24 : vector<4x32xf32>
    %cst_203 = arith.constant dense<0.000000e+00> : vector<4x32xf32>
    %432 = tpu.matmul %431, %5, %cst_203 {dimension_numbers = #tpu.dot_dimension_numbers<[1], [0], [0], [1], [0, 0, 1, 1], [], []>} : vector<4x32xf32>, vector<32x32xf32>, vector<4x32xf32> -> vector<4x32xf32>
    %433 = arith.mulf %420, %420 : vector<4x32xf32>
    %cst_204 = arith.constant 1.000000e+00 : f32
    %434 = vector.broadcast %cst_204 : f32 to vector<4x32xf32>
    %435 = arith.subf %434, %433 : vector<4x32xf32>
    %436 = arith.mulf %435, %432 : vector<4x32xf32>
    %cst_205 = arith.constant dense<0.000000e+00> : vector<4x8xf32>
    %437 = tpu.matmul %436, %4, %cst_205 {dimension_numbers = #tpu.dot_dimension_numbers<[1], [0], [0], [1], [0, 0, 1, 1], [], []>} : vector<4x32xf32>, vector<32x8xf32>, vector<4x8xf32> -> vector<4x8xf32>
    %cst_206 = arith.constant 5.000000e-02 : f32
    %438 = vector.broadcast %cst_206 : f32 to vector<4x8xf32>
    %439 = arith.mulf %438, %437 : vector<4x8xf32>
    %440 = arith.addf %394, %439 : vector<4x8xf32>
    %cst_207 = arith.constant dense<0.000000e+00> : vector<4x32xf32>
    %441 = tpu.matmul %440, %9, %cst_207 {dimension_numbers = #tpu.dot_dimension_numbers<[1], [0], [0], [1], [0, 0, 1, 1], [], []>} : vector<4x8xf32>, vector<8x32xf32>, vector<4x32xf32> -> vector<4x32xf32>
    %442 = arith.addf %441, %22 : vector<4x32xf32>
    %443 = math.tanh %442 : vector<4x32xf32>
    %cst_208 = arith.constant dense<0.000000e+00> : vector<4x32xf32>
    %444 = tpu.matmul %443, %10, %cst_208 {dimension_numbers = #tpu.dot_dimension_numbers<[1], [0], [0], [1], [0, 0, 1, 1], [], []>} : vector<4x32xf32>, vector<32x32xf32>, vector<4x32xf32> -> vector<4x32xf32>
    %445 = vector.broadcast %12 : vector<1x32xf32> to vector<4x32xf32>
    %446 = arith.addf %444, %445 : vector<4x32xf32>
    %447 = math.tanh %446 : vector<4x32xf32>
    %cst_209 = arith.constant dense<0.000000e+00> : vector<4x1xf32>
    %448 = tpu.matmul %447, %15, %cst_209 {dimension_numbers = #tpu.dot_dimension_numbers<[1], [0], [0], [1], [0, 0, 1, 1], [], []>} : vector<4x32xf32>, vector<32x1xf32>, vector<4x1xf32> -> vector<4x1xf32>
    %449 = vector.broadcast %16 : vector<1x1xf32> to vector<4x1xf32>
    %450 = arith.addf %448, %449 : vector<4x1xf32>
    %451 = arith.addf %427, %450 : vector<4x1xf32>
    %c5 = arith.constant 5 : index
    %c0_210 = arith.constant 0 : index
    %c0_211 = arith.constant 0 : index
    %452 = vector.load %arg22[%c5, %c0_210, %c0_211] : memref<6x4x1xf32, #tpu.memory_space<vmem>>, vector<1x4x1xf32>
    %453 = vector.shape_cast %452 : vector<1x4x1xf32> to vector<4x1xf32>
    %454 = vector.shape_cast %451 : vector<4x1xf32> to vector<1x4x1xf32>
    tpu.vector_store %arg22[%c5, %c0_210, %c0_211], %454 {strides = array<i32>} : memref<6x4x1xf32, #tpu.memory_space<vmem>>, vector<1x4x1xf32>,
    %c5_212 = arith.constant 5 : index
    %c0_213 = arith.constant 0 : index
    %c0_214 = arith.constant 0 : index
    %455 = vector.load %arg23[%c5_212, %c0_213, %c0_214] : memref<6x4x8xf32, #tpu.memory_space<vmem>>, vector<1x4x8xf32>
    %456 = vector.shape_cast %455 : vector<1x4x8xf32> to vector<4x8xf32>
    %457 = vector.shape_cast %440 : vector<4x8xf32> to vector<1x4x8xf32>
    tpu.vector_store %arg23[%c5_212, %c0_213, %c0_214], %457 {strides = array<i32>} : memref<6x4x8xf32, #tpu.memory_space<vmem>>, vector<1x4x8xf32>,
    %c5_215 = arith.constant 5 : index
    %c0_216 = arith.constant 0 : index
    %c0_217 = arith.constant 0 : index
    %458 = vector.load %arg24[%c5_215, %c0_216, %c0_217] : memref<6x4x8xf32, #tpu.memory_space<vmem>>, vector<1x4x8xf32>
    %459 = vector.shape_cast %458 : vector<1x4x8xf32> to vector<4x8xf32>
    %460 = vector.shape_cast %416 : vector<4x8xf32> to vector<1x4x8xf32>
    tpu.vector_store %arg24[%c5_215, %c0_216, %c0_217], %460 {strides = array<i32>} : memref<6x4x8xf32, #tpu.memory_space<vmem>>, vector<1x4x8xf32>,
    return
  }
}

</mosaic_0001>

<llo_original>
// kernel: tpu_custom_call.1
$region0: #{tpu_custom_call.1}
  #allocation0 [shape = 'u32[]', space=smem, size = 0x4, offset = 0x4, fixed_abs, tag = 'smem constant byte address 0x4 - core index']
  #allocation1 [shape = 'u32[72,128]{1,0:T(1,128)}', space=vmem, size = 0x9000, scoped, tag = 'internal scratch']
  #allocation2 [shape = 'f32[1,1]{1,0:T(1,128)S(1)}', space=vmem, size = 0x200, scoped, tag = 'scoped memory for tpu_custom_call.1']
  #allocation3 [shape = 'f32[1,1]{1,0:T(1,128)S(1)}', space=vmem, size = 0x200, scoped, tag = 'scoped memory for tpu_custom_call.1']
  %s0 = inlined_call_operand.hbm [shape: f32[4,8], index: 0, kind: input, shape index: {}]
  %s1 = inlined_call_operand.hbm [shape: f32[4,8], index: 1, kind: input, shape index: {}]
  %s2 = inlined_call_operand.hbm [shape: f32[4,4], index: 2, kind: input, shape index: {}]
  %s3 = inlined_call_operand.hbm [shape: f32[4,32], index: 3, kind: input, shape index: {}]
  %s4 = inlined_call_operand.vmem [shape: f32[8,32], index: 4, kind: input, shape index: {}]
  %s5 = inlined_call_operand.vmem [shape: f32[1,32], index: 5, kind: input, shape index: {}]
  %s6 = inlined_call_operand.vmem [shape: f32[32,8], index: 6, kind: input, shape index: {}]
  %s7 = inlined_call_operand.vmem [shape: f32[32,32], index: 7, kind: input, shape index: {}]
  %s8 = inlined_call_operand.vmem [shape: f32[1,32], index: 8, kind: input, shape index: {}]
  %s9 = inlined_call_operand.vmem [shape: f32[32,32], index: 9, kind: input, shape index: {}]
  %s10 = inlined_call_operand.vmem [shape: f32[32,1], index: 10, kind: input, shape index: {}]
  %s11 = inlined_call_operand.<no memory space> [shape: f32[1,1], index: 11, kind: input, shape index: {}]
  %s12 = inlined_call_operand.vmem [shape: f32[1,32], index: 12, kind: input, shape index: {}]
  %s13 = inlined_call_operand.hbm [shape: f32[8,32], index: 13, kind: input, shape index: {}]
  %s14 = inlined_call_operand.vmem [shape: f32[1,32], index: 14, kind: input, shape index: {}]
  %s15 = inlined_call_operand.vmem [shape: f32[32,8], index: 15, kind: input, shape index: {}]
  %s16 = inlined_call_operand.vmem [shape: f32[32,32], index: 16, kind: input, shape index: {}]
  %s17 = inlined_call_operand.vmem [shape: f32[1,32], index: 17, kind: input, shape index: {}]
  %s18 = inlined_call_operand.vmem [shape: f32[32,32], index: 18, kind: input, shape index: {}]
  %s19 = inlined_call_operand.vmem [shape: f32[32,1], index: 19, kind: input, shape index: {}]
  %s20 = inlined_call_operand.<no memory space> [shape: f32[1,1], index: 20, kind: input, shape index: {}]
  %s21 = inlined_call_operand.vmem [shape: f32[1,32], index: 21, kind: input, shape index: {}]
  %s22 = inlined_call_operand.vmem [shape: f32[6,4,1], index: 22, kind: output, shape index: {0}]
  %s23 = inlined_call_operand.hbm [shape: f32[6,4,8], index: 23, kind: output, shape index: {1}]
  %s24 = inlined_call_operand.hbm [shape: f32[6,4,8], index: 24, kind: output, shape index: {2}]
  %25 = xla_tuple %s22, %s23, %s24
  %s26 = sld [smem:[#allocation0]]
  $region134: #{tpu_custom_call.1} parent=0
    _
  %s28 = ssub.s32 1, %s26
  %s29 = scalar_select 0, %s28, %s26
  %v30 = vstv %s11
  %31 = vst [vmem:[#allocation2] sm:$0x1] %v30
  %v32 = vstv %s20
  %33 = vst [vmem:[#allocation3] sm:$0x1] %v32
  $region1: #{tpu_custom_call.1} parent=0
    #allocation4 [shape = 'u8[2048]{0}', space=vmem, size = 0x800, scoped, tag = 'input window, operand 0, single buffered']
    #allocation5 [shape = 's32[1]{0}', space=sflag, size = 0x4, scoped, tag = 'scoped memory for tpu_custom_call.1']
    #allocation6 [shape = 's32[1]{0}', space=sflag, size = 0x4, scoped, tag = 'scoped memory for tpu_custom_call.1']
    #allocation7 [shape = 'u8[2048]{0}', space=vmem, size = 0x800, scoped, tag = 'input window, operand 1, single buffered']
    #allocation8 [shape = 's32[1]{0}', space=sflag, size = 0x4, scoped, tag = 'scoped memory for tpu_custom_call.1']
    #allocation9 [shape = 'u8[2048]{0}', space=vmem, size = 0x800, scoped, tag = 'input window, operand 2, single buffered']
    #allocation10 [shape = 'u8[2048]{0}', space=vmem, size = 0x800, scoped, tag = 'input window, operand 3, single buffered']
    #allocation11 [shape = 's32[1]{0}', space=sflag, size = 0x4, scoped, tag = 'scoped memory for tpu_custom_call.1']
    #allocation12 [shape = 'u8[4096]{0}', space=vmem, size = 0x1000, scoped, tag = 'input window, operand 13, single buffered']
    #allocation13 [shape = 'u8[12288]{0}', space=vmem, size = 0x3000, scoped, tag = 'output window, operand 1, single buffered']
    #allocation14 [shape = 'u8[12288]{0}', space=vmem, size = 0x3000, scoped, tag = 'output window, operand 2, single buffered']
    #allocation15 [shape = 's32[1]{0}', space=sflag, size = 0x4, scoped, tag = 'scoped memory for tpu_custom_call.1']
    %34 = vsyncpa [#allocation5], 0
    %35 = vsyncpa [#allocation8], 0
    %36 = vsyncpa [#allocation11], 0
    %37 = vsyncpa [#allocation6], 0
    %38 = vsyncpa [#allocation15], 0
    // Predicated region
    $region2: #{tpu_custom_call.1} parent=1 // pred_check
      _
    $region3: #{tpu_custom_call.1} parent=1 // pred_check_branch
      %40 = sbr.rel (0) target = $region5
    $region4: #{tpu_custom_call.1} parent=1 // pred_region
      %42 = vsyncadd [#allocation5], 0
      %s44 = sshll.u32 %s0, 4
      %s45 = int_to_ptr.hbm [resolvable:$true] %s44
      %s46 = sshll.u32 [#allocation4], 4
      %s47 = int_to_ptr.vmem [resolvable:$true] %s46
      %49 = dma.hbm_to_vmem [thread:$0]  %s45, 64, %s47, [#allocation5]
    $region5: #{tpu_custom_call.1} parent=1 // pred_fallthru
      _
    // Predicated region
    $region6: #{tpu_custom_call.1} parent=1 // pred_check
      _
    $region7: #{tpu_custom_call.1} parent=1 // pred_check_branch
      %51 = sbr.rel (0) target = $region9
    $region8: #{tpu_custom_call.1} parent=1 // pred_region
      %53 = vsyncadd [#allocation8], 0
      %s55 = sshll.u32 %s1, 4
      %s56 = int_to_ptr.hbm [resolvable:$true] %s55
      %s57 = sshll.u32 [#allocation7], 4
      %s58 = int_to_ptr.vmem [resolvable:$true] %s57
      %60 = dma.hbm_to_vmem [thread:$0]  %s56, 64, %s58, [#allocation8]
    $region9: #{tpu_custom_call.1} parent=1 // pred_fallthru
      _
    // Predicated region
    $region10: #{tpu_custom_call.1} parent=1 // pred_check
      _
    $region11: #{tpu_custom_call.1} parent=1 // pred_check_branch
      %62 = sbr.rel (0) target = $region13
    $region12: #{tpu_custom_call.1} parent=1 // pred_region
      %64 = vsyncadd [#allocation8], 0
      %s66 = sshll.u32 %s2, 4
      %s67 = int_to_ptr.hbm [resolvable:$true] %s66
      %s68 = sshll.u32 [#allocation9], 4
      %s69 = int_to_ptr.vmem [resolvable:$true] %s68
      %71 = dma.hbm_to_vmem [thread:$0]  %s67, 64, %s69, [#allocation8]
    $region13: #{tpu_custom_call.1} parent=1 // pred_fallthru
      _
    // Predicated region
    $region14: #{tpu_custom_call.1} parent=1 // pred_check
      _
    $region15: #{tpu_custom_call.1} parent=1 // pred_check_branch
      %73 = sbr.rel (0) target = $region17
    $region16: #{tpu_custom_call.1} parent=1 // pred_region
      %75 = vsyncadd [#allocation11], 0
      %s77 = sshll.u32 %s3, 4
      %s78 = int_to_ptr.hbm [resolvable:$true] %s77
      %s79 = sshll.u32 [#allocation10], 4
      %s80 = int_to_ptr.vmem [resolvable:$true] %s79
      %82 = dma.hbm_to_vmem [thread:$0]  %s78, 64, %s80, [#allocation11]
    $region17: #{tpu_custom_call.1} parent=1 // pred_fallthru
      _
    // Predicated region
    $region18: #{tpu_custom_call.1} parent=1 // pred_check
      _
    $region19: #{tpu_custom_call.1} parent=1 // pred_check_branch
      %84 = sbr.rel (0) target = $region21
    $region20: #{tpu_custom_call.1} parent=1 // pred_region
      _
    $region21: #{tpu_custom_call.1} parent=1 // pred_fallthru
      _
    // Predicated region
    $region22: #{tpu_custom_call.1} parent=1 // pred_check
      _
    $region23: #{tpu_custom_call.1} parent=1 // pred_check_branch
      %86 = sbr.rel (0) target = $region25
    $region24: #{tpu_custom_call.1} parent=1 // pred_region
      _
    $region25: #{tpu_custom_call.1} parent=1 // pred_fallthru
      _
    // Predicated region
    $region26: #{tpu_custom_call.1} parent=1 // pred_check
      _
    $region27: #{tpu_custom_call.1} parent=1 // pred_check_branch
      %88 = sbr.rel (0) target = $region29
    $region28: #{tpu_custom_call.1} parent=1 // pred_region
      _
    $region29: #{tpu_custom_call.1} parent=1 // pred_fallthru
      _
    // Predicated region
    $region30: #{tpu_custom_call.1} parent=1 // pred_check
      _
    $region31: #{tpu_custom_call.1} parent=1 // pred_check_branch
      %90 = sbr.rel (0) target = $region33
    $region32: #{tpu_custom_call.1} parent=1 // pred_region
      _
    $region33: #{tpu_custom_call.1} parent=1 // pred_fallthru
      _
    // Predicated region
    $region34: #{tpu_custom_call.1} parent=1 // pred_check
      _
    $region35: #{tpu_custom_call.1} parent=1 // pred_check_branch
      %92 = sbr.rel (0) target = $region37
    $region36: #{tpu_custom_call.1} parent=1 // pred_region
      _
    $region37: #{tpu_custom_call.1} parent=1 // pred_fallthru
      _
    // Predicated region
    $region38: #{tpu_custom_call.1} parent=1 // pred_check
      _
    $region39: #{tpu_custom_call.1} parent=1 // pred_check_branch
      %94 = sbr.rel (0) target = $region41
    $region40: #{tpu_custom_call.1} parent=1 // pred_region
      _
    $region41: #{tpu_custom_call.1} parent=1 // pred_fallthru
      _
    // Predicated region
    $region42: #{tpu_custom_call.1} parent=1 // pred_check
      _
    $region43: #{tpu_custom_call.1} parent=1 // pred_check_branch
      %96 = sbr.rel (0) target = $region45
    $region44: #{tpu_custom_call.1} parent=1 // pred_region
      _
    $region45: #{tpu_custom_call.1} parent=1 // pred_fallthru
      _
    // Predicated region
    $region46: #{tpu_custom_call.1} parent=1 // pred_check
      _
    $region47: #{tpu_custom_call.1} parent=1 // pred_check_branch
      %98 = sbr.rel (0) target = $region49
    $region48: #{tpu_custom_call.1} parent=1 // pred_region
      _
    $region49: #{tpu_custom_call.1} parent=1 // pred_fallthru
      _
    // Predicated region
    $region50: #{tpu_custom_call.1} parent=1 // pred_check
      _
    $region51: #{tpu_custom_call.1} parent=1 // pred_check_branch
      %100 = sbr.rel (0) target = $region53
    $region52: #{tpu_custom_call.1} parent=1 // pred_region
      _
    $region53: #{tpu_custom_call.1} parent=1 // pred_fallthru
      _
    // Predicated region
    $region54: #{tpu_custom_call.1} parent=1 // pred_check
      _
    $region55: #{tpu_custom_call.1} parent=1 // pred_check_branch
      %102 = sbr.rel (0) target = $region57
    $region56: #{tpu_custom_call.1} parent=1 // pred_region
      %104 = vsyncadd [#allocation11], 0
      %s106 = sshll.u32 %s13, 4
      %s107 = int_to_ptr.hbm [resolvable:$true] %s106
      %s108 = sshll.u32 [#allocation12], 4
      %s109 = int_to_ptr.vmem [resolvable:$true] %s108
      %111 = dma.hbm_to_vmem [thread:$0]  %s107, 128, %s109, [#allocation11]
    $region57: #{tpu_custom_call.1} parent=1 // pred_fallthru
      _
    // Predicated region
    $region58: #{tpu_custom_call.1} parent=1 // pred_check
      _
    $region59: #{tpu_custom_call.1} parent=1 // pred_check_branch
      %113 = sbr.rel (0) target = $region61
    $region60: #{tpu_custom_call.1} parent=1 // pred_region
      _
    $region61: #{tpu_custom_call.1} parent=1 // pred_fallthru
      _
    // Predicated region
    $region62: #{tpu_custom_call.1} parent=1 // pred_check
      _
    $region63: #{tpu_custom_call.1} parent=1 // pred_check_branch
      %115 = sbr.rel (0) target = $region65
    $region64: #{tpu_custom_call.1} parent=1 // pred_region
      _
    $region65: #{tpu_custom_call.1} parent=1 // pred_fallthru
      _
    // Predicated region
    $region66: #{tpu_custom_call.1} parent=1 // pred_check
      _
    $region67: #{tpu_custom_call.1} parent=1 // pred_check_branch
      %117 = sbr.rel (0) target = $region69
    $region68: #{tpu_custom_call.1} parent=1 // pred_region
      _
    $region69: #{tpu_custom_call.1} parent=1 // pred_fallthru
      _
    // Predicated region
    $region70: #{tpu_custom_call.1} parent=1 // pred_check
      _
    $region71: #{tpu_custom_call.1} parent=1 // pred_check_branch
      %119 = sbr.rel (0) target = $region73
    $region72: #{tpu_custom_call.1} parent=1 // pred_region
      _
    $region73: #{tpu_custom_call.1} parent=1 // pred_fallthru
      _
    // Predicated region
    $region74: #{tpu_custom_call.1} parent=1 // pred_check
      _
    $region75: #{tpu_custom_call.1} parent=1 // pred_check_branch
      %121 = sbr.rel (0) target = $region77
    $region76: #{tpu_custom_call.1} parent=1 // pred_region
      _
    $region77: #{tpu_custom_call.1} parent=1 // pred_fallthru
      _
    // Predicated region
    $region78: #{tpu_custom_call.1} parent=1 // pred_check
      _
    $region79: #{tpu_custom_call.1} parent=1 // pred_check_branch
      %123 = sbr.rel (0) target = $region81
    $region80: #{tpu_custom_call.1} parent=1 // pred_region
      _
    $region81: #{tpu_custom_call.1} parent=1 // pred_fallthru
      _
    // Predicated region
    $region82: #{tpu_custom_call.1} parent=1 // pred_check
      _
    $region83: #{tpu_custom_call.1} parent=1 // pred_check_branch
      %125 = sbr.rel (0) target = $region85
    $region84: #{tpu_custom_call.1} parent=1 // pred_region
      _
    $region85: #{tpu_custom_call.1} parent=1 // pred_fallthru
      _
    // Predicated region
    $region86: #{tpu_custom_call.1} parent=1 // pred_check
      _
    $region87: #{tpu_custom_call.1} parent=1 // pred_check_branch
      %127 = sbr.rel (0) target = $region89
    $region88: #{tpu_custom_call.1} parent=1 // pred_region
      _
    $region89: #{tpu_custom_call.1} parent=1 // pred_fallthru
      _
    // Predicated region
    $region90: #{tpu_custom_call.1} parent=1 // pred_check
      _
    $region91: #{tpu_custom_call.1} parent=1 // pred_check_branch
      %129 = sbr.rel (0) target = $region93
    $region92: #{tpu_custom_call.1} parent=1 // pred_region
      %131 = dma.done [#allocation5], 64
    $region93: #{tpu_custom_call.1} parent=1 // pred_fallthru
      _
    // Predicated region
    $region94: #{tpu_custom_call.1} parent=1 // pred_check
      _
    $region95: #{tpu_custom_call.1} parent=1 // pred_check_branch
      %133 = sbr.rel (0) target = $region97
    $region96: #{tpu_custom_call.1} parent=1 // pred_region
      %135 = dma.done [#allocation8], 64
    $region97: #{tpu_custom_call.1} parent=1 // pred_fallthru
      _
    // Predicated region
    $region98: #{tpu_custom_call.1} parent=1 // pred_check
      _
    $region99: #{tpu_custom_call.1} parent=1 // pred_check_branch
      %137 = sbr.rel (0) target = $region101
    $region100: #{tpu_custom_call.1} parent=1 // pred_region
      %139 = dma.done [#allocation8], 64
    $region101: #{tpu_custom_call.1} parent=1 // pred_fallthru
      _
    // Predicated region
    $region102: #{tpu_custom_call.1} parent=1 // pred_check
      _
    $region103: #{tpu_custom_call.1} parent=1 // pred_check_branch
      %141 = sbr.rel (0) target = $region105
    $region104: #{tpu_custom_call.1} parent=1 // pred_region
      %143 = dma.done [#allocation11], 64
    $region105: #{tpu_custom_call.1} parent=1 // pred_fallthru
      _
    // Predicated region
    $region106: #{tpu_custom_call.1} parent=1 // pred_check
      _
    $region107: #{tpu_custom_call.1} parent=1 // pred_check_branch
      %145 = sbr.rel (0) target = $region109
    $region108: #{tpu_custom_call.1} parent=1 // pred_region
      %147 = dma.done [#allocation11], 128
    $region109: #{tpu_custom_call.1} parent=1 // pred_fallthru
      _
    %v148 = vld [vmem:[%s4] sm:$0xff]
    %v149 = vld [vmem:[%s7] sm:$0xff]
    %v150 = vld [vmem:[%s7 + $0x8] sm:$0xff]
    %v151 = vld [vmem:[%s7 + $0x10] sm:$0xff]
    %v152 = vld [vmem:[%s7 + $0x18] sm:$0xff]
    %v153 = vld [vmem:[%s5] sm:$0x1]
    %v154 = vld [vmem:[%s8] sm:$0x1]
    %v155 = vld [vmem:[%s6] sm:$0xff]
    %v156 = vld [vmem:[%s6 + $0x8] sm:$0xff]
    %v157 = vld [vmem:[%s6 + $0x10] sm:$0xff]
    %v158 = vld [vmem:[%s6 + $0x18] sm:$0xff]
    %v159 = vld [vmem:[%s9] sm:$0xff]
    %v160 = vld [vmem:[%s9 + $0x8] sm:$0xff]
    %v161 = vld [vmem:[%s9 + $0x10] sm:$0xff]
    %v162 = vld [vmem:[%s9 + $0x18] sm:$0xff]
    %v163 = vld [vmem:[%s10] sm:$0xff]
    %v164 = vld [vmem:[%s10 + $0x8] sm:$0xff]
    %v165 = vld [vmem:[%s10 + $0x10] sm:$0xff]
    %v166 = vld [vmem:[%s10 + $0x18] sm:$0xff]
    %v167 = vld [vmem:[#allocation2] sm:$0x1]
    %v168 = vld [vmem:[%s12] sm:$0x1]
    %v169 = vld [vmem:[#allocation12] sm:$0xff]
    %v170 = vld [vmem:[%s16] sm:$0xff]
    %v171 = vld [vmem:[%s16 + $0x8] sm:$0xff]
    %v172 = vld [vmem:[%s16 + $0x10] sm:$0xff]
    %v173 = vld [vmem:[%s16 + $0x18] sm:$0xff]
    %v174 = vld [vmem:[%s14] sm:$0x1]
    %v175 = vld [vmem:[%s17] sm:$0x1]
    %v176 = vld [vmem:[%s15] sm:$0xff]
    %v177 = vld [vmem:[%s15 + $0x8] sm:$0xff]
    %v178 = vld [vmem:[%s15 + $0x10] sm:$0xff]
    %v179 = vld [vmem:[%s15 + $0x18] sm:$0xff]
    %v180 = vld [vmem:[%s18] sm:$0xff]
    %v181 = vld [vmem:[%s18 + $0x8] sm:$0xff]
    %v182 = vld [vmem:[%s18 + $0x10] sm:$0xff]
    %v183 = vld [vmem:[%s18 + $0x18] sm:$0xff]
    %v184 = vld [vmem:[%s19] sm:$0xff]
    %v185 = vld [vmem:[%s19 + $0x8] sm:$0xff]
    %v186 = vld [vmem:[%s19 + $0x10] sm:$0xff]
    %v187 = vld [vmem:[%s19 + $0x18] sm:$0xff]
    %v188 = vld [vmem:[#allocation3] sm:$0x1]
    %v189 = vld [vmem:[%s21] sm:$0x1]
    %v190 = vld [vmem:[#allocation9] sm:$0xf]
    %v191 = vld [vmem:[#allocation10] sm:$0xf]
    %v193 = vperm.slane %v174, 0
    %vm195 = vcmask 31744
    %v197 = vsel %vm195, %v190, 0
    %vm199 = vcmask 1043456
    %v201 = vsel %vm199, %v191, 0
    %203 = vmatpush.msra.mxu0 0.0
    %204 = vmatpush.msra.mxu0 0.0
    %205 = vmatpush.msra.mxu0 0.0
    %206 = vmatpush.msra.mxu0 0.0
    %207 = vmatpush.msra.mxu0 0.0
    %208 = vmatpush.msra.mxu0 0.0
    %209 = vmatpush.msra.mxu0 0.0
    %210 = vmatpush.msra.mxu0 0.0
    %211 = vmatpush.msra.mxu0 0.0
    %212 = vmatpush.msra.mxu0 0.0
    %213 = vmatpush.msra.mxu0 0.0
    %214 = vmatpush.msra.mxu0 0.0
    %215 = vmatpush.msra.mxu0 0.0
    %216 = vmatpush.msra.mxu0 0.0
    %217 = vmatpush.msra.mxu0 0.0
    %218 = vmatpush.msra.mxu0 %v201
    %219 = vmatmul.f32.gmra.mxu0 %v197
    %v220 = vpop.f32.mrf.mxu0
    %v221 = vadd.f32 %v193, %v220
    %222 = vdwg.mxu0
    %v224 = vperm.slane %v168, 0
    %v227 = vperm.slane %v189, 0
    %v229 = vld [vmem:[#allocation4] sm:$0xf]
    %v230 = vld [vmem:[#allocation7] sm:$0xf]
    %v232 = vperm.slane %v153, 0
    %vm234 = vcmask 64512
    %v236 = vsel %vm234, %v230, 0
    %238 = vmatpush.msra.mxu0 0.0
    %239 = vmatpush.msra.mxu0 0.0
    %240 = vmatpush.msra.mxu0 0.0
    %241 = vmatpush.msra.mxu0 0.0
    %242 = vmatpush.msra.mxu0 0.0
    %243 = vmatpush.msra.mxu0 0.0
    %244 = vmatpush.msra.mxu0 0.0
    %245 = vmatpush.msra.mxu0 0.0
    %246 = vmatpush.msra.mxu0 0.0
    %247 = vmatpush.msra.mxu0 0.0
    %248 = vmatpush.msra.mxu0 0.0
    %249 = vmatpush.msra.mxu0 0.0
    %250 = vmatpush.msra.mxu0 0.0
    %251 = vmatpush.msra.mxu0 0.0
    %252 = vmatpush.msra.mxu0 0.0
    %253 = vmatpush.msra.mxu0 %v148
    %254 = vmatmul.f32.gmra.mxu0 %v236
    %v255 = vpop.f32.mrf.mxu0
    %v256 = vadd.f32 %v232, %v255
    %257 = vdwg.mxu0
    %v258 = vtanh.pop %v256
    %v260 = vperm.slane %v154, 0
    %vm262 = vcmask 261120
    %v264 = vsel %vm262, %v258, 0
    %266 = vmatpush.msra.mxu0 0.0
    %267 = vmatpush.msra.mxu0 0.0
    %268 = vmatpush.msra.mxu0 0.0
    %269 = vmatpush.msra.mxu0 0.0
    %270 = vmatpush.msra.mxu0 0.0
    %271 = vmatpush.msra.mxu0 0.0
    %272 = vmatpush.msra.mxu0 0.0
    %273 = vmatpush.msra.mxu0 0.0
    %274 = vmatpush.msra.mxu0 0.0
    %275 = vmatpush.msra.mxu0 0.0
    %276 = vmatpush.msra.mxu0 0.0
    %277 = vmatpush.msra.mxu0 0.0
    %278 = vmatpush.msra.mxu0 %v152
    %279 = vmatpush.msra.mxu0 %v151
    %280 = vmatpush.msra.mxu0 %v150
    %281 = vmatpush.msra.mxu0 %v149
    %282 = vmatmul.f32.gmra.mxu0 %v264
    %v283 = vpop.f32.mrf.mxu0
    %v284 = vadd.f32 %v260, %v283
    %285 = vdwg.mxu0
    %v286 = vtanh.pop %v284
    %v287 = vmul.f32 %v286, %v286
    %v288 = vsub.f32 1.0, %v287
    %v289 = vmul.f32 %v288, %v224
    %v291 = vsel %vm262, %v289, 0
    %293 = vmatpush.msra.mxu0 0.0
    %294 = vmatpush.msra.mxu0 0.0
    %295 = vmatpush.msra.mxu0 0.0
    %296 = vmatpush.msra.mxu0 0.0
    %297 = vmatpush.msra.mxu0 0.0
    %298 = vmatpush.msra.mxu0 0.0
    %299 = vmatpush.msra.mxu0 0.0
    %300 = vmatpush.msra.mxu0 0.0
    %301 = vmatpush.msra.mxu0 0.0
    %302 = vmatpush.msra.mxu0 0.0
    %303 = vmatpush.msra.mxu0 0.0
    %304 = vmatpush.msra.mxu0 0.0
    %305 = vmatpush.msra.mxu0 %v162
    %306 = vmatpush.msra.mxu0 %v161
    %307 = vmatpush.msra.mxu0 %v160
    %308 = vmatpush.msra.mxu0 %v159
    %309 = vmatmul.f32.gmra.mxu0 %v291
    %v310 = vpop.f32.mrf.mxu0
    %v311 = vadd.f32 0.0, %v310
    %312 = vdwg.mxu0
    %v313 = vmul.f32 %v258, %v258
    %v314 = vsub.f32 1.0, %v313
    %v315 = vmul.f32 %v314, %v311
    %v317 = vsel %vm262, %v315, 0
    %319 = vmatpush.msra.mxu0 0.0
    %320 = vmatpush.msra.mxu0 0.0
    %321 = vmatpush.msra.mxu0 0.0
    %322 = vmatpush.msra.mxu0 0.0
    %323 = vmatpush.msra.mxu0 0.0
    %324 = vmatpush.msra.mxu0 0.0
    %325 = vmatpush.msra.mxu0 0.0
    %326 = vmatpush.msra.mxu0 0.0
    %327 = vmatpush.msra.mxu0 0.0
    %328 = vmatpush.msra.mxu0 0.0
    %329 = vmatpush.msra.mxu0 0.0
    %330 = vmatpush.msra.mxu0 0.0
    %331 = vmatpush.msra.mxu0 %v158
    %332 = vmatpush.msra.mxu0 %v157
    %333 = vmatpush.msra.mxu0 %v156
    %334 = vmatpush.msra.mxu0 %v155
    %335 = vmatmul.f32.gmra.mxu0 %v317
    %v336 = vpop.f32.mrf.mxu0
    %v337 = vadd.f32 0.0, %v336
    %338 = vdwg.mxu0
    %v339 = vmul.f32 %v337, 0.05
    %v340 = vadd.f32 %v229, %v339
    %v342 = vsel %vm234, %v340, 0
    %344 = vmatpush.msra.mxu0 0.0
    %345 = vmatpush.msra.mxu0 0.0
    %346 = vmatpush.msra.mxu0 0.0
    %347 = vmatpush.msra.mxu0 0.0
    %348 = vmatpush.msra.mxu0 0.0
    %349 = vmatpush.msra.mxu0 0.0
    %350 = vmatpush.msra.mxu0 0.0
    %351 = vmatpush.msra.mxu0 0.0
    %352 = vmatpush.msra.mxu0 0.0
    %353 = vmatpush.msra.mxu0 0.0
    %354 = vmatpush.msra.mxu0 0.0
    %355 = vmatpush.msra.mxu0 0.0
    %356 = vmatpush.msra.mxu0 0.0
    %357 = vmatpush.msra.mxu0 0.0
    %358 = vmatpush.msra.mxu0 0.0
    %359 = vmatpush.msra.mxu0 %v169
    %360 = vmatmul.f32.gmra.mxu0 %v342
    %v361 = vpop.f32.mrf.mxu0
    %v362 = vadd.f32 %v221, %v361
    %363 = vdwg.mxu0
    %v364 = vtanh.pop %v362
    %v366 = vperm.slane %v175, 0
    %v369 = vsel %vm262, %v364, 0
    %371 = vmatpush.msra.mxu0 0.0
    %372 = vmatpush.msra.mxu0 0.0
    %373 = vmatpush.msra.mxu0 0.0
    %374 = vmatpush.msra.mxu0 0.0
    %375 = vmatpush.msra.mxu0 0.0
    %376 = vmatpush.msra.mxu0 0.0
    %377 = vmatpush.msra.mxu0 0.0
    %378 = vmatpush.msra.mxu0 0.0
    %379 = vmatpush.msra.mxu0 0.0
    %380 = vmatpush.msra.mxu0 0.0
    %381 = vmatpush.msra.mxu0 0.0
    %382 = vmatpush.msra.mxu0 0.0
    %383 = vmatpush.msra.mxu0 %v173
    %384 = vmatpush.msra.mxu0 %v172
    %385 = vmatpush.msra.mxu0 %v171
    %386 = vmatpush.msra.mxu0 %v170
    %387 = vmatmul.f32.gmra.mxu0 %v369
    %v388 = vpop.f32.mrf.mxu0
    %v389 = vadd.f32 %v366, %v388
    %390 = vdwg.mxu0
    %v391 = vtanh.pop %v389
    %v392 = vmul.f32 %v391, %v391
    %v393 = vsub.f32 1.0, %v392
    %v394 = vmul.f32 %v393, %v227
    %v396 = vsel %vm262, %v394, 0
    %398 = vmatpush.msra.mxu0 0.0
    %399 = vmatpush.msra.mxu0 0.0
    %400 = vmatpush.msra.mxu0 0.0
    %401 = vmatpush.msra.mxu0 0.0
    %402 = vmatpush.msra.mxu0 0.0
    %403 = vmatpush.msra.mxu0 0.0
    %404 = vmatpush.msra.mxu0 0.0
    %405 = vmatpush.msra.mxu0 0.0
    %406 = vmatpush.msra.mxu0 0.0
    %407 = vmatpush.msra.mxu0 0.0
    %408 = vmatpush.msra.mxu0 0.0
    %409 = vmatpush.msra.mxu0 0.0
    %410 = vmatpush.msra.mxu0 %v183
    %411 = vmatpush.msra.mxu0 %v182
    %412 = vmatpush.msra.mxu0 %v181
    %413 = vmatpush.msra.mxu0 %v180
    %414 = vmatmul.f32.gmra.mxu0 %v396
    %v415 = vpop.f32.mrf.mxu0
    %v416 = vadd.f32 0.0, %v415
    %417 = vdwg.mxu0
    %v418 = vmul.f32 %v364, %v364
    %v419 = vsub.f32 1.0, %v418
    %v420 = vmul.f32 %v419, %v416
    %v422 = vsel %vm262, %v420, 0
    %424 = vmatpush.msra.mxu0 0.0
    %425 = vmatpush.msra.mxu0 0.0
    %426 = vmatpush.msra.mxu0 0.0
    %427 = vmatpush.msra.mxu0 0.0
    %428 = vmatpush.msra.mxu0 0.0
    %429 = vmatpush.msra.mxu0 0.0
    %430 = vmatpush.msra.mxu0 0.0
    %431 = vmatpush.msra.mxu0 0.0
    %432 = vmatpush.msra.mxu0 0.0
    %433 = vmatpush.msra.mxu0 0.0
    %434 = vmatpush.msra.mxu0 0.0
    %435 = vmatpush.msra.mxu0 0.0
    %436 = vmatpush.msra.mxu0 %v179
    %437 = vmatpush.msra.mxu0 %v178
    %438 = vmatpush.msra.mxu0 %v177
    %439 = vmatpush.msra.mxu0 %v176
    %440 = vmatmul.f32.gmra.mxu0 %v422
    %v441 = vpop.f32.mrf.mxu0
    %v442 = vadd.f32 0.0, %v441
    %443 = vdwg.mxu0
    %v444 = vsub.f32 0.0, %v442
    %v445 = vmul.f32 %v444, 0.1
    %v446 = vadd.f32 %v230, %v445
    %v448 = vsel %vm234, %v446, 0
    %450 = vmatpush.msra.mxu0 0.0
    %451 = vmatpush.msra.mxu0 0.0
    %452 = vmatpush.msra.mxu0 0.0
    %453 = vmatpush.msra.mxu0 0.0
    %454 = vmatpush.msra.mxu0 0.0
    %455 = vmatpush.msra.mxu0 0.0
    %456 = vmatpush.msra.mxu0 0.0
    %457 = vmatpush.msra.mxu0 0.0
    %458 = vmatpush.msra.mxu0 0.0
    %459 = vmatpush.msra.mxu0 0.0
    %460 = vmatpush.msra.mxu0 0.0
    %461 = vmatpush.msra.mxu0 0.0
    %462 = vmatpush.msra.mxu0 0.0
    %463 = vmatpush.msra.mxu0 0.0
    %464 = vmatpush.msra.mxu0 0.0
    %465 = vmatpush.msra.mxu0 %v148
    %466 = vmatmul.f32.gmra.mxu0 %v448
    %v467 = vpop.f32.mrf.mxu0
    %v468 = vadd.f32 %v232, %v467
    %469 = vdwg.mxu0
    %v470 = vtanh.pop %v468
    %v472 = vsel %vm262, %v470, 0
    %474 = vmatpush.msra.mxu0 0.0
    %475 = vmatpush.msra.mxu0 0.0
    %476 = vmatpush.msra.mxu0 0.0
    %477 = vmatpush.msra.mxu0 0.0
    %478 = vmatpush.msra.mxu0 0.0
    %479 = vmatpush.msra.mxu0 0.0
    %480 = vmatpush.msra.mxu0 0.0
    %481 = vmatpush.msra.mxu0 0.0
    %482 = vmatpush.msra.mxu0 0.0
    %483 = vmatpush.msra.mxu0 0.0
    %484 = vmatpush.msra.mxu0 0.0
    %485 = vmatpush.msra.mxu0 0.0
    %486 = vmatpush.msra.mxu0 %v152
    %487 = vmatpush.msra.mxu0 %v151
    %488 = vmatpush.msra.mxu0 %v150
    %489 = vmatpush.msra.mxu0 %v149
    %490 = vmatmul.f32.gmra.mxu0 %v472
    %v491 = vpop.f32.mrf.mxu0
    %v492 = vadd.f32 %v260, %v491
    %493 = vdwg.mxu0
    %v494 = vtanh.pop %v492
    %v496 = vperm.slane %v167, 0
    %v499 = vsel %vm262, %v494, 0
    %501 = vmatpush.msra.mxu0 0.0
    %502 = vmatpush.msra.mxu0 0.0
    %503 = vmatpush.msra.mxu0 0.0
    %504 = vmatpush.msra.mxu0 0.0
    %505 = vmatpush.msra.mxu0 0.0
    %506 = vmatpush.msra.mxu0 0.0
    %507 = vmatpush.msra.mxu0 0.0
    %508 = vmatpush.msra.mxu0 0.0
    %509 = vmatpush.msra.mxu0 0.0
    %510 = vmatpush.msra.mxu0 0.0
    %511 = vmatpush.msra.mxu0 0.0
    %512 = vmatpush.msra.mxu0 0.0
    %513 = vmatpush.msra.mxu0 %v166
    %514 = vmatpush.msra.mxu0 %v165
    %515 = vmatpush.msra.mxu0 %v164
    %516 = vmatpush.msra.mxu0 %v163
    %517 = vmatmul.f32.gmra.mxu0 %v499
    %v518 = vpop.f32.mrf.mxu0
    %v519 = vadd.f32 %v496, %v518
    %520 = vdwg.mxu0
    %v521 = vmul.f32 %v494, %v494
    %v522 = vsub.f32 1.0, %v521
    %v523 = vmul.f32 %v522, %v224
    %v525 = vsel %vm262, %v523, 0
    %527 = vmatpush.msra.mxu0 0.0
    %528 = vmatpush.msra.mxu0 0.0
    %529 = vmatpush.msra.mxu0 0.0
    %530 = vmatpush.msra.mxu0 0.0
    %531 = vmatpush.msra.mxu0 0.0
    %532 = vmatpush.msra.mxu0 0.0
    %533 = vmatpush.msra.mxu0 0.0
    %534 = vmatpush.msra.mxu0 0.0
    %535 = vmatpush.msra.mxu0 0.0
    %536 = vmatpush.msra.mxu0 0.0
    %537 = vmatpush.msra.mxu0 0.0
    %538 = vmatpush.msra.mxu0 0.0
    %539 = vmatpush.msra.mxu0 %v162
    %540 = vmatpush.msra.mxu0 %v161
    %541 = vmatpush.msra.mxu0 %v160
    %542 = vmatpush.msra.mxu0 %v159
    %543 = vmatmul.f32.gmra.mxu0 %v525
    %v544 = vpop.f32.mrf.mxu0
    %v545 = vadd.f32 0.0, %v544
    %546 = vdwg.mxu0
    %v547 = vmul.f32 %v470, %v470
    %v548 = vsub.f32 1.0, %v547
    %v549 = vmul.f32 %v548, %v545
    %v551 = vsel %vm262, %v549, 0
    %553 = vmatpush.msra.mxu0 0.0
    %554 = vmatpush.msra.mxu0 0.0
    %555 = vmatpush.msra.mxu0 0.0
    %556 = vmatpush.msra.mxu0 0.0
    %557 = vmatpush.msra.mxu0 0.0
    %558 = vmatpush.msra.mxu0 0.0
    %559 = vmatpush.msra.mxu0 0.0
    %560 = vmatpush.msra.mxu0 0.0
    %561 = vmatpush.msra.mxu0 0.0
    %562 = vmatpush.msra.mxu0 0.0
    %563 = vmatpush.msra.mxu0 0.0
    %564 = vmatpush.msra.mxu0 0.0
    %565 = vmatpush.msra.mxu0 %v158
    %566 = vmatpush.msra.mxu0 %v157
    %567 = vmatpush.msra.mxu0 %v156
    %568 = vmatpush.msra.mxu0 %v155
    %569 = vmatmul.f32.gmra.mxu0 %v551
    %v570 = vpop.f32.mrf.mxu0
    %v571 = vadd.f32 0.0, %v570
    %572 = vdwg.mxu0
    %v573 = vmul.f32 %v571, 0.05
    %v574 = vadd.f32 %v340, %v573
    %v576 = vsel %vm234, %v574, 0
    %578 = vmatpush.msra.mxu0 0.0
    %579 = vmatpush.msra.mxu0 0.0
    %580 = vmatpush.msra.mxu0 0.0
    %581 = vmatpush.msra.mxu0 0.0
    %582 = vmatpush.msra.mxu0 0.0
    %583 = vmatpush.msra.mxu0 0.0
    %584 = vmatpush.msra.mxu0 0.0
    %585 = vmatpush.msra.mxu0 0.0
    %586 = vmatpush.msra.mxu0 0.0
    %587 = vmatpush.msra.mxu0 0.0
    %588 = vmatpush.msra.mxu0 0.0
    %589 = vmatpush.msra.mxu0 0.0
    %590 = vmatpush.msra.mxu0 0.0
    %591 = vmatpush.msra.mxu0 0.0
    %592 = vmatpush.msra.mxu0 0.0
    %593 = vmatpush.msra.mxu0 %v169
    %594 = vmatmul.f32.gmra.mxu0 %v576
    %v595 = vpop.f32.mrf.mxu0
    %v596 = vadd.f32 %v221, %v595
    %597 = vdwg.mxu0
    %v598 = vtanh.pop %v596
    %v600 = vsel %vm262, %v598, 0
    %602 = vmatpush.msra.mxu0 0.0
    %603 = vmatpush.msra.mxu0 0.0
    %604 = vmatpush.msra.mxu0 0.0
    %605 = vmatpush.msra.mxu0 0.0
    %606 = vmatpush.msra.mxu0 0.0
    %607 = vmatpush.msra.mxu0 0.0
    %608 = vmatpush.msra.mxu0 0.0
    %609 = vmatpush.msra.mxu0 0.0
    %610 = vmatpush.msra.mxu0 0.0
    %611 = vmatpush.msra.mxu0 0.0
    %612 = vmatpush.msra.mxu0 0.0
    %613 = vmatpush.msra.mxu0 0.0
    %614 = vmatpush.msra.mxu0 %v173
    %615 = vmatpush.msra.mxu0 %v172
    %616 = vmatpush.msra.mxu0 %v171
    %617 = vmatpush.msra.mxu0 %v170
    %618 = vmatmul.f32.gmra.mxu0 %v600
    %v619 = vpop.f32.mrf.mxu0
    %v620 = vadd.f32 %v366, %v619
    %621 = vdwg.mxu0
    %v622 = vtanh.pop %v620
    %v624 = vperm.slane %v188, 0
    %v627 = vsel %vm262, %v622, 0
    %629 = vmatpush.msra.mxu0 0.0
    %630 = vmatpush.msra.mxu0 0.0
    %631 = vmatpush.msra.mxu0 0.0
    %632 = vmatpush.msra.mxu0 0.0
    %633 = vmatpush.msra.mxu0 0.0
    %634 = vmatpush.msra.mxu0 0.0
    %635 = vmatpush.msra.mxu0 0.0
    %636 = vmatpush.msra.mxu0 0.0
    %637 = vmatpush.msra.mxu0 0.0
    %638 = vmatpush.msra.mxu0 0.0
    %639 = vmatpush.msra.mxu0 0.0
    %640 = vmatpush.msra.mxu0 0.0
    %641 = vmatpush.msra.mxu0 %v187
    %642 = vmatpush.msra.mxu0 %v186
    %643 = vmatpush.msra.mxu0 %v185
    %644 = vmatpush.msra.mxu0 %v184
    %645 = vmatmul.f32.gmra.mxu0 %v627
    %v646 = vpop.f32.mrf.mxu0
    %v647 = vadd.f32 %v624, %v646
    %648 = vdwg.mxu0
    %v649 = vadd.f32 %v519, %v647
    %vm650 = vcmask 3072
    %651 = vst.msk [vmem:[%s22] sm:$0xf] %vm650, %v649
    %vm652 = vcmask 60416
    %653 = vst.msk [vmem:[#allocation13] sm:$0xf] %vm652, %v574
    %654 = vst.msk [vmem:[#allocation14] sm:$0xf] %vm652, %v446
    %v655 = vadd.f32 %v574, %v573
    %v657 = vsel %vm234, %v655, 0
    %659 = vmatpush.msra.mxu0 0.0
    %660 = vmatpush.msra.mxu0 0.0
    %661 = vmatpush.msra.mxu0 0.0
    %662 = vmatpush.msra.mxu0 0.0
    %663 = vmatpush.msra.mxu0 0.0
    %664 = vmatpush.msra.mxu0 0.0
    %665 = vmatpush.msra.mxu0 0.0
    %666 = vmatpush.msra.mxu0 0.0
    %667 = vmatpush.msra.mxu0 0.0
    %668 = vmatpush.msra.mxu0 0.0
    %669 = vmatpush.msra.mxu0 0.0
    %670 = vmatpush.msra.mxu0 0.0
    %671 = vmatpush.msra.mxu0 0.0
    %672 = vmatpush.msra.mxu0 0.0
    %673 = vmatpush.msra.mxu0 0.0
    %674 = vmatpush.msra.mxu0 %v169
    %675 = vmatmul.f32.gmra.mxu0 %v657
    %v676 = vpop.f32.mrf.mxu0
    %v677 = vadd.f32 %v221, %v676
    %678 = vdwg.mxu0
    %v679 = vtanh.pop %v677
    %v681 = vsel %vm262, %v679, 0
    %683 = vmatpush.msra.mxu0 0.0
    %684 = vmatpush.msra.mxu0 0.0
    %685 = vmatpush.msra.mxu0 0.0
    %686 = vmatpush.msra.mxu0 0.0
    %687 = vmatpush.msra.mxu0 0.0
    %688 = vmatpush.msra.mxu0 0.0
    %689 = vmatpush.msra.mxu0 0.0
    %690 = vmatpush.msra.mxu0 0.0
    %691 = vmatpush.msra.mxu0 0.0
    %692 = vmatpush.msra.mxu0 0.0
    %693 = vmatpush.msra.mxu0 0.0
    %694 = vmatpush.msra.mxu0 0.0
    %695 = vmatpush.msra.mxu0 %v173
    %696 = vmatpush.msra.mxu0 %v172
    %697 = vmatpush.msra.mxu0 %v171
    %698 = vmatpush.msra.mxu0 %v170
    %699 = vmatmul.f32.gmra.mxu0 %v681
    %v700 = vpop.f32.mrf.mxu0
    %v701 = vadd.f32 %v366, %v700
    %702 = vdwg.mxu0
    %v703 = vtanh.pop %v701
    %v704 = vmul.f32 %v703, %v703
    %v705 = vsub.f32 1.0, %v704
    %v706 = vmul.f32 %v705, %v227
    %v708 = vsel %vm262, %v706, 0
    %710 = vmatpush.msra.mxu0 0.0
    %711 = vmatpush.msra.mxu0 0.0
    %712 = vmatpush.msra.mxu0 0.0
    %713 = vmatpush.msra.mxu0 0.0
    %714 = vmatpush.msra.mxu0 0.0
    %715 = vmatpush.msra.mxu0 0.0
    %716 = vmatpush.msra.mxu0 0.0
    %717 = vmatpush.msra.mxu0 0.0
    %718 = vmatpush.msra.mxu0 0.0
    %719 = vmatpush.msra.mxu0 0.0
    %720 = vmatpush.msra.mxu0 0.0
    %721 = vmatpush.msra.mxu0 0.0
    %722 = vmatpush.msra.mxu0 %v183
    %723 = vmatpush.msra.mxu0 %v182
    %724 = vmatpush.msra.mxu0 %v181
    %725 = vmatpush.msra.mxu0 %v180
    %726 = vmatmul.f32.gmra.mxu0 %v708
    %v727 = vpop.f32.mrf.mxu0
    %v728 = vadd.f32 0.0, %v727
    %729 = vdwg.mxu0
    %v730 = vmul.f32 %v679, %v679
    %v731 = vsub.f32 1.0, %v730
    %v732 = vmul.f32 %v731, %v728
    %v734 = vsel %vm262, %v732, 0
    %736 = vmatpush.msra.mxu0 0.0
    %737 = vmatpush.msra.mxu0 0.0
    %738 = vmatpush.msra.mxu0 0.0
    %739 = vmatpush.msra.mxu0 0.0
    %740 = vmatpush.msra.mxu0 0.0
    %741 = vmatpush.msra.mxu0 0.0
    %742 = vmatpush.msra.mxu0 0.0
    %743 = vmatpush.msra.mxu0 0.0
    %744 = vmatpush.msra.mxu0 0.0
    %745 = vmatpush.msra.mxu0 0.0
    %746 = vmatpush.msra.mxu0 0.0
    %747 = vmatpush.msra.mxu0 0.0
    %748 = vmatpush.msra.mxu0 %v179
    %749 = vmatpush.msra.mxu0 %v178
    %750 = vmatpush.msra.mxu0 %v177
    %751 = vmatpush.msra.mxu0 %v176
    %752 = vmatmul.f32.gmra.mxu0 %v734
    %v753 = vpop.f32.mrf.mxu0
    %v754 = vadd.f32 0.0, %v753
    %755 = vdwg.mxu0
    %v756 = vsub.f32 0.0, %v754
    %v757 = vmul.f32 %v756, 0.1
    %v758 = vadd.f32 %v446, %v757
    %v760 = vsel %vm234, %v758, 0
    %762 = vmatpush.msra.mxu0 0.0
    %763 = vmatpush.msra.mxu0 0.0
    %764 = vmatpush.msra.mxu0 0.0
    %765 = vmatpush.msra.mxu0 0.0
    %766 = vmatpush.msra.mxu0 0.0
    %767 = vmatpush.msra.mxu0 0.0
    %768 = vmatpush.msra.mxu0 0.0
    %769 = vmatpush.msra.mxu0 0.0
    %770 = vmatpush.msra.mxu0 0.0
    %771 = vmatpush.msra.mxu0 0.0
    %772 = vmatpush.msra.mxu0 0.0
    %773 = vmatpush.msra.mxu0 0.0
    %774 = vmatpush.msra.mxu0 0.0
    %775 = vmatpush.msra.mxu0 0.0
    %776 = vmatpush.msra.mxu0 0.0
    %777 = vmatpush.msra.mxu0 %v148
    %778 = vmatmul.f32.gmra.mxu0 %v760
    %v779 = vpop.f32.mrf.mxu0
    %v780 = vadd.f32 %v232, %v779
    %781 = vdwg.mxu0
    %v782 = vtanh.pop %v780
    %v784 = vsel %vm262, %v782, 0
    %786 = vmatpush.msra.mxu0 0.0
    %787 = vmatpush.msra.mxu0 0.0
    %788 = vmatpush.msra.mxu0 0.0
    %789 = vmatpush.msra.mxu0 0.0
    %790 = vmatpush.msra.mxu0 0.0
    %791 = vmatpush.msra.mxu0 0.0
    %792 = vmatpush.msra.mxu0 0.0
    %793 = vmatpush.msra.mxu0 0.0
    %794 = vmatpush.msra.mxu0 0.0
    %795 = vmatpush.msra.mxu0 0.0
    %796 = vmatpush.msra.mxu0 0.0
    %797 = vmatpush.msra.mxu0 0.0
    %798 = vmatpush.msra.mxu0 %v152
    %799 = vmatpush.msra.mxu0 %v151
    %800 = vmatpush.msra.mxu0 %v150
    %801 = vmatpush.msra.mxu0 %v149
    %802 = vmatmul.f32.gmra.mxu0 %v784
    %v803 = vpop.f32.mrf.mxu0
    %v804 = vadd.f32 %v260, %v803
    %805 = vdwg.mxu0
    %v806 = vtanh.pop %v804
    %v808 = vsel %vm262, %v806, 0
    %810 = vmatpush.msra.mxu0 0.0
    %811 = vmatpush.msra.mxu0 0.0
    %812 = vmatpush.msra.mxu0 0.0
    %813 = vmatpush.msra.mxu0 0.0
    %814 = vmatpush.msra.mxu0 0.0
    %815 = vmatpush.msra.mxu0 0.0
    %816 = vmatpush.msra.mxu0 0.0
    %817 = vmatpush.msra.mxu0 0.0
    %818 = vmatpush.msra.mxu0 0.0
    %819 = vmatpush.msra.mxu0 0.0
    %820 = vmatpush.msra.mxu0 0.0
    %821 = vmatpush.msra.mxu0 0.0
    %822 = vmatpush.msra.mxu0 %v166
    %823 = vmatpush.msra.mxu0 %v165
    %824 = vmatpush.msra.mxu0 %v164
    %825 = vmatpush.msra.mxu0 %v163
    %826 = vmatmul.f32.gmra.mxu0 %v808
    %v827 = vpop.f32.mrf.mxu0
    %v828 = vadd.f32 %v496, %v827
    %829 = vdwg.mxu0
    %v830 = vmul.f32 %v806, %v806
    %v831 = vsub.f32 1.0, %v830
    %v832 = vmul.f32 %v831, %v224
    %v834 = vsel %vm262, %v832, 0
    %836 = vmatpush.msra.mxu0 0.0
    %837 = vmatpush.msra.mxu0 0.0
    %838 = vmatpush.msra.mxu0 0.0
    %839 = vmatpush.msra.mxu0 0.0
    %840 = vmatpush.msra.mxu0 0.0
    %841 = vmatpush.msra.mxu0 0.0
    %842 = vmatpush.msra.mxu0 0.0
    %843 = vmatpush.msra.mxu0 0.0
    %844 = vmatpush.msra.mxu0 0.0
    %845 = vmatpush.msra.mxu0 0.0
    %846 = vmatpush.msra.mxu0 0.0
    %847 = vmatpush.msra.mxu0 0.0
    %848 = vmatpush.msra.mxu0 %v162
    %849 = vmatpush.msra.mxu0 %v161
    %850 = vmatpush.msra.mxu0 %v160
    %851 = vmatpush.msra.mxu0 %v159
    %852 = vmatmul.f32.gmra.mxu0 %v834
    %v853 = vpop.f32.mrf.mxu0
    %v854 = vadd.f32 0.0, %v853
    %855 = vdwg.mxu0
    %v856 = vmul.f32 %v782, %v782
    %v857 = vsub.f32 1.0, %v856
    %v858 = vmul.f32 %v857, %v854
    %v860 = vsel %vm262, %v858, 0
    %862 = vmatpush.msra.mxu0 0.0
    %863 = vmatpush.msra.mxu0 0.0
    %864 = vmatpush.msra.mxu0 0.0
    %865 = vmatpush.msra.mxu0 0.0
    %866 = vmatpush.msra.mxu0 0.0
    %867 = vmatpush.msra.mxu0 0.0
    %868 = vmatpush.msra.mxu0 0.0
    %869 = vmatpush.msra.mxu0 0.0
    %870 = vmatpush.msra.mxu0 0.0
    %871 = vmatpush.msra.mxu0 0.0
    %872 = vmatpush.msra.mxu0 0.0
    %873 = vmatpush.msra.mxu0 0.0
    %874 = vmatpush.msra.mxu0 %v158
    %875 = vmatpush.msra.mxu0 %v157
    %876 = vmatpush.msra.mxu0 %v156
    %877 = vmatpush.msra.mxu0 %v155
    %878 = vmatmul.f32.gmra.mxu0 %v860
    %v879 = vpop.f32.mrf.mxu0
    %v880 = vadd.f32 0.0, %v879
    %881 = vdwg.mxu0
    %v882 = vmul.f32 %v880, 0.05
    %v883 = vadd.f32 %v655, %v882
    %v885 = vsel %vm234, %v883, 0
    %887 = vmatpush.msra.mxu0 0.0
    %888 = vmatpush.msra.mxu0 0.0
    %889 = vmatpush.msra.mxu0 0.0
    %890 = vmatpush.msra.mxu0 0.0
    %891 = vmatpush.msra.mxu0 0.0
    %892 = vmatpush.msra.mxu0 0.0
    %893 = vmatpush.msra.mxu0 0.0
    %894 = vmatpush.msra.mxu0 0.0
    %895 = vmatpush.msra.mxu0 0.0
    %896 = vmatpush.msra.mxu0 0.0
    %897 = vmatpush.msra.mxu0 0.0
    %898 = vmatpush.msra.mxu0 0.0
    %899 = vmatpush.msra.mxu0 0.0
    %900 = vmatpush.msra.mxu0 0.0
    %901 = vmatpush.msra.mxu0 0.0
    %902 = vmatpush.msra.mxu0 %v169
    %903 = vmatmul.f32.gmra.mxu0 %v885
    %v904 = vpop.f32.mrf.mxu0
    %v905 = vadd.f32 %v221, %v904
    %906 = vdwg.mxu0
    %v907 = vtanh.pop %v905
    %v909 = vsel %vm262, %v907, 0
    %911 = vmatpush.msra.mxu0 0.0
    %912 = vmatpush.msra.mxu0 0.0
    %913 = vmatpush.msra.mxu0 0.0
    %914 = vmatpush.msra.mxu0 0.0
    %915 = vmatpush.msra.mxu0 0.0
    %916 = vmatpush.msra.mxu0 0.0
    %917 = vmatpush.msra.mxu0 0.0
    %918 = vmatpush.msra.mxu0 0.0
    %919 = vmatpush.msra.mxu0 0.0
    %920 = vmatpush.msra.mxu0 0.0
    %921 = vmatpush.msra.mxu0 0.0
    %922 = vmatpush.msra.mxu0 0.0
    %923 = vmatpush.msra.mxu0 %v173
    %924 = vmatpush.msra.mxu0 %v172
    %925 = vmatpush.msra.mxu0 %v171
    %926 = vmatpush.msra.mxu0 %v170
    %927 = vmatmul.f32.gmra.mxu0 %v909
    %v928 = vpop.f32.mrf.mxu0
    %v929 = vadd.f32 %v366, %v928
    %930 = vdwg.mxu0
    %v931 = vtanh.pop %v929
    %v933 = vsel %vm262, %v931, 0
    %935 = vmatpush.msra.mxu0 0.0
    %936 = vmatpush.msra.mxu0 0.0
    %937 = vmatpush.msra.mxu0 0.0
    %938 = vmatpush.msra.mxu0 0.0
    %939 = vmatpush.msra.mxu0 0.0
    %940 = vmatpush.msra.mxu0 0.0
    %941 = vmatpush.msra.mxu0 0.0
    %942 = vmatpush.msra.mxu0 0.0
    %943 = vmatpush.msra.mxu0 0.0
    %944 = vmatpush.msra.mxu0 0.0
    %945 = vmatpush.msra.mxu0 0.0
    %946 = vmatpush.msra.mxu0 0.0
    %947 = vmatpush.msra.mxu0 %v187
    %948 = vmatpush.msra.mxu0 %v186
    %949 = vmatpush.msra.mxu0 %v185
    %950 = vmatpush.msra.mxu0 %v184
    %951 = vmatmul.f32.gmra.mxu0 %v933
    %v952 = vpop.f32.mrf.mxu0
    %v953 = vadd.f32 %v624, %v952
    %954 = vdwg.mxu0
    %v955 = vadd.f32 %v828, %v953
    %s956 = scalar_lea.vmem %s22, 4
    %957 = vst.msk [vmem:[%s956] sm:$0xf] %vm650, %v955
    %s958 = scalar_lea.vmem [#allocation13], 4
    %959 = vst.msk [vmem:[%s958] sm:$0xf] %vm652, %v883
    %s960 = scalar_lea.vmem [#allocation14], 4
    %961 = vst.msk [vmem:[%s960] sm:$0xf] %vm652, %v758
    %v962 = vadd.f32 %v883, %v882
    %v964 = vsel %vm234, %v962, 0
    %966 = vmatpush.msra.mxu0 0.0
    %967 = vmatpush.msra.mxu0 0.0
    %968 = vmatpush.msra.mxu0 0.0
    %969 = vmatpush.msra.mxu0 0.0
    %970 = vmatpush.msra.mxu0 0.0
    %971 = vmatpush.msra.mxu0 0.0
    %972 = vmatpush.msra.mxu0 0.0
    %973 = vmatpush.msra.mxu0 0.0
    %974 = vmatpush.msra.mxu0 0.0
    %975 = vmatpush.msra.mxu0 0.0
    %976 = vmatpush.msra.mxu0 0.0
    %977 = vmatpush.msra.mxu0 0.0
    %978 = vmatpush.msra.mxu0 0.0
    %979 = vmatpush.msra.mxu0 0.0
    %980 = vmatpush.msra.mxu0 0.0
    %981 = vmatpush.msra.mxu0 %v169
    %982 = vmatmul.f32.gmra.mxu0 %v964
    %v983 = vpop.f32.mrf.mxu0
    %v984 = vadd.f32 %v221, %v983
    %985 = vdwg.mxu0
    %v986 = vtanh.pop %v984
    %v988 = vsel %vm262, %v986, 0
    %990 = vmatpush.msra.mxu0 0.0
    %991 = vmatpush.msra.mxu0 0.0
    %992 = vmatpush.msra.mxu0 0.0
    %993 = vmatpush.msra.mxu0 0.0
    %994 = vmatpush.msra.mxu0 0.0
    %995 = vmatpush.msra.mxu0 0.0
    %996 = vmatpush.msra.mxu0 0.0
    %997 = vmatpush.msra.mxu0 0.0
    %998 = vmatpush.msra.mxu0 0.0
    %999 = vmatpush.msra.mxu0 0.0
    %1000 = vmatpush.msra.mxu0 0.0
    %1001 = vmatpush.msra.mxu0 0.0
    %1002 = vmatpush.msra.mxu0 %v173
    %1003 = vmatpush.msra.mxu0 %v172
    %1004 = vmatpush.msra.mxu0 %v171
    %1005 = vmatpush.msra.mxu0 %v170
    %1006 = vmatmul.f32.gmra.mxu0 %v988
    %v1007 = vpop.f32.mrf.mxu0
    %v1008 = vadd.f32 %v366, %v1007
    %1009 = vdwg.mxu0
    %v1010 = vtanh.pop %v1008
    %v1011 = vmul.f32 %v1010, %v1010
    %v1012 = vsub.f32 1.0, %v1011
    %v1013 = vmul.f32 %v1012, %v227
    %v1015 = vsel %vm262, %v1013, 0
    %1017 = vmatpush.msra.mxu0 0.0
    %1018 = vmatpush.msra.mxu0 0.0
    %1019 = vmatpush.msra.mxu0 0.0
    %1020 = vmatpush.msra.mxu0 0.0
    %1021 = vmatpush.msra.mxu0 0.0
    %1022 = vmatpush.msra.mxu0 0.0
    %1023 = vmatpush.msra.mxu0 0.0
    %1024 = vmatpush.msra.mxu0 0.0
    %1025 = vmatpush.msra.mxu0 0.0
    %1026 = vmatpush.msra.mxu0 0.0
    %1027 = vmatpush.msra.mxu0 0.0
    %1028 = vmatpush.msra.mxu0 0.0
    %1029 = vmatpush.msra.mxu0 %v183
    %1030 = vmatpush.msra.mxu0 %v182
    %1031 = vmatpush.msra.mxu0 %v181
    %1032 = vmatpush.msra.mxu0 %v180
    %1033 = vmatmul.f32.gmra.mxu0 %v1015
    %v1034 = vpop.f32.mrf.mxu0
    %v1035 = vadd.f32 0.0, %v1034
    %1036 = vdwg.mxu0
    %v1037 = vmul.f32 %v986, %v986
    %v1038 = vsub.f32 1.0, %v1037
    %v1039 = vmul.f32 %v1038, %v1035
    %v1041 = vsel %vm262, %v1039, 0
    %1043 = vmatpush.msra.mxu0 0.0
    %1044 = vmatpush.msra.mxu0 0.0
    %1045 = vmatpush.msra.mxu0 0.0
    %1046 = vmatpush.msra.mxu0 0.0
    %1047 = vmatpush.msra.mxu0 0.0
    %1048 = vmatpush.msra.mxu0 0.0
    %1049 = vmatpush.msra.mxu0 0.0
    %1050 = vmatpush.msra.mxu0 0.0
    %1051 = vmatpush.msra.mxu0 0.0
    %1052 = vmatpush.msra.mxu0 0.0
    %1053 = vmatpush.msra.mxu0 0.0
    %1054 = vmatpush.msra.mxu0 0.0
    %1055 = vmatpush.msra.mxu0 %v179
    %1056 = vmatpush.msra.mxu0 %v178
    %1057 = vmatpush.msra.mxu0 %v177
    %1058 = vmatpush.msra.mxu0 %v176
    %1059 = vmatmul.f32.gmra.mxu0 %v1041
    %v1060 = vpop.f32.mrf.mxu0
    %v1061 = vadd.f32 0.0, %v1060
    %1062 = vdwg.mxu0
    %v1063 = vsub.f32 0.0, %v1061
    %v1064 = vmul.f32 %v1063, 0.1
    %v1065 = vadd.f32 %v758, %v1064
    %v1067 = vsel %vm234, %v1065, 0
    %1069 = vmatpush.msra.mxu0 0.0
    %1070 = vmatpush.msra.mxu0 0.0
    %1071 = vmatpush.msra.mxu0 0.0
    %1072 = vmatpush.msra.mxu0 0.0
    %1073 = vmatpush.msra.mxu0 0.0
    %1074 = vmatpush.msra.mxu0 0.0
    %1075 = vmatpush.msra.mxu0 0.0
    %1076 = vmatpush.msra.mxu0 0.0
    %1077 = vmatpush.msra.mxu0 0.0
    %1078 = vmatpush.msra.mxu0 0.0
    %1079 = vmatpush.msra.mxu0 0.0
    %1080 = vmatpush.msra.mxu0 0.0
    %1081 = vmatpush.msra.mxu0 0.0
    %1082 = vmatpush.msra.mxu0 0.0
    %1083 = vmatpush.msra.mxu0 0.0
    %1084 = vmatpush.msra.mxu0 %v148
    %1085 = vmatmul.f32.gmra.mxu0 %v1067
    %v1086 = vpop.f32.mrf.mxu0
    %v1087 = vadd.f32 %v232, %v1086
    %1088 = vdwg.mxu0
    %v1089 = vtanh.pop %v1087
    %v1091 = vsel %vm262, %v1089, 0
    %1093 = vmatpush.msra.mxu0 0.0
    %1094 = vmatpush.msra.mxu0 0.0
    %1095 = vmatpush.msra.mxu0 0.0
    %1096 = vmatpush.msra.mxu0 0.0
    %1097 = vmatpush.msra.mxu0 0.0
    %1098 = vmatpush.msra.mxu0 0.0
    %1099 = vmatpush.msra.mxu0 0.0
    %1100 = vmatpush.msra.mxu0 0.0
    %1101 = vmatpush.msra.mxu0 0.0
    %1102 = vmatpush.msra.mxu0 0.0
    %1103 = vmatpush.msra.mxu0 0.0
    %1104 = vmatpush.msra.mxu0 0.0
    %1105 = vmatpush.msra.mxu0 %v152
    %1106 = vmatpush.msra.mxu0 %v151
    %1107 = vmatpush.msra.mxu0 %v150
    %1108 = vmatpush.msra.mxu0 %v149
    %1109 = vmatmul.f32.gmra.mxu0 %v1091
    %v1110 = vpop.f32.mrf.mxu0
    %v1111 = vadd.f32 %v260, %v1110
    %1112 = vdwg.mxu0
    %v1113 = vtanh.pop %v1111
    %v1115 = vsel %vm262, %v1113, 0
    %1117 = vmatpush.msra.mxu0 0.0
    %1118 = vmatpush.msra.mxu0 0.0
    %1119 = vmatpush.msra.mxu0 0.0
    %1120 = vmatpush.msra.mxu0 0.0
    %1121 = vmatpush.msra.mxu0 0.0
    %1122 = vmatpush.msra.mxu0 0.0
    %1123 = vmatpush.msra.mxu0 0.0
    %1124 = vmatpush.msra.mxu0 0.0
    %1125 = vmatpush.msra.mxu0 0.0
    %1126 = vmatpush.msra.mxu0 0.0
    %1127 = vmatpush.msra.mxu0 0.0
    %1128 = vmatpush.msra.mxu0 0.0
    %1129 = vmatpush.msra.mxu0 %v166
    %1130 = vmatpush.msra.mxu0 %v165
    %1131 = vmatpush.msra.mxu0 %v164
    %1132 = vmatpush.msra.mxu0 %v163
    %1133 = vmatmul.f32.gmra.mxu0 %v1115
    %v1134 = vpop.f32.mrf.mxu0
    %v1135 = vadd.f32 %v496, %v1134
    %1136 = vdwg.mxu0
    %v1137 = vmul.f32 %v1113, %v1113
    %v1138 = vsub.f32 1.0, %v1137
    %v1139 = vmul.f32 %v1138, %v224
    %v1141 = vsel %vm262, %v1139, 0
    %1143 = vmatpush.msra.mxu0 0.0
    %1144 = vmatpush.msra.mxu0 0.0
    %1145 = vmatpush.msra.mxu0 0.0
    %1146 = vmatpush.msra.mxu0 0.0
    %1147 = vmatpush.msra.mxu0 0.0
    %1148 = vmatpush.msra.mxu0 0.0
    %1149 = vmatpush.msra.mxu0 0.0
    %1150 = vmatpush.msra.mxu0 0.0
    %1151 = vmatpush.msra.mxu0 0.0
    %1152 = vmatpush.msra.mxu0 0.0
    %1153 = vmatpush.msra.mxu0 0.0
    %1154 = vmatpush.msra.mxu0 0.0
    %1155 = vmatpush.msra.mxu0 %v162
    %1156 = vmatpush.msra.mxu0 %v161
    %1157 = vmatpush.msra.mxu0 %v160
    %1158 = vmatpush.msra.mxu0 %v159
    %1159 = vmatmul.f32.gmra.mxu0 %v1141
    %v1160 = vpop.f32.mrf.mxu0
    %v1161 = vadd.f32 0.0, %v1160
    %1162 = vdwg.mxu0
    %v1163 = vmul.f32 %v1089, %v1089
    %v1164 = vsub.f32 1.0, %v1163
    %v1165 = vmul.f32 %v1164, %v1161
    %v1167 = vsel %vm262, %v1165, 0
    %1169 = vmatpush.msra.mxu0 0.0
    %1170 = vmatpush.msra.mxu0 0.0
    %1171 = vmatpush.msra.mxu0 0.0
    %1172 = vmatpush.msra.mxu0 0.0
    %1173 = vmatpush.msra.mxu0 0.0
    %1174 = vmatpush.msra.mxu0 0.0
    %1175 = vmatpush.msra.mxu0 0.0
    %1176 = vmatpush.msra.mxu0 0.0
    %1177 = vmatpush.msra.mxu0 0.0
    %1178 = vmatpush.msra.mxu0 0.0
    %1179 = vmatpush.msra.mxu0 0.0
    %1180 = vmatpush.msra.mxu0 0.0
    %1181 = vmatpush.msra.mxu0 %v158
    %1182 = vmatpush.msra.mxu0 %v157
    %1183 = vmatpush.msra.mxu0 %v156
    %1184 = vmatpush.msra.mxu0 %v155
    %1185 = vmatmul.f32.gmra.mxu0 %v1167
    %v1186 = vpop.f32.mrf.mxu0
    %v1187 = vadd.f32 0.0, %v1186
    %1188 = vdwg.mxu0
    %v1189 = vmul.f32 %v1187, 0.05
    %v1190 = vadd.f32 %v962, %v1189
    %v1192 = vsel %vm234, %v1190, 0
    %1194 = vmatpush.msra.mxu0 0.0
    %1195 = vmatpush.msra.mxu0 0.0
    %1196 = vmatpush.msra.mxu0 0.0
    %1197 = vmatpush.msra.mxu0 0.0
    %1198 = vmatpush.msra.mxu0 0.0
    %1199 = vmatpush.msra.mxu0 0.0
    %1200 = vmatpush.msra.mxu0 0.0
    %1201 = vmatpush.msra.mxu0 0.0
    %1202 = vmatpush.msra.mxu0 0.0
    %1203 = vmatpush.msra.mxu0 0.0
    %1204 = vmatpush.msra.mxu0 0.0
    %1205 = vmatpush.msra.mxu0 0.0
    %1206 = vmatpush.msra.mxu0 0.0
    %1207 = vmatpush.msra.mxu0 0.0
    %1208 = vmatpush.msra.mxu0 0.0
    %1209 = vmatpush.msra.mxu0 %v169
    %1210 = vmatmul.f32.gmra.mxu0 %v1192
    %v1211 = vpop.f32.mrf.mxu0
    %v1212 = vadd.f32 %v221, %v1211
    %1213 = vdwg.mxu0
    %v1214 = vtanh.pop %v1212
    %v1216 = vsel %vm262, %v1214, 0
    %1218 = vmatpush.msra.mxu0 0.0
    %1219 = vmatpush.msra.mxu0 0.0
    %1220 = vmatpush.msra.mxu0 0.0
    %1221 = vmatpush.msra.mxu0 0.0
    %1222 = vmatpush.msra.mxu0 0.0
    %1223 = vmatpush.msra.mxu0 0.0
    %1224 = vmatpush.msra.mxu0 0.0
    %1225 = vmatpush.msra.mxu0 0.0
    %1226 = vmatpush.msra.mxu0 0.0
    %1227 = vmatpush.msra.mxu0 0.0
    %1228 = vmatpush.msra.mxu0 0.0
    %1229 = vmatpush.msra.mxu0 0.0
    %1230 = vmatpush.msra.mxu0 %v173
    %1231 = vmatpush.msra.mxu0 %v172
    %1232 = vmatpush.msra.mxu0 %v171
    %1233 = vmatpush.msra.mxu0 %v170
    %1234 = vmatmul.f32.gmra.mxu0 %v1216
    %v1235 = vpop.f32.mrf.mxu0
    %v1236 = vadd.f32 %v366, %v1235
    %1237 = vdwg.mxu0
    %v1238 = vtanh.pop %v1236
    %v1240 = vsel %vm262, %v1238, 0
    %1242 = vmatpush.msra.mxu0 0.0
    %1243 = vmatpush.msra.mxu0 0.0
    %1244 = vmatpush.msra.mxu0 0.0
    %1245 = vmatpush.msra.mxu0 0.0
    %1246 = vmatpush.msra.mxu0 0.0
    %1247 = vmatpush.msra.mxu0 0.0
    %1248 = vmatpush.msra.mxu0 0.0
    %1249 = vmatpush.msra.mxu0 0.0
    %1250 = vmatpush.msra.mxu0 0.0
    %1251 = vmatpush.msra.mxu0 0.0
    %1252 = vmatpush.msra.mxu0 0.0
    %1253 = vmatpush.msra.mxu0 0.0
    %1254 = vmatpush.msra.mxu0 %v187
    %1255 = vmatpush.msra.mxu0 %v186
    %1256 = vmatpush.msra.mxu0 %v185
    %1257 = vmatpush.msra.mxu0 %v184
    %1258 = vmatmul.f32.gmra.mxu0 %v1240
    %v1259 = vpop.f32.mrf.mxu0
    %v1260 = vadd.f32 %v624, %v1259
    %1261 = vdwg.mxu0
    %v1262 = vadd.f32 %v1135, %v1260
    %s1263 = scalar_lea.vmem %s22, 8
    %1264 = vst.msk [vmem:[%s1263] sm:$0xf] %vm650, %v1262
    %s1265 = scalar_lea.vmem [#allocation13], 8
    %1266 = vst.msk [vmem:[%s1265] sm:$0xf] %vm652, %v1190
    %s1267 = scalar_lea.vmem [#allocation14], 8
    %1268 = vst.msk [vmem:[%s1267] sm:$0xf] %vm652, %v1065
    %v1269 = vadd.f32 %v1190, %v1189
    %v1271 = vsel %vm234, %v1269, 0
    %1273 = vmatpush.msra.mxu0 0.0
    %1274 = vmatpush.msra.mxu0 0.0
    %1275 = vmatpush.msra.mxu0 0.0
    %1276 = vmatpush.msra.mxu0 0.0
    %1277 = vmatpush.msra.mxu0 0.0
    %1278 = vmatpush.msra.mxu0 0.0
    %1279 = vmatpush.msra.mxu0 0.0
    %1280 = vmatpush.msra.mxu0 0.0
    %1281 = vmatpush.msra.mxu0 0.0
    %1282 = vmatpush.msra.mxu0 0.0
    %1283 = vmatpush.msra.mxu0 0.0
    %1284 = vmatpush.msra.mxu0 0.0
    %1285 = vmatpush.msra.mxu0 0.0
    %1286 = vmatpush.msra.mxu0 0.0
    %1287 = vmatpush.msra.mxu0 0.0
    %1288 = vmatpush.msra.mxu0 %v169
    %1289 = vmatmul.f32.gmra.mxu0 %v1271
    %v1290 = vpop.f32.mrf.mxu0
    %v1291 = vadd.f32 %v221, %v1290
    %1292 = vdwg.mxu0
    %v1293 = vtanh.pop %v1291
    %v1295 = vsel %vm262, %v1293, 0
    %1297 = vmatpush.msra.mxu0 0.0
    %1298 = vmatpush.msra.mxu0 0.0
    %1299 = vmatpush.msra.mxu0 0.0
    %1300 = vmatpush.msra.mxu0 0.0
    %1301 = vmatpush.msra.mxu0 0.0
    %1302 = vmatpush.msra.mxu0 0.0
    %1303 = vmatpush.msra.mxu0 0.0
    %1304 = vmatpush.msra.mxu0 0.0
    %1305 = vmatpush.msra.mxu0 0.0
    %1306 = vmatpush.msra.mxu0 0.0
    %1307 = vmatpush.msra.mxu0 0.0
    %1308 = vmatpush.msra.mxu0 0.0
    %1309 = vmatpush.msra.mxu0 %v173
    %1310 = vmatpush.msra.mxu0 %v172
    %1311 = vmatpush.msra.mxu0 %v171
    %1312 = vmatpush.msra.mxu0 %v170
    %1313 = vmatmul.f32.gmra.mxu0 %v1295
    %v1314 = vpop.f32.mrf.mxu0
    %v1315 = vadd.f32 %v366, %v1314
    %1316 = vdwg.mxu0
    %v1317 = vtanh.pop %v1315
    %v1318 = vmul.f32 %v1317, %v1317
    %v1319 = vsub.f32 1.0, %v1318
    %v1320 = vmul.f32 %v1319, %v227
    %v1322 = vsel %vm262, %v1320, 0
    %1324 = vmatpush.msra.mxu0 0.0
    %1325 = vmatpush.msra.mxu0 0.0
    %1326 = vmatpush.msra.mxu0 0.0
    %1327 = vmatpush.msra.mxu0 0.0
    %1328 = vmatpush.msra.mxu0 0.0
    %1329 = vmatpush.msra.mxu0 0.0
    %1330 = vmatpush.msra.mxu0 0.0
    %1331 = vmatpush.msra.mxu0 0.0
    %1332 = vmatpush.msra.mxu0 0.0
    %1333 = vmatpush.msra.mxu0 0.0
    %1334 = vmatpush.msra.mxu0 0.0
    %1335 = vmatpush.msra.mxu0 0.0
    %1336 = vmatpush.msra.mxu0 %v183
    %1337 = vmatpush.msra.mxu0 %v182
    %1338 = vmatpush.msra.mxu0 %v181
    %1339 = vmatpush.msra.mxu0 %v180
    %1340 = vmatmul.f32.gmra.mxu0 %v1322
    %v1341 = vpop.f32.mrf.mxu0
    %v1342 = vadd.f32 0.0, %v1341
    %1343 = vdwg.mxu0
    %v1344 = vmul.f32 %v1293, %v1293
    %v1345 = vsub.f32 1.0, %v1344
    %v1346 = vmul.f32 %v1345, %v1342
    %v1348 = vsel %vm262, %v1346, 0
    %1350 = vmatpush.msra.mxu0 0.0
    %1351 = vmatpush.msra.mxu0 0.0
    %1352 = vmatpush.msra.mxu0 0.0
    %1353 = vmatpush.msra.mxu0 0.0
    %1354 = vmatpush.msra.mxu0 0.0
    %1355 = vmatpush.msra.mxu0 0.0
    %1356 = vmatpush.msra.mxu0 0.0
    %1357 = vmatpush.msra.mxu0 0.0
    %1358 = vmatpush.msra.mxu0 0.0
    %1359 = vmatpush.msra.mxu0 0.0
    %1360 = vmatpush.msra.mxu0 0.0
    %1361 = vmatpush.msra.mxu0 0.0
    %1362 = vmatpush.msra.mxu0 %v179
    %1363 = vmatpush.msra.mxu0 %v178
    %1364 = vmatpush.msra.mxu0 %v177
    %1365 = vmatpush.msra.mxu0 %v176
    %1366 = vmatmul.f32.gmra.mxu0 %v1348
    %v1367 = vpop.f32.mrf.mxu0
    %v1368 = vadd.f32 0.0, %v1367
    %1369 = vdwg.mxu0
    %v1370 = vsub.f32 0.0, %v1368
    %v1371 = vmul.f32 %v1370, 0.1
    %v1372 = vadd.f32 %v1065, %v1371
    %v1374 = vsel %vm234, %v1372, 0
    %1376 = vmatpush.msra.mxu0 0.0
    %1377 = vmatpush.msra.mxu0 0.0
    %1378 = vmatpush.msra.mxu0 0.0
    %1379 = vmatpush.msra.mxu0 0.0
    %1380 = vmatpush.msra.mxu0 0.0
    %1381 = vmatpush.msra.mxu0 0.0
    %1382 = vmatpush.msra.mxu0 0.0
    %1383 = vmatpush.msra.mxu0 0.0
    %1384 = vmatpush.msra.mxu0 0.0
    %1385 = vmatpush.msra.mxu0 0.0
    %1386 = vmatpush.msra.mxu0 0.0
    %1387 = vmatpush.msra.mxu0 0.0
    %1388 = vmatpush.msra.mxu0 0.0
    %1389 = vmatpush.msra.mxu0 0.0
    %1390 = vmatpush.msra.mxu0 0.0
    %1391 = vmatpush.msra.mxu0 %v148
    %1392 = vmatmul.f32.gmra.mxu0 %v1374
    %v1393 = vpop.f32.mrf.mxu0
    %v1394 = vadd.f32 %v232, %v1393
    %1395 = vdwg.mxu0
    %v1396 = vtanh.pop %v1394
    %v1398 = vsel %vm262, %v1396, 0
    %1400 = vmatpush.msra.mxu0 0.0
    %1401 = vmatpush.msra.mxu0 0.0
    %1402 = vmatpush.msra.mxu0 0.0
    %1403 = vmatpush.msra.mxu0 0.0
    %1404 = vmatpush.msra.mxu0 0.0
    %1405 = vmatpush.msra.mxu0 0.0
    %1406 = vmatpush.msra.mxu0 0.0
    %1407 = vmatpush.msra.mxu0 0.0
    %1408 = vmatpush.msra.mxu0 0.0
    %1409 = vmatpush.msra.mxu0 0.0
    %1410 = vmatpush.msra.mxu0 0.0
    %1411 = vmatpush.msra.mxu0 0.0
    %1412 = vmatpush.msra.mxu0 %v152
    %1413 = vmatpush.msra.mxu0 %v151
    %1414 = vmatpush.msra.mxu0 %v150
    %1415 = vmatpush.msra.mxu0 %v149
    %1416 = vmatmul.f32.gmra.mxu0 %v1398
    %v1417 = vpop.f32.mrf.mxu0
    %v1418 = vadd.f32 %v260, %v1417
    %1419 = vdwg.mxu0
    %v1420 = vtanh.pop %v1418
    %v1422 = vsel %vm262, %v1420, 0
    %1424 = vmatpush.msra.mxu0 0.0
    %1425 = vmatpush.msra.mxu0 0.0
    %1426 = vmatpush.msra.mxu0 0.0
    %1427 = vmatpush.msra.mxu0 0.0
    %1428 = vmatpush.msra.mxu0 0.0
    %1429 = vmatpush.msra.mxu0 0.0
    %1430 = vmatpush.msra.mxu0 0.0
    %1431 = vmatpush.msra.mxu0 0.0
    %1432 = vmatpush.msra.mxu0 0.0
    %1433 = vmatpush.msra.mxu0 0.0
    %1434 = vmatpush.msra.mxu0 0.0
    %1435 = vmatpush.msra.mxu0 0.0
    %1436 = vmatpush.msra.mxu0 %v166
    %1437 = vmatpush.msra.mxu0 %v165
    %1438 = vmatpush.msra.mxu0 %v164
    %1439 = vmatpush.msra.mxu0 %v163
    %1440 = vmatmul.f32.gmra.mxu0 %v1422
    %v1441 = vpop.f32.mrf.mxu0
    %v1442 = vadd.f32 %v496, %v1441
    %1443 = vdwg.mxu0
    %v1444 = vmul.f32 %v1420, %v1420
    %v1445 = vsub.f32 1.0, %v1444
    %v1446 = vmul.f32 %v1445, %v224
    %v1448 = vsel %vm262, %v1446, 0
    %1450 = vmatpush.msra.mxu0 0.0
    %1451 = vmatpush.msra.mxu0 0.0
    %1452 = vmatpush.msra.mxu0 0.0
    %1453 = vmatpush.msra.mxu0 0.0
    %1454 = vmatpush.msra.mxu0 0.0
    %1455 = vmatpush.msra.mxu0 0.0
    %1456 = vmatpush.msra.mxu0 0.0
    %1457 = vmatpush.msra.mxu0 0.0
    %1458 = vmatpush.msra.mxu0 0.0
    %1459 = vmatpush.msra.mxu0 0.0
    %1460 = vmatpush.msra.mxu0 0.0
    %1461 = vmatpush.msra.mxu0 0.0
    %1462 = vmatpush.msra.mxu0 %v162
    %1463 = vmatpush.msra.mxu0 %v161
    %1464 = vmatpush.msra.mxu0 %v160
    %1465 = vmatpush.msra.mxu0 %v159
    %1466 = vmatmul.f32.gmra.mxu0 %v1448
    %v1467 = vpop.f32.mrf.mxu0
    %v1468 = vadd.f32 0.0, %v1467
    %1469 = vdwg.mxu0
    %v1470 = vmul.f32 %v1396, %v1396
    %v1471 = vsub.f32 1.0, %v1470
    %v1472 = vmul.f32 %v1471, %v1468
    %v1474 = vsel %vm262, %v1472, 0
    %1476 = vmatpush.msra.mxu0 0.0
    %1477 = vmatpush.msra.mxu0 0.0
    %1478 = vmatpush.msra.mxu0 0.0
    %1479 = vmatpush.msra.mxu0 0.0
    %1480 = vmatpush.msra.mxu0 0.0
    %1481 = vmatpush.msra.mxu0 0.0
    %1482 = vmatpush.msra.mxu0 0.0
    %1483 = vmatpush.msra.mxu0 0.0
    %1484 = vmatpush.msra.mxu0 0.0
    %1485 = vmatpush.msra.mxu0 0.0
    %1486 = vmatpush.msra.mxu0 0.0
    %1487 = vmatpush.msra.mxu0 0.0
    %1488 = vmatpush.msra.mxu0 %v158
    %1489 = vmatpush.msra.mxu0 %v157
    %1490 = vmatpush.msra.mxu0 %v156
    %1491 = vmatpush.msra.mxu0 %v155
    %1492 = vmatmul.f32.gmra.mxu0 %v1474
    %v1493 = vpop.f32.mrf.mxu0
    %v1494 = vadd.f32 0.0, %v1493
    %1495 = vdwg.mxu0
    %v1496 = vmul.f32 %v1494, 0.05
    %v1497 = vadd.f32 %v1269, %v1496
    %v1499 = vsel %vm234, %v1497, 0
    %1501 = vmatpush.msra.mxu0 0.0
    %1502 = vmatpush.msra.mxu0 0.0
    %1503 = vmatpush.msra.mxu0 0.0
    %1504 = vmatpush.msra.mxu0 0.0
    %1505 = vmatpush.msra.mxu0 0.0
    %1506 = vmatpush.msra.mxu0 0.0
    %1507 = vmatpush.msra.mxu0 0.0
    %1508 = vmatpush.msra.mxu0 0.0
    %1509 = vmatpush.msra.mxu0 0.0
    %1510 = vmatpush.msra.mxu0 0.0
    %1511 = vmatpush.msra.mxu0 0.0
    %1512 = vmatpush.msra.mxu0 0.0
    %1513 = vmatpush.msra.mxu0 0.0
    %1514 = vmatpush.msra.mxu0 0.0
    %1515 = vmatpush.msra.mxu0 0.0
    %1516 = vmatpush.msra.mxu0 %v169
    %1517 = vmatmul.f32.gmra.mxu0 %v1499
    %v1518 = vpop.f32.mrf.mxu0
    %v1519 = vadd.f32 %v221, %v1518
    %1520 = vdwg.mxu0
    %v1521 = vtanh.pop %v1519
    %v1523 = vsel %vm262, %v1521, 0
    %1525 = vmatpush.msra.mxu0 0.0
    %1526 = vmatpush.msra.mxu0 0.0
    %1527 = vmatpush.msra.mxu0 0.0
    %1528 = vmatpush.msra.mxu0 0.0
    %1529 = vmatpush.msra.mxu0 0.0
    %1530 = vmatpush.msra.mxu0 0.0
    %1531 = vmatpush.msra.mxu0 0.0
    %1532 = vmatpush.msra.mxu0 0.0
    %1533 = vmatpush.msra.mxu0 0.0
    %1534 = vmatpush.msra.mxu0 0.0
    %1535 = vmatpush.msra.mxu0 0.0
    %1536 = vmatpush.msra.mxu0 0.0
    %1537 = vmatpush.msra.mxu0 %v173
    %1538 = vmatpush.msra.mxu0 %v172
    %1539 = vmatpush.msra.mxu0 %v171
    %1540 = vmatpush.msra.mxu0 %v170
    %1541 = vmatmul.f32.gmra.mxu0 %v1523
    %v1542 = vpop.f32.mrf.mxu0
    %v1543 = vadd.f32 %v366, %v1542
    %1544 = vdwg.mxu0
    %v1545 = vtanh.pop %v1543
    %v1547 = vsel %vm262, %v1545, 0
    %1549 = vmatpush.msra.mxu0 0.0
    %1550 = vmatpush.msra.mxu0 0.0
    %1551 = vmatpush.msra.mxu0 0.0
    %1552 = vmatpush.msra.mxu0 0.0
    %1553 = vmatpush.msra.mxu0 0.0
    %1554 = vmatpush.msra.mxu0 0.0
    %1555 = vmatpush.msra.mxu0 0.0
    %1556 = vmatpush.msra.mxu0 0.0
    %1557 = vmatpush.msra.mxu0 0.0
    %1558 = vmatpush.msra.mxu0 0.0
    %1559 = vmatpush.msra.mxu0 0.0
    %1560 = vmatpush.msra.mxu0 0.0
    %1561 = vmatpush.msra.mxu0 %v187
    %1562 = vmatpush.msra.mxu0 %v186
    %1563 = vmatpush.msra.mxu0 %v185
    %1564 = vmatpush.msra.mxu0 %v184
    %1565 = vmatmul.f32.gmra.mxu0 %v1547
    %v1566 = vpop.f32.mrf.mxu0
    %v1567 = vadd.f32 %v624, %v1566
    %1568 = vdwg.mxu0
    %v1569 = vadd.f32 %v1442, %v1567
    %s1570 = scalar_lea.vmem %s22, 12
    %1571 = vst.msk [vmem:[%s1570] sm:$0xf] %vm650, %v1569
    %s1572 = scalar_lea.vmem [#allocation13], 12
    %1573 = vst.msk [vmem:[%s1572] sm:$0xf] %vm652, %v1497
    %s1574 = scalar_lea.vmem [#allocation14], 12
    %1575 = vst.msk [vmem:[%s1574] sm:$0xf] %vm652, %v1372
    %v1576 = vadd.f32 %v1497, %v1496
    %v1578 = vsel %vm234, %v1576, 0
    %1580 = vmatpush.msra.mxu0 0.0
    %1581 = vmatpush.msra.mxu0 0.0
    %1582 = vmatpush.msra.mxu0 0.0
    %1583 = vmatpush.msra.mxu0 0.0
    %1584 = vmatpush.msra.mxu0 0.0
    %1585 = vmatpush.msra.mxu0 0.0
    %1586 = vmatpush.msra.mxu0 0.0
    %1587 = vmatpush.msra.mxu0 0.0
    %1588 = vmatpush.msra.mxu0 0.0
    %1589 = vmatpush.msra.mxu0 0.0
    %1590 = vmatpush.msra.mxu0 0.0
    %1591 = vmatpush.msra.mxu0 0.0
    %1592 = vmatpush.msra.mxu0 0.0
    %1593 = vmatpush.msra.mxu0 0.0
    %1594 = vmatpush.msra.mxu0 0.0
    %1595 = vmatpush.msra.mxu0 %v169
    %1596 = vmatmul.f32.gmra.mxu0 %v1578
    %v1597 = vpop.f32.mrf.mxu0
    %v1598 = vadd.f32 %v221, %v1597
    %1599 = vdwg.mxu0
    %v1600 = vtanh.pop %v1598
    %v1602 = vsel %vm262, %v1600, 0
    %1604 = vmatpush.msra.mxu0 0.0
    %1605 = vmatpush.msra.mxu0 0.0
    %1606 = vmatpush.msra.mxu0 0.0
    %1607 = vmatpush.msra.mxu0 0.0
    %1608 = vmatpush.msra.mxu0 0.0
    %1609 = vmatpush.msra.mxu0 0.0
    %1610 = vmatpush.msra.mxu0 0.0
    %1611 = vmatpush.msra.mxu0 0.0
    %1612 = vmatpush.msra.mxu0 0.0
    %1613 = vmatpush.msra.mxu0 0.0
    %1614 = vmatpush.msra.mxu0 0.0
    %1615 = vmatpush.msra.mxu0 0.0
    %1616 = vmatpush.msra.mxu0 %v173
    %1617 = vmatpush.msra.mxu0 %v172
    %1618 = vmatpush.msra.mxu0 %v171
    %1619 = vmatpush.msra.mxu0 %v170
    %1620 = vmatmul.f32.gmra.mxu0 %v1602
    %v1621 = vpop.f32.mrf.mxu0
    %v1622 = vadd.f32 %v366, %v1621
    %1623 = vdwg.mxu0
    %v1624 = vtanh.pop %v1622
    %v1625 = vmul.f32 %v1624, %v1624
    %v1626 = vsub.f32 1.0, %v1625
    %v1627 = vmul.f32 %v1626, %v227
    %v1629 = vsel %vm262, %v1627, 0
    %1631 = vmatpush.msra.mxu0 0.0
    %1632 = vmatpush.msra.mxu0 0.0
    %1633 = vmatpush.msra.mxu0 0.0
    %1634 = vmatpush.msra.mxu0 0.0
    %1635 = vmatpush.msra.mxu0 0.0
    %1636 = vmatpush.msra.mxu0 0.0
    %1637 = vmatpush.msra.mxu0 0.0
    %1638 = vmatpush.msra.mxu0 0.0
    %1639 = vmatpush.msra.mxu0 0.0
    %1640 = vmatpush.msra.mxu0 0.0
    %1641 = vmatpush.msra.mxu0 0.0
    %1642 = vmatpush.msra.mxu0 0.0
    %1643 = vmatpush.msra.mxu0 %v183
    %1644 = vmatpush.msra.mxu0 %v182
    %1645 = vmatpush.msra.mxu0 %v181
    %1646 = vmatpush.msra.mxu0 %v180
    %1647 = vmatmul.f32.gmra.mxu0 %v1629
    %v1648 = vpop.f32.mrf.mxu0
    %v1649 = vadd.f32 0.0, %v1648
    %1650 = vdwg.mxu0
    %v1651 = vmul.f32 %v1600, %v1600
    %v1652 = vsub.f32 1.0, %v1651
    %v1653 = vmul.f32 %v1652, %v1649
    %v1655 = vsel %vm262, %v1653, 0
    %1657 = vmatpush.msra.mxu0 0.0
    %1658 = vmatpush.msra.mxu0 0.0
    %1659 = vmatpush.msra.mxu0 0.0
    %1660 = vmatpush.msra.mxu0 0.0
    %1661 = vmatpush.msra.mxu0 0.0
    %1662 = vmatpush.msra.mxu0 0.0
    %1663 = vmatpush.msra.mxu0 0.0
    %1664 = vmatpush.msra.mxu0 0.0
    %1665 = vmatpush.msra.mxu0 0.0
    %1666 = vmatpush.msra.mxu0 0.0
    %1667 = vmatpush.msra.mxu0 0.0
    %1668 = vmatpush.msra.mxu0 0.0
    %1669 = vmatpush.msra.mxu0 %v179
    %1670 = vmatpush.msra.mxu0 %v178
    %1671 = vmatpush.msra.mxu0 %v177
    %1672 = vmatpush.msra.mxu0 %v176
    %1673 = vmatmul.f32.gmra.mxu0 %v1655
    %v1674 = vpop.f32.mrf.mxu0
    %v1675 = vadd.f32 0.0, %v1674
    %1676 = vdwg.mxu0
    %v1677 = vsub.f32 0.0, %v1675
    %v1678 = vmul.f32 %v1677, 0.1
    %v1679 = vadd.f32 %v1372, %v1678
    %v1681 = vsel %vm234, %v1679, 0
    %1683 = vmatpush.msra.mxu0 0.0
    %1684 = vmatpush.msra.mxu0 0.0
    %1685 = vmatpush.msra.mxu0 0.0
    %1686 = vmatpush.msra.mxu0 0.0
    %1687 = vmatpush.msra.mxu0 0.0
    %1688 = vmatpush.msra.mxu0 0.0
    %1689 = vmatpush.msra.mxu0 0.0
    %1690 = vmatpush.msra.mxu0 0.0
    %1691 = vmatpush.msra.mxu0 0.0
    %1692 = vmatpush.msra.mxu0 0.0
    %1693 = vmatpush.msra.mxu0 0.0
    %1694 = vmatpush.msra.mxu0 0.0
    %1695 = vmatpush.msra.mxu0 0.0
    %1696 = vmatpush.msra.mxu0 0.0
    %1697 = vmatpush.msra.mxu0 0.0
    %1698 = vmatpush.msra.mxu0 %v148
    %1699 = vmatmul.f32.gmra.mxu0 %v1681
    %v1700 = vpop.f32.mrf.mxu0
    %v1701 = vadd.f32 %v232, %v1700
    %1702 = vdwg.mxu0
    %v1703 = vtanh.pop %v1701
    %v1705 = vsel %vm262, %v1703, 0
    %1707 = vmatpush.msra.mxu0 0.0
    %1708 = vmatpush.msra.mxu0 0.0
    %1709 = vmatpush.msra.mxu0 0.0
    %1710 = vmatpush.msra.mxu0 0.0
    %1711 = vmatpush.msra.mxu0 0.0
    %1712 = vmatpush.msra.mxu0 0.0
    %1713 = vmatpush.msra.mxu0 0.0
    %1714 = vmatpush.msra.mxu0 0.0
    %1715 = vmatpush.msra.mxu0 0.0
    %1716 = vmatpush.msra.mxu0 0.0
    %1717 = vmatpush.msra.mxu0 0.0
    %1718 = vmatpush.msra.mxu0 0.0
    %1719 = vmatpush.msra.mxu0 %v152
    %1720 = vmatpush.msra.mxu0 %v151
    %1721 = vmatpush.msra.mxu0 %v150
    %1722 = vmatpush.msra.mxu0 %v149
    %1723 = vmatmul.f32.gmra.mxu0 %v1705
    %v1724 = vpop.f32.mrf.mxu0
    %v1725 = vadd.f32 %v260, %v1724
    %1726 = vdwg.mxu0
    %v1727 = vtanh.pop %v1725
    %v1729 = vsel %vm262, %v1727, 0
    %1731 = vmatpush.msra.mxu0 0.0
    %1732 = vmatpush.msra.mxu0 0.0
    %1733 = vmatpush.msra.mxu0 0.0
    %1734 = vmatpush.msra.mxu0 0.0
    %1735 = vmatpush.msra.mxu0 0.0
    %1736 = vmatpush.msra.mxu0 0.0
    %1737 = vmatpush.msra.mxu0 0.0
    %1738 = vmatpush.msra.mxu0 0.0
    %1739 = vmatpush.msra.mxu0 0.0
    %1740 = vmatpush.msra.mxu0 0.0
    %1741 = vmatpush.msra.mxu0 0.0
    %1742 = vmatpush.msra.mxu0 0.0
    %1743 = vmatpush.msra.mxu0 %v166
    %1744 = vmatpush.msra.mxu0 %v165
    %1745 = vmatpush.msra.mxu0 %v164
    %1746 = vmatpush.msra.mxu0 %v163
    %1747 = vmatmul.f32.gmra.mxu0 %v1729
    %v1748 = vpop.f32.mrf.mxu0
    %v1749 = vadd.f32 %v496, %v1748
    %1750 = vdwg.mxu0
    %v1751 = vmul.f32 %v1727, %v1727
    %v1752 = vsub.f32 1.0, %v1751
    %v1753 = vmul.f32 %v1752, %v224
    %v1755 = vsel %vm262, %v1753, 0
    %1757 = vmatpush.msra.mxu0 0.0
    %1758 = vmatpush.msra.mxu0 0.0
    %1759 = vmatpush.msra.mxu0 0.0
    %1760 = vmatpush.msra.mxu0 0.0
    %1761 = vmatpush.msra.mxu0 0.0
    %1762 = vmatpush.msra.mxu0 0.0
    %1763 = vmatpush.msra.mxu0 0.0
    %1764 = vmatpush.msra.mxu0 0.0
    %1765 = vmatpush.msra.mxu0 0.0
    %1766 = vmatpush.msra.mxu0 0.0
    %1767 = vmatpush.msra.mxu0 0.0
    %1768 = vmatpush.msra.mxu0 0.0
    %1769 = vmatpush.msra.mxu0 %v162
    %1770 = vmatpush.msra.mxu0 %v161
    %1771 = vmatpush.msra.mxu0 %v160
    %1772 = vmatpush.msra.mxu0 %v159
    %1773 = vmatmul.f32.gmra.mxu0 %v1755
    %v1774 = vpop.f32.mrf.mxu0
    %v1775 = vadd.f32 0.0, %v1774
    %1776 = vdwg.mxu0
    %v1777 = vmul.f32 %v1703, %v1703
    %v1778 = vsub.f32 1.0, %v1777
    %v1779 = vmul.f32 %v1778, %v1775
    %v1781 = vsel %vm262, %v1779, 0
    %1783 = vmatpush.msra.mxu0 0.0
    %1784 = vmatpush.msra.mxu0 0.0
    %1785 = vmatpush.msra.mxu0 0.0
    %1786 = vmatpush.msra.mxu0 0.0
    %1787 = vmatpush.msra.mxu0 0.0
    %1788 = vmatpush.msra.mxu0 0.0
    %1789 = vmatpush.msra.mxu0 0.0
    %1790 = vmatpush.msra.mxu0 0.0
    %1791 = vmatpush.msra.mxu0 0.0
    %1792 = vmatpush.msra.mxu0 0.0
    %1793 = vmatpush.msra.mxu0 0.0
    %1794 = vmatpush.msra.mxu0 0.0
    %1795 = vmatpush.msra.mxu0 %v158
    %1796 = vmatpush.msra.mxu0 %v157
    %1797 = vmatpush.msra.mxu0 %v156
    %1798 = vmatpush.msra.mxu0 %v155
    %1799 = vmatmul.f32.gmra.mxu0 %v1781
    %v1800 = vpop.f32.mrf.mxu0
    %v1801 = vadd.f32 0.0, %v1800
    %1802 = vdwg.mxu0
    %v1803 = vmul.f32 %v1801, 0.05
    %v1804 = vadd.f32 %v1576, %v1803
    %v1806 = vsel %vm234, %v1804, 0
    %1808 = vmatpush.msra.mxu0 0.0
    %1809 = vmatpush.msra.mxu0 0.0
    %1810 = vmatpush.msra.mxu0 0.0
    %1811 = vmatpush.msra.mxu0 0.0
    %1812 = vmatpush.msra.mxu0 0.0
    %1813 = vmatpush.msra.mxu0 0.0
    %1814 = vmatpush.msra.mxu0 0.0
    %1815 = vmatpush.msra.mxu0 0.0
    %1816 = vmatpush.msra.mxu0 0.0
    %1817 = vmatpush.msra.mxu0 0.0
    %1818 = vmatpush.msra.mxu0 0.0
    %1819 = vmatpush.msra.mxu0 0.0
    %1820 = vmatpush.msra.mxu0 0.0
    %1821 = vmatpush.msra.mxu0 0.0
    %1822 = vmatpush.msra.mxu0 0.0
    %1823 = vmatpush.msra.mxu0 %v169
    %1824 = vmatmul.f32.gmra.mxu0 %v1806
    %v1825 = vpop.f32.mrf.mxu0
    %v1826 = vadd.f32 %v221, %v1825
    %1827 = vdwg.mxu0
    %v1828 = vtanh.pop %v1826
    %v1830 = vsel %vm262, %v1828, 0
    %1832 = vmatpush.msra.mxu0 0.0
    %1833 = vmatpush.msra.mxu0 0.0
    %1834 = vmatpush.msra.mxu0 0.0
    %1835 = vmatpush.msra.mxu0 0.0
    %1836 = vmatpush.msra.mxu0 0.0
    %1837 = vmatpush.msra.mxu0 0.0
    %1838 = vmatpush.msra.mxu0 0.0
    %1839 = vmatpush.msra.mxu0 0.0
    %1840 = vmatpush.msra.mxu0 0.0
    %1841 = vmatpush.msra.mxu0 0.0
    %1842 = vmatpush.msra.mxu0 0.0
    %1843 = vmatpush.msra.mxu0 0.0
    %1844 = vmatpush.msra.mxu0 %v173
    %1845 = vmatpush.msra.mxu0 %v172
    %1846 = vmatpush.msra.mxu0 %v171
    %1847 = vmatpush.msra.mxu0 %v170
    %1848 = vmatmul.f32.gmra.mxu0 %v1830
    %v1849 = vpop.f32.mrf.mxu0
    %v1850 = vadd.f32 %v366, %v1849
    %1851 = vdwg.mxu0
    %v1852 = vtanh.pop %v1850
    %v1854 = vsel %vm262, %v1852, 0
    %1856 = vmatpush.msra.mxu0 0.0
    %1857 = vmatpush.msra.mxu0 0.0
    %1858 = vmatpush.msra.mxu0 0.0
    %1859 = vmatpush.msra.mxu0 0.0
    %1860 = vmatpush.msra.mxu0 0.0
    %1861 = vmatpush.msra.mxu0 0.0
    %1862 = vmatpush.msra.mxu0 0.0
    %1863 = vmatpush.msra.mxu0 0.0
    %1864 = vmatpush.msra.mxu0 0.0
    %1865 = vmatpush.msra.mxu0 0.0
    %1866 = vmatpush.msra.mxu0 0.0
    %1867 = vmatpush.msra.mxu0 0.0
    %1868 = vmatpush.msra.mxu0 %v187
    %1869 = vmatpush.msra.mxu0 %v186
    %1870 = vmatpush.msra.mxu0 %v185
    %1871 = vmatpush.msra.mxu0 %v184
    %1872 = vmatmul.f32.gmra.mxu0 %v1854
    %v1873 = vpop.f32.mrf.mxu0
    %v1874 = vadd.f32 %v624, %v1873
    %1875 = vdwg.mxu0
    %v1876 = vadd.f32 %v1749, %v1874
    %s1877 = scalar_lea.vmem %s22, 16
    %1878 = vst.msk [vmem:[%s1877] sm:$0xf] %vm650, %v1876
    %s1879 = scalar_lea.vmem [#allocation13], 16
    %1880 = vst.msk [vmem:[%s1879] sm:$0xf] %vm652, %v1804
    %s1881 = scalar_lea.vmem [#allocation14], 16
    %1882 = vst.msk [vmem:[%s1881] sm:$0xf] %vm652, %v1679
    %v1883 = vadd.f32 %v1804, %v1803
    %v1885 = vsel %vm234, %v1883, 0
    %1887 = vmatpush.msra.mxu0 0.0
    %1888 = vmatpush.msra.mxu0 0.0
    %1889 = vmatpush.msra.mxu0 0.0
    %1890 = vmatpush.msra.mxu0 0.0
    %1891 = vmatpush.msra.mxu0 0.0
    %1892 = vmatpush.msra.mxu0 0.0
    %1893 = vmatpush.msra.mxu0 0.0
    %1894 = vmatpush.msra.mxu0 0.0
    %1895 = vmatpush.msra.mxu0 0.0
    %1896 = vmatpush.msra.mxu0 0.0
    %1897 = vmatpush.msra.mxu0 0.0
    %1898 = vmatpush.msra.mxu0 0.0
    %1899 = vmatpush.msra.mxu0 0.0
    %1900 = vmatpush.msra.mxu0 0.0
    %1901 = vmatpush.msra.mxu0 0.0
    %1902 = vmatpush.msra.mxu0 %v169
    %1903 = vmatmul.f32.gmra.mxu0 %v1885
    %v1904 = vpop.f32.mrf.mxu0
    %v1905 = vadd.f32 %v221, %v1904
    %1906 = vdwg.mxu0
    %v1907 = vtanh.pop %v1905
    %v1909 = vsel %vm262, %v1907, 0
    %1911 = vmatpush.msra.mxu0 0.0
    %1912 = vmatpush.msra.mxu0 0.0
    %1913 = vmatpush.msra.mxu0 0.0
    %1914 = vmatpush.msra.mxu0 0.0
    %1915 = vmatpush.msra.mxu0 0.0
    %1916 = vmatpush.msra.mxu0 0.0
    %1917 = vmatpush.msra.mxu0 0.0
    %1918 = vmatpush.msra.mxu0 0.0
    %1919 = vmatpush.msra.mxu0 0.0
    %1920 = vmatpush.msra.mxu0 0.0
    %1921 = vmatpush.msra.mxu0 0.0
    %1922 = vmatpush.msra.mxu0 0.0
    %1923 = vmatpush.msra.mxu0 %v173
    %1924 = vmatpush.msra.mxu0 %v172
    %1925 = vmatpush.msra.mxu0 %v171
    %1926 = vmatpush.msra.mxu0 %v170
    %1927 = vmatmul.f32.gmra.mxu0 %v1909
    %v1928 = vpop.f32.mrf.mxu0
    %v1929 = vadd.f32 %v366, %v1928
    %1930 = vdwg.mxu0
    %v1931 = vtanh.pop %v1929
    %v1932 = vmul.f32 %v1931, %v1931
    %v1933 = vsub.f32 1.0, %v1932
    %v1934 = vmul.f32 %v1933, %v227
    %v1936 = vsel %vm262, %v1934, 0
    %1938 = vmatpush.msra.mxu0 0.0
    %1939 = vmatpush.msra.mxu0 0.0
    %1940 = vmatpush.msra.mxu0 0.0
    %1941 = vmatpush.msra.mxu0 0.0
    %1942 = vmatpush.msra.mxu0 0.0
    %1943 = vmatpush.msra.mxu0 0.0
    %1944 = vmatpush.msra.mxu0 0.0
    %1945 = vmatpush.msra.mxu0 0.0
    %1946 = vmatpush.msra.mxu0 0.0
    %1947 = vmatpush.msra.mxu0 0.0
    %1948 = vmatpush.msra.mxu0 0.0
    %1949 = vmatpush.msra.mxu0 0.0
    %1950 = vmatpush.msra.mxu0 %v183
    %1951 = vmatpush.msra.mxu0 %v182
    %1952 = vmatpush.msra.mxu0 %v181
    %1953 = vmatpush.msra.mxu0 %v180
    %1954 = vmatmul.f32.gmra.mxu0 %v1936
    %v1955 = vpop.f32.mrf.mxu0
    %v1956 = vadd.f32 0.0, %v1955
    %1957 = vdwg.mxu0
    %v1958 = vmul.f32 %v1907, %v1907
    %v1959 = vsub.f32 1.0, %v1958
    %v1960 = vmul.f32 %v1959, %v1956
    %v1962 = vsel %vm262, %v1960, 0
    %1964 = vmatpush.msra.mxu0 0.0
    %1965 = vmatpush.msra.mxu0 0.0
    %1966 = vmatpush.msra.mxu0 0.0
    %1967 = vmatpush.msra.mxu0 0.0
    %1968 = vmatpush.msra.mxu0 0.0
    %1969 = vmatpush.msra.mxu0 0.0
    %1970 = vmatpush.msra.mxu0 0.0
    %1971 = vmatpush.msra.mxu0 0.0
    %1972 = vmatpush.msra.mxu0 0.0
    %1973 = vmatpush.msra.mxu0 0.0
    %1974 = vmatpush.msra.mxu0 0.0
    %1975 = vmatpush.msra.mxu0 0.0
    %1976 = vmatpush.msra.mxu0 %v179
    %1977 = vmatpush.msra.mxu0 %v178
    %1978 = vmatpush.msra.mxu0 %v177
    %1979 = vmatpush.msra.mxu0 %v176
    %1980 = vmatmul.f32.gmra.mxu0 %v1962
    %v1981 = vpop.f32.mrf.mxu0
    %v1982 = vadd.f32 0.0, %v1981
    %1983 = vdwg.mxu0
    %v1984 = vsub.f32 0.0, %v1982
    %v1985 = vmul.f32 %v1984, 0.1
    %v1986 = vadd.f32 %v1679, %v1985
    %v1988 = vsel %vm234, %v1986, 0
    %1990 = vmatpush.msra.mxu0 0.0
    %1991 = vmatpush.msra.mxu0 0.0
    %1992 = vmatpush.msra.mxu0 0.0
    %1993 = vmatpush.msra.mxu0 0.0
    %1994 = vmatpush.msra.mxu0 0.0
    %1995 = vmatpush.msra.mxu0 0.0
    %1996 = vmatpush.msra.mxu0 0.0
    %1997 = vmatpush.msra.mxu0 0.0
    %1998 = vmatpush.msra.mxu0 0.0
    %1999 = vmatpush.msra.mxu0 0.0
    %2000 = vmatpush.msra.mxu0 0.0
    %2001 = vmatpush.msra.mxu0 0.0
    %2002 = vmatpush.msra.mxu0 0.0
    %2003 = vmatpush.msra.mxu0 0.0
    %2004 = vmatpush.msra.mxu0 0.0
    %2005 = vmatpush.msra.mxu0 %v148
    %2006 = vmatmul.f32.gmra.mxu0 %v1988
    %v2007 = vpop.f32.mrf.mxu0
    %v2008 = vadd.f32 %v232, %v2007
    %2009 = vdwg.mxu0
    %v2010 = vtanh.pop %v2008
    %v2012 = vsel %vm262, %v2010, 0
    %2014 = vmatpush.msra.mxu0 0.0
    %2015 = vmatpush.msra.mxu0 0.0
    %2016 = vmatpush.msra.mxu0 0.0
    %2017 = vmatpush.msra.mxu0 0.0
    %2018 = vmatpush.msra.mxu0 0.0
    %2019 = vmatpush.msra.mxu0 0.0
    %2020 = vmatpush.msra.mxu0 0.0
    %2021 = vmatpush.msra.mxu0 0.0
    %2022 = vmatpush.msra.mxu0 0.0
    %2023 = vmatpush.msra.mxu0 0.0
    %2024 = vmatpush.msra.mxu0 0.0
    %2025 = vmatpush.msra.mxu0 0.0
    %2026 = vmatpush.msra.mxu0 %v152
    %2027 = vmatpush.msra.mxu0 %v151
    %2028 = vmatpush.msra.mxu0 %v150
    %2029 = vmatpush.msra.mxu0 %v149
    %2030 = vmatmul.f32.gmra.mxu0 %v2012
    %v2031 = vpop.f32.mrf.mxu0
    %v2032 = vadd.f32 %v260, %v2031
    %2033 = vdwg.mxu0
    %v2034 = vtanh.pop %v2032
    %v2036 = vsel %vm262, %v2034, 0
    %2038 = vmatpush.msra.mxu0 0.0
    %2039 = vmatpush.msra.mxu0 0.0
    %2040 = vmatpush.msra.mxu0 0.0
    %2041 = vmatpush.msra.mxu0 0.0
    %2042 = vmatpush.msra.mxu0 0.0
    %2043 = vmatpush.msra.mxu0 0.0
    %2044 = vmatpush.msra.mxu0 0.0
    %2045 = vmatpush.msra.mxu0 0.0
    %2046 = vmatpush.msra.mxu0 0.0
    %2047 = vmatpush.msra.mxu0 0.0
    %2048 = vmatpush.msra.mxu0 0.0
    %2049 = vmatpush.msra.mxu0 0.0
    %2050 = vmatpush.msra.mxu0 %v166
    %2051 = vmatpush.msra.mxu0 %v165
    %2052 = vmatpush.msra.mxu0 %v164
    %2053 = vmatpush.msra.mxu0 %v163
    %2054 = vmatmul.f32.gmra.mxu0 %v2036
    %v2055 = vpop.f32.mrf.mxu0
    %v2056 = vadd.f32 %v496, %v2055
    %2057 = vdwg.mxu0
    %v2058 = vmul.f32 %v2034, %v2034
    %v2059 = vsub.f32 1.0, %v2058
    %v2060 = vmul.f32 %v2059, %v224
    %v2062 = vsel %vm262, %v2060, 0
    %2064 = vmatpush.msra.mxu0 0.0
    %2065 = vmatpush.msra.mxu0 0.0
    %2066 = vmatpush.msra.mxu0 0.0
    %2067 = vmatpush.msra.mxu0 0.0
    %2068 = vmatpush.msra.mxu0 0.0
    %2069 = vmatpush.msra.mxu0 0.0
    %2070 = vmatpush.msra.mxu0 0.0
    %2071 = vmatpush.msra.mxu0 0.0
    %2072 = vmatpush.msra.mxu0 0.0
    %2073 = vmatpush.msra.mxu0 0.0
    %2074 = vmatpush.msra.mxu0 0.0
    %2075 = vmatpush.msra.mxu0 0.0
    %2076 = vmatpush.msra.mxu0 %v162
    %2077 = vmatpush.msra.mxu0 %v161
    %2078 = vmatpush.msra.mxu0 %v160
    %2079 = vmatpush.msra.mxu0 %v159
    %2080 = vmatmul.f32.gmra.mxu0 %v2062
    %v2081 = vpop.f32.mrf.mxu0
    %v2082 = vadd.f32 0.0, %v2081
    %2083 = vdwg.mxu0
    %v2084 = vmul.f32 %v2010, %v2010
    %v2085 = vsub.f32 1.0, %v2084
    %v2086 = vmul.f32 %v2085, %v2082
    %v2088 = vsel %vm262, %v2086, 0
    %2090 = vmatpush.msra.mxu0 0.0
    %2091 = vmatpush.msra.mxu0 0.0
    %2092 = vmatpush.msra.mxu0 0.0
    %2093 = vmatpush.msra.mxu0 0.0
    %2094 = vmatpush.msra.mxu0 0.0
    %2095 = vmatpush.msra.mxu0 0.0
    %2096 = vmatpush.msra.mxu0 0.0
    %2097 = vmatpush.msra.mxu0 0.0
    %2098 = vmatpush.msra.mxu0 0.0
    %2099 = vmatpush.msra.mxu0 0.0
    %2100 = vmatpush.msra.mxu0 0.0
    %2101 = vmatpush.msra.mxu0 0.0
    %2102 = vmatpush.msra.mxu0 %v158
    %2103 = vmatpush.msra.mxu0 %v157
    %2104 = vmatpush.msra.mxu0 %v156
    %2105 = vmatpush.msra.mxu0 %v155
    %2106 = vmatmul.f32.gmra.mxu0 %v2088
    %v2107 = vpop.f32.mrf.mxu0
    %v2108 = vadd.f32 0.0, %v2107
    %2109 = vdwg.mxu0
    %v2110 = vmul.f32 %v2108, 0.05
    %v2111 = vadd.f32 %v1883, %v2110
    %v2113 = vsel %vm234, %v2111, 0
    %2115 = vmatpush.msra.mxu0 0.0
    %2116 = vmatpush.msra.mxu0 0.0
    %2117 = vmatpush.msra.mxu0 0.0
    %2118 = vmatpush.msra.mxu0 0.0
    %2119 = vmatpush.msra.mxu0 0.0
    %2120 = vmatpush.msra.mxu0 0.0
    %2121 = vmatpush.msra.mxu0 0.0
    %2122 = vmatpush.msra.mxu0 0.0
    %2123 = vmatpush.msra.mxu0 0.0
    %2124 = vmatpush.msra.mxu0 0.0
    %2125 = vmatpush.msra.mxu0 0.0
    %2126 = vmatpush.msra.mxu0 0.0
    %2127 = vmatpush.msra.mxu0 0.0
    %2128 = vmatpush.msra.mxu0 0.0
    %2129 = vmatpush.msra.mxu0 0.0
    %2130 = vmatpush.msra.mxu0 %v169
    %2131 = vmatmul.f32.gmra.mxu0 %v2113
    %v2132 = vpop.f32.mrf.mxu0
    %v2133 = vadd.f32 %v221, %v2132
    %2134 = vdwg.mxu0
    %v2135 = vtanh.pop %v2133
    %v2137 = vsel %vm262, %v2135, 0
    %2139 = vmatpush.msra.mxu0 0.0
    %2140 = vmatpush.msra.mxu0 0.0
    %2141 = vmatpush.msra.mxu0 0.0
    %2142 = vmatpush.msra.mxu0 0.0
    %2143 = vmatpush.msra.mxu0 0.0
    %2144 = vmatpush.msra.mxu0 0.0
    %2145 = vmatpush.msra.mxu0 0.0
    %2146 = vmatpush.msra.mxu0 0.0
    %2147 = vmatpush.msra.mxu0 0.0
    %2148 = vmatpush.msra.mxu0 0.0
    %2149 = vmatpush.msra.mxu0 0.0
    %2150 = vmatpush.msra.mxu0 0.0
    %2151 = vmatpush.msra.mxu0 %v173
    %2152 = vmatpush.msra.mxu0 %v172
    %2153 = vmatpush.msra.mxu0 %v171
    %2154 = vmatpush.msra.mxu0 %v170
    %2155 = vmatmul.f32.gmra.mxu0 %v2137
    %v2156 = vpop.f32.mrf.mxu0
    %v2157 = vadd.f32 %v366, %v2156
    %2158 = vdwg.mxu0
    %v2159 = vtanh.pop %v2157
    %v2161 = vsel %vm262, %v2159, 0
    %2163 = vmatpush.msra.mxu0 0.0
    %2164 = vmatpush.msra.mxu0 0.0
    %2165 = vmatpush.msra.mxu0 0.0
    %2166 = vmatpush.msra.mxu0 0.0
    %2167 = vmatpush.msra.mxu0 0.0
    %2168 = vmatpush.msra.mxu0 0.0
    %2169 = vmatpush.msra.mxu0 0.0
    %2170 = vmatpush.msra.mxu0 0.0
    %2171 = vmatpush.msra.mxu0 0.0
    %2172 = vmatpush.msra.mxu0 0.0
    %2173 = vmatpush.msra.mxu0 0.0
    %2174 = vmatpush.msra.mxu0 0.0
    %2175 = vmatpush.msra.mxu0 %v187
    %2176 = vmatpush.msra.mxu0 %v186
    %2177 = vmatpush.msra.mxu0 %v185
    %2178 = vmatpush.msra.mxu0 %v184
    %2179 = vmatmul.f32.gmra.mxu0 %v2161
    %v2180 = vpop.f32.mrf.mxu0
    %v2181 = vadd.f32 %v624, %v2180
    %2182 = vdwg.mxu0
    %v2183 = vadd.f32 %v2056, %v2181
    %s2184 = scalar_lea.vmem %s22, 20
    %2185 = vst.msk [vmem:[%s2184] sm:$0xf] %vm650, %v2183
    %s2186 = scalar_lea.vmem [#allocation13], 20
    %2187 = vst.msk [vmem:[%s2186] sm:$0xf] %vm652, %v2111
    %s2188 = scalar_lea.vmem [#allocation14], 20
    %2189 = vst.msk [vmem:[%s2188] sm:$0xf] %vm652, %v1986
    // Predicated region
    $region110: #{tpu_custom_call.1} parent=1 // pred_check
      _
    $region111: #{tpu_custom_call.1} parent=1 // pred_check_branch
      %2191 = sbr.rel (0) target = $region113
    $region112: #{tpu_custom_call.1} parent=1 // pred_region
      _
    $region113: #{tpu_custom_call.1} parent=1 // pred_fallthru
      _
    // Predicated region
    $region114: #{tpu_custom_call.1} parent=1 // pred_check
      _
    $region115: #{tpu_custom_call.1} parent=1 // pred_check_branch
      %2193 = sbr.rel (0) target = $region117
    $region116: #{tpu_custom_call.1} parent=1 // pred_region
      %2195 = vsyncadd [#allocation6], 0
      %s2196 = sshll.u32 [#allocation13], 4
      %s2197 = int_to_ptr.vmem [resolvable:$true] %s2196
      %s2198 = sshll.u32 %s23, 4
      %s2199 = int_to_ptr.hbm [resolvable:$true] %s2198
      %2204 = dma.vmem_to_hbm [thread:$0]  %s2197, 384, %s2199, [#allocation6], 64, 64, 4
    $region117: #{tpu_custom_call.1} parent=1 // pred_fallthru
      _
    // Predicated region
    $region118: #{tpu_custom_call.1} parent=1 // pred_check
      _
    $region119: #{tpu_custom_call.1} parent=1 // pred_check_branch
      %2206 = sbr.rel (0) target = $region121
    $region120: #{tpu_custom_call.1} parent=1 // pred_region
      %2208 = vsyncadd [#allocation15], 0
      %s2209 = sshll.u32 [#allocation14], 4
      %s2210 = int_to_ptr.vmem [resolvable:$true] %s2209
      %s2211 = sshll.u32 %s24, 4
      %s2212 = int_to_ptr.hbm [resolvable:$true] %s2211
      %2217 = dma.vmem_to_hbm [thread:$0]  %s2210, 384, %s2212, [#allocation15], 64, 64, 4
    $region121: #{tpu_custom_call.1} parent=1 // pred_fallthru
      _
    // Predicated region
    $region122: #{tpu_custom_call.1} parent=1 // pred_check
      _
    $region123: #{tpu_custom_call.1} parent=1 // pred_check_branch
      %2219 = sbr.rel (0) target = $region125
    $region124: #{tpu_custom_call.1} parent=1 // pred_region
      _
    $region125: #{tpu_custom_call.1} parent=1 // pred_fallthru
      _
    // Predicated region
    $region126: #{tpu_custom_call.1} parent=1 // pred_check
      _
    $region127: #{tpu_custom_call.1} parent=1 // pred_check_branch
      %2221 = sbr.rel (0) target = $region129
    $region128: #{tpu_custom_call.1} parent=1 // pred_region
      %2223 = dma.done [#allocation6], 384
    $region129: #{tpu_custom_call.1} parent=1 // pred_fallthru
      _
    // Predicated region
    $region130: #{tpu_custom_call.1} parent=1 // pred_check
      _
    $region131: #{tpu_custom_call.1} parent=1 // pred_check_branch
      %2225 = sbr.rel (0) target = $region133
    $region132: #{tpu_custom_call.1} parent=1 // pred_region
      %2227 = dma.done [#allocation15], 384
    $region133: #{tpu_custom_call.1} parent=1 // pred_fallthru
      _
    %2228 = vsyncpa [#allocation5], 1
    %2229 = vsyncpa [#allocation8], 1
    %2230 = vsyncpa [#allocation11], 1
    %2231 = vsyncpa [#allocation6], 1
    %2232 = vsyncpa [#allocation15], 1

</llo_original>
